<compile_context>
chip_gen: v6e
topology: v6e:2x2x1
jax: 0.10.0
libtpu: 0.0.40
codegen_flags: <defaults>
</compile_context>

<pallas_src>
import functools

import jax
import jax.numpy as jnp
from jax.experimental import pallas as pl
from jax.experimental.pallas import tpu as pltpu


WEIGHT_ORDER = (
    "sa_wqk", "sa_bqk", "sa_wv", "sa_bv", "sa_wo", "sa_bo",
    "ca_wq", "ca_bq", "ca_wk", "ca_bk", "ca_wv", "ca_bv", "ca_wo", "ca_bo",
    "w1", "b1", "w2", "b2",
    "n1g", "n1b", "n2g", "n2b", "n3g", "n3b",
    "norm_g", "norm_b",
)


# ----------------------------------------------------------------------------
# In-kernel helpers
# ----------------------------------------------------------------------------
def _layer_norm(x, g, b):
    mu = jnp.mean(x, axis=-1, keepdims=True)
    var = jnp.mean(jnp.square(x - mu), axis=-1, keepdims=True)
    return (x - mu) * jax.lax.rsqrt(var + 1e-5) * g + b


def _split_heads(x, num_heads, d_head, offset=0):
    """(T, >=H*dh) float32 -> (H, T, dh) bf16.

    Static lane slices stacked on a new leading axis (layout only); all
    contractions below are head-batched einsums."""
    heads = [x[:, offset + h * d_head: offset + (h + 1) * d_head]
             for h in range(num_heads)]
    return jnp.stack(heads, axis=0).astype(jnp.bfloat16)


def _mha_core(qh, kh, vh, wo, bo):
    """Head-batched attention.  qh: (H,T,dh)  kh/vh: (H,S,dh)  wo: (H,dh,D).

    Scale 1/sqrt(dh) is already folded into the Q projection weights."""
    s = jnp.einsum("htd,hsd->hts", qh, kh, preferred_element_type=jnp.float32)
    s = s - jnp.max(s, axis=-1, keepdims=True)
    e = jnp.exp(s)
    p = e * pl.reciprocal(jnp.sum(e, axis=-1, keepdims=True), approx=True)
    o = jnp.einsum("hts,hsd->htd", p.astype(jnp.bfloat16), vh,
                   preferred_element_type=jnp.float32)
    proj = jnp.einsum("htd,hdk->htk", o.astype(jnp.bfloat16), wo,
                      preferred_element_type=jnp.float32)
    return jnp.sum(proj, axis=0) + bo          # (T, D) float32


# ----------------------------------------------------------------------------
# Fused decoder-stack kernel: one grid step = (batch element, layer)
# ----------------------------------------------------------------------------
def decoder_stack_kernel(
    tgt_ref, qpos_ref, memk_ref, mem_ref,
    sa_wqk_ref, sa_bqk_ref, sa_wv_ref, sa_bv_ref, sa_wo_ref, sa_bo_ref,
    ca_wq_ref, ca_bq_ref, ca_wk_ref, ca_bk_ref,
    ca_wv_ref, ca_bv_ref, ca_wo_ref, ca_bo_ref,
    w1_ref, b1_ref, w2_ref, b2_ref,
    n1g_ref, n1b_ref, n2g_ref, n2b_ref, n3g_ref, n3b_ref,
    normg_ref, normb_ref,
    raw_ref, normed_ref,
    tgt_sc,
    *, num_heads):
    d_model = tgt_ref.shape[-1]
    d_head = d_model // num_heads

    # Layer 0: load the initial queries into the cross-layer VMEM carry.
    @pl.when(pl.program_id(1) == 0)
    def _():
        tgt_sc[...] = tgt_ref[...].astype(jnp.float32)

    x = tgt_sc[...]                     # (T, D) float32 running activation
    qpos = qpos_ref[...]                # (T, D) float32

    # --- self attention: q = k = x + query_embed, v = x (fused Q|K proj) ----
    qk_in = (x + qpos).astype(jnp.bfloat16)
    qk = (jnp.dot(qk_in, sa_wqk_ref[...], preferred_element_type=jnp.float32)
          + sa_bqk_ref[...])            # (T, 2D); Q half pre-scaled
    v = (jnp.dot(x.astype(jnp.bfloat16), sa_wv_ref[...],
                 preferred_element_type=jnp.float32) + sa_bv_ref[...])
    sa = _mha_core(_split_heads(qk, num_heads, d_head, 0),
                   _split_heads(qk, num_heads, d_head, d_model),
                   _split_heads(v, num_heads, d_head, 0),
                   sa_wo_ref[...], sa_bo_ref[...])
    x = _layer_norm(x + sa, n1g_ref[...], n1b_ref[...])

    # --- cross attention: q = x + query_embed, k = mem + pos, v = mem -------
    q_in = (x + qpos).astype(jnp.bfloat16)
    q = (jnp.dot(q_in, ca_wq_ref[...], preferred_element_type=jnp.float32)
         + ca_bq_ref[...])
    k = (jnp.dot(memk_ref[...], ca_wk_ref[...],
                 preferred_element_type=jnp.float32) + ca_bk_ref[...])
    vv = (jnp.dot(mem_ref[...], ca_wv_ref[...],
                  preferred_element_type=jnp.float32) + ca_bv_ref[...])
    ca = _mha_core(_split_heads(q, num_heads, d_head, 0),
                   _split_heads(k, num_heads, d_head, 0),
                   _split_heads(vv, num_heads, d_head, 0),
                   ca_wo_ref[...], ca_bo_ref[...])
    x = _layer_norm(x + ca, n2g_ref[...], n2b_ref[...])

    # --- feed-forward (ReLU) -------------------------------------------------
    h1 = jnp.maximum(
        jnp.dot(x.astype(jnp.bfloat16), w1_ref[...],
                preferred_element_type=jnp.float32) + b1_ref[...], 0.0)
    ff = (jnp.dot(h1.astype(jnp.bfloat16), w2_ref[...],
                  preferred_element_type=jnp.float32) + b2_ref[...])
    x = _layer_norm(x + ff, n3g_ref[...], n3b_ref[...])

    # Carry + both intermediates for this layer (raw and outer-norm'd).
    tgt_sc[...] = x
    raw_ref[...] = x.astype(raw_ref.dtype)
    normed_ref[...] = _layer_norm(x, normg_ref[...], normb_ref[...]).astype(
        normed_ref.dtype)


# ----------------------------------------------------------------------------
# Wrapper
# ----------------------------------------------------------------------------
def transformer_decoder_forward(h, x_mem, pos_encoding, query_embed, params,
                                num_heads):
    """Mirrors TransformerDecoder.forward with norm != None,
    return_intermediate=True (eval mode).  Returns (2*L, B, T, D), matching
    torch.stack(intermediate).permute(0, 2, 1, 3)."""
    B, T, D = h.shape
    S = x_mem.shape[1]
    L = params["sa_wqk"].shape[0]

    # Precompute memory (+pos) once; bf16 halves the memory-side DMA.
    memk = (x_mem + pos_encoding).astype(jnp.bfloat16)
    mem = x_mem.astype(jnp.bfloat16)

    weights = [params[name] for name in WEIGHT_ORDER]

    def _stacked_spec(arr):              # per-layer weight, indexed by layer
        nd = arr.ndim
        return pl.BlockSpec((None,) + arr.shape[1:],
                            lambda b, l, _nd=nd: (l,) + (0,) * (_nd - 1))

    def _const_spec(arr):                # shared (outer norm) weight
        nd = arr.ndim
        return pl.BlockSpec(arr.shape, lambda b, l, _nd=nd: (0,) * _nd)

    in_specs = [
        pl.BlockSpec((None, T, D), lambda b, l: (b, 0, 0)),   # h (queries)
        pl.BlockSpec((None, T, D), lambda b, l: (b, 0, 0)),   # query_embed
        pl.BlockSpec((None, S, D), lambda b, l: (b, 0, 0)),   # memory + pos
        pl.BlockSpec((None, S, D), lambda b, l: (b, 0, 0)),   # memory
    ]
    for name, arr in zip(WEIGHT_ORDER, weights):
        if name in ("norm_g", "norm_b"):
            in_specs.append(_const_spec(arr))
        else:
            in_specs.append(_stacked_spec(arr))

    out_spec = pl.BlockSpec((None, None, T, D), lambda b, l: (l, b, 0, 0))
    out_shape = (jax.ShapeDtypeStruct((L, B, T, D), jnp.float32),
                 jax.ShapeDtypeStruct((L, B, T, D), jnp.float32))

    grid_spec = pltpu.PrefetchScalarGridSpec(
        num_scalar_prefetch=0,
        grid=(B, L),                     # batch (parallel) x layer (sequential)
        in_specs=in_specs,
        out_specs=[out_spec, out_spec],
        scratch_shapes=[pltpu.VMEM((T, D), jnp.float32)],
    )

    raw, normed = pl.pallas_call(
        functools.partial(decoder_stack_kernel, num_heads=num_heads),
        out_shape=out_shape,
        grid_spec=grid_spec,
        compiler_params=pltpu.CompilerParams(
            dimension_semantics=("parallel", "arbitrary")),
    )(h, query_embed, memk, mem, *weights)

    # torch: per layer append [norm(out), out]; after the loop pop the raw
    # last output and append the final norm(out) instead.
    hs = jnp.stack([normed, raw], axis=1).reshape(2 * L, B, T, D)
    hs = hs.at[-1].set(normed[-1])
    return hs                            # (2*L, B, T, D)


# ----------------------------------------------------------------------------
# Deterministic parameter init + wrapper-side layout preparation
# ----------------------------------------------------------------------------
def init_layer_params(key, d_model, d_ff):
    ks = jax.random.split(key, 12)

    def w(k, shape):
        return jax.random.normal(k, shape, jnp.float32) * 0.02

    ones = jnp.ones((1, d_model), jnp.float32)
    zeros = jnp.zeros((1, d_model), jnp.float32)
    return dict(
        sa_w=w(ks[0], (d_model, 3 * d_model)), sa_b=w(ks[1], (1, 3 * d_model)),
        sa_wo=w(ks[2], (d_model, d_model)),    sa_bo=w(ks[3], (1, d_model)),
        ca_w=w(ks[4], (d_model, 3 * d_model)), ca_b=w(ks[5], (1, 3 * d_model)),
        ca_wo=w(ks[6], (d_model, d_model)),    ca_bo=w(ks[7], (1, d_model)),
        w1=w(ks[8], (d_model, d_ff)),          b1=w(ks[9], (1, d_ff)),
        w2=w(ks[10], (d_ff, d_model)),         b2=w(ks[11], (1, d_model)),
        n1g=ones, n1b=zeros, n2g=ones, n2b=zeros, n3g=ones, n3b=zeros,
    )


def prepare_params(layer_params, norm_g, norm_b, num_heads):
    """Wrapper-side layout plumbing (pure JAX, outside the kernel):
    split packed QKV weights, fuse self-attn Q|K, fold 1/sqrt(d_head) into Q,
    reshape output projections per head, cast matmul weights to bf16, and
    stack everything along a leading layer axis."""
    d_model = layer_params[0]["sa_w"].shape[0]
    d_head = d_model // num_heads
    scale = 1.0 / (d_head ** 0.5)
    bf16 = jnp.bfloat16
    D = d_model

    per_layer = []
    for p in layer_params:
        sa_w, sa_b = p["sa_w"], p["sa_b"]
        ca_w, ca_b = p["ca_w"], p["ca_b"]
        per_layer.append(dict(
            sa_wqk=jnp.concatenate([sa_w[:, :D] * scale, sa_w[:, D:2 * D]],
                                   axis=1).astype(bf16),
            sa_bqk=jnp.concatenate([sa_b[:, :D] * scale, sa_b[:, D:2 * D]],
                                   axis=1),
            sa_wv=sa_w[:, 2 * D:].astype(bf16),
            sa_bv=sa_b[:, 2 * D:],
            sa_wo=p["sa_wo"].reshape(num_heads, d_head, D).astype(bf16),
            sa_bo=p["sa_bo"],
            ca_wq=(ca_w[:, :D] * scale).astype(bf16),
            ca_bq=ca_b[:, :D] * scale,
            ca_wk=ca_w[:, D:2 * D].astype(bf16),
            ca_bk=ca_b[:, D:2 * D],
            ca_wv=ca_w[:, 2 * D:].astype(bf16),
            ca_bv=ca_b[:, 2 * D:],
            ca_wo=p["ca_wo"].reshape(num_heads, d_head, D).astype(bf16),
            ca_bo=p["ca_bo"],
            w1=p["w1"].astype(bf16), b1=p["b1"],
            w2=p["w2"].astype(bf16), b2=p["b2"],
            n1g=p["n1g"], n1b=p["n1b"],
            n2g=p["n2g"], n2b=p["n2b"],
            n3g=p["n3g"], n3b=p["n3b"],
        ))

    stacked = {k: jnp.stack([lp[k] for lp in per_layer], axis=0)
               for k in per_layer[0]}
    stacked["norm_g"] = norm_g
    stacked["norm_b"] = norm_b
    return stacked


# ----------------------------------------------------------------------------
if __name__ == "__main__":
    B, T, S, D, H, DFF, L = 2, 8, 16, 64, 4, 128, 2

    key = jax.random.PRNGKey(0)
    k_h, k_x, k_pos, k_q, k_p = jax.random.split(key, 5)

    h = jax.random.normal(k_h, (B, T, D), jnp.float32)          # decoder queries
    x = jax.random.normal(k_x, (B, S, D), jnp.float32)          # encoder memory
    pos_encoding = jax.random.normal(k_pos, (B, S, D), jnp.float32)
    query_embed = jnp.tile(jax.random.normal(k_q, (1, T, D), jnp.float32),
                           (B, 1, 1))                            # shared over batch

    layer_keys = jax.random.split(k_p, L)
    layer_params = [init_layer_params(layer_keys[i], D, DFF) for i in range(L)]
    norm_g = jnp.ones((1, D), jnp.float32)
    norm_b = jnp.zeros((1, D), jnp.float32)

    params = prepare_params(layer_params, norm_g, norm_b, num_heads=H)

    hs = transformer_decoder_forward(h, x, pos_encoding, query_embed, params, H)
    hs = jax.block_until_ready(hs)

    assert hs.shape == (2 * L, B, T, D), hs.shape
    assert bool(jnp.all(jnp.isfinite(hs)))
    print("KERNEL_OK")
</pallas_src>

<mosaic_0001>
module attributes {stable_mosaic.version = 11 : i64} {
  func.func @decoder_stack_kernel(%arg0: i32, %arg1: i32, %arg2: memref<1x8x64xf32, #tpu.memory_space<vmem>>, %arg3: memref<1x8x64xf32, #tpu.memory_space<vmem>>, %arg4: memref<1x16x64xbf16, #tpu.memory_space<vmem>>, %arg5: memref<1x16x64xbf16, #tpu.memory_space<vmem>>, %arg6: memref<1x64x128xbf16, #tpu.memory_space<vmem>>, %arg7: memref<1x1x128xf32, #tpu.memory_space<vmem>>, %arg8: memref<1x64x64xbf16, #tpu.memory_space<vmem>>, %arg9: memref<1x1x64xf32, #tpu.memory_space<vmem>>, %arg10: memref<1x4x16x64xbf16, #tpu.memory_space<vmem>>, %arg11: memref<1x1x64xf32, #tpu.memory_space<vmem>>, %arg12: memref<1x64x64xbf16, #tpu.memory_space<vmem>>, %arg13: memref<1x1x64xf32, #tpu.memory_space<vmem>>, %arg14: memref<1x64x64xbf16, #tpu.memory_space<vmem>>, %arg15: memref<1x1x64xf32, #tpu.memory_space<vmem>>, %arg16: memref<1x64x64xbf16, #tpu.memory_space<vmem>>, %arg17: memref<1x1x64xf32, #tpu.memory_space<vmem>>, %arg18: memref<1x4x16x64xbf16, #tpu.memory_space<vmem>>, %arg19: memref<1x1x64xf32, #tpu.memory_space<vmem>>, %arg20: memref<1x64x128xbf16, #tpu.memory_space<vmem>>, %arg21: memref<1x1x128xf32, #tpu.memory_space<vmem>>, %arg22: memref<1x128x64xbf16, #tpu.memory_space<vmem>>, %arg23: memref<1x1x64xf32, #tpu.memory_space<vmem>>, %arg24: memref<1x1x64xf32, #tpu.memory_space<vmem>>, %arg25: memref<1x1x64xf32, #tpu.memory_space<vmem>>, %arg26: memref<1x1x64xf32, #tpu.memory_space<vmem>>, %arg27: memref<1x1x64xf32, #tpu.memory_space<vmem>>, %arg28: memref<1x1x64xf32, #tpu.memory_space<vmem>>, %arg29: memref<1x1x64xf32, #tpu.memory_space<vmem>>, %arg30: memref<1x64xf32, #tpu.memory_space<vmem>>, %arg31: memref<1x64xf32, #tpu.memory_space<vmem>>, %arg32: memref<1x1x8x64xf32, #tpu.memory_space<vmem>>, %arg33: memref<1x1x8x64xf32, #tpu.memory_space<vmem>>, %arg34: memref<8x64xf32, #tpu.memory_space<vmem>>) attributes {dimension_semantics = [#tpu.dimension_semantics<parallel>, #tpu.dimension_semantics<arbitrary>], iteration_bounds = array<i64: 2, 2>, scalar_prefetch = 0 : i64, scratch_operands = 1 : i64, tpu.core_type = #tpu.core_type<tc>, window_params = [{transform_indices = @transform_0, window_bounds = array<i64: 1, 8, 64>}, {transform_indices = @transform_1, window_bounds = array<i64: 1, 8, 64>}, {transform_indices = @transform_2, window_bounds = array<i64: 1, 16, 64>}, {transform_indices = @transform_3, window_bounds = array<i64: 1, 16, 64>}, {transform_indices = @transform_4, window_bounds = array<i64: 1, 64, 128>}, {transform_indices = @transform_5, window_bounds = array<i64: 1, 1, 128>}, {transform_indices = @transform_6, window_bounds = array<i64: 1, 64, 64>}, {transform_indices = @transform_7, window_bounds = array<i64: 1, 1, 64>}, {transform_indices = @transform_8, window_bounds = array<i64: 1, 4, 16, 64>}, {transform_indices = @transform_9, window_bounds = array<i64: 1, 1, 64>}, {transform_indices = @transform_10, window_bounds = array<i64: 1, 64, 64>}, {transform_indices = @transform_11, window_bounds = array<i64: 1, 1, 64>}, {transform_indices = @transform_12, window_bounds = array<i64: 1, 64, 64>}, {transform_indices = @transform_13, window_bounds = array<i64: 1, 1, 64>}, {transform_indices = @transform_14, window_bounds = array<i64: 1, 64, 64>}, {transform_indices = @transform_15, window_bounds = array<i64: 1, 1, 64>}, {transform_indices = @transform_16, window_bounds = array<i64: 1, 4, 16, 64>}, {transform_indices = @transform_17, window_bounds = array<i64: 1, 1, 64>}, {transform_indices = @transform_18, window_bounds = array<i64: 1, 64, 128>}, {transform_indices = @transform_19, window_bounds = array<i64: 1, 1, 128>}, {transform_indices = @transform_20, window_bounds = array<i64: 1, 128, 64>}, {transform_indices = @transform_21, window_bounds = array<i64: 1, 1, 64>}, {transform_indices = @transform_22, window_bounds = array<i64: 1, 1, 64>}, {transform_indices = @transform_23, window_bounds = array<i64: 1, 1, 64>}, {transform_indices = @transform_24, window_bounds = array<i64: 1, 1, 64>}, {transform_indices = @transform_25, window_bounds = array<i64: 1, 1, 64>}, {transform_indices = @transform_26, window_bounds = array<i64: 1, 1, 64>}, {transform_indices = @transform_27, window_bounds = array<i64: 1, 1, 64>}, {pipeline_mode = #tpu.pipeline_mode<synchronous>, transform_indices = @transform_28, window_bounds = array<i64: 1, 64>}, {pipeline_mode = #tpu.pipeline_mode<synchronous>, transform_indices = @transform_29, window_bounds = array<i64: 1, 64>}, {transform_indices = @transform_30, window_bounds = array<i64: 1, 1, 8, 64>}, {transform_indices = @transform_31, window_bounds = array<i64: 1, 1, 8, 64>}]} {
    %c0_i32 = arith.constant 0 : i32
    %0 = arith.cmpi eq, %arg1, %c0_i32 : i32
    %1 = arith.extui %0 : i1 to i32
    %c0_i32_0 = arith.constant 0 : i32
    %2 = arith.cmpi ne, %1, %c0_i32_0 : i32
    scf.if %2 {
      %c0_138 = arith.constant 0 : index
      %c0_139 = arith.constant 0 : index
      %c0_140 = arith.constant 0 : index
      %284 = vector.load %arg2[%c0_138, %c0_139, %c0_140] : memref<1x8x64xf32, #tpu.memory_space<vmem>>, vector<1x8x64xf32>
      %285 = vector.shape_cast %284 : vector<1x8x64xf32> to vector<8x64xf32>
      %c0_141 = arith.constant 0 : index
      %c0_142 = arith.constant 0 : index
      %286 = vector.load %arg34[%c0_141, %c0_142] : memref<8x64xf32, #tpu.memory_space<vmem>>, vector<8x64xf32>
      tpu.vector_store %arg34[%c0_141, %c0_142], %285 {strides = array<i32>} : memref<8x64xf32, #tpu.memory_space<vmem>>, vector<8x64xf32>,
    } else {
    }
    %c0 = arith.constant 0 : index
    %c0_1 = arith.constant 0 : index
    %3 = vector.load %arg34[%c0, %c0_1] : memref<8x64xf32, #tpu.memory_space<vmem>>, vector<8x64xf32>
    %c0_2 = arith.constant 0 : index
    %c0_3 = arith.constant 0 : index
    %c0_4 = arith.constant 0 : index
    %4 = vector.load %arg3[%c0_2, %c0_3, %c0_4] : memref<1x8x64xf32, #tpu.memory_space<vmem>>, vector<1x8x64xf32>
    %5 = vector.shape_cast %4 : vector<1x8x64xf32> to vector<8x64xf32>
    %6 = arith.addf %3, %5 : vector<8x64xf32>
    %7 = arith.truncf %6 : vector<8x64xf32> to vector<8x64xbf16>
    %c0_5 = arith.constant 0 : index
    %c0_6 = arith.constant 0 : index
    %c0_7 = arith.constant 0 : index
    %8 = vector.load %arg6[%c0_5, %c0_6, %c0_7] : memref<1x64x128xbf16, #tpu.memory_space<vmem>>, vector<1x64x128xbf16>
    %9 = vector.shape_cast %8 : vector<1x64x128xbf16> to vector<64x128xbf16>
    %cst = arith.constant dense<0.000000e+00> : vector<8x128xf32>
    %10 = tpu.matmul %7, %9, %cst {dimension_numbers = #tpu.dot_dimension_numbers<[1], [0], [0], [1], [0, 0, 1, 1], [], []>} : vector<8x64xbf16>, vector<64x128xbf16>, vector<8x128xf32> -> vector<8x128xf32>
    %c0_8 = arith.constant 0 : index
    %c0_9 = arith.constant 0 : index
    %c0_10 = arith.constant 0 : index
    %11 = vector.load %arg7[%c0_8, %c0_9, %c0_10] : memref<1x1x128xf32, #tpu.memory_space<vmem>>, vector<1x1x128xf32>
    %12 = vector.shape_cast %11 : vector<1x1x128xf32> to vector<1x128xf32>
    %13 = vector.broadcast %12 : vector<1x128xf32> to vector<8x128xf32>
    %14 = arith.addf %10, %13 : vector<8x128xf32>
    %15 = arith.truncf %3 : vector<8x64xf32> to vector<8x64xbf16>
    %c0_11 = arith.constant 0 : index
    %c0_12 = arith.constant 0 : index
    %c0_13 = arith.constant 0 : index
    %16 = vector.load %arg8[%c0_11, %c0_12, %c0_13] : memref<1x64x64xbf16, #tpu.memory_space<vmem>>, vector<1x64x64xbf16>
    %17 = vector.shape_cast %16 : vector<1x64x64xbf16> to vector<64x64xbf16>
    %cst_14 = arith.constant dense<0.000000e+00> : vector<8x64xf32>
    %18 = tpu.matmul %15, %17, %cst_14 {dimension_numbers = #tpu.dot_dimension_numbers<[1], [0], [0], [1], [0, 0, 1, 1], [], []>} : vector<8x64xbf16>, vector<64x64xbf16>, vector<8x64xf32> -> vector<8x64xf32>
    %c0_15 = arith.constant 0 : index
    %c0_16 = arith.constant 0 : index
    %c0_17 = arith.constant 0 : index
    %19 = vector.load %arg9[%c0_15, %c0_16, %c0_17] : memref<1x1x64xf32, #tpu.memory_space<vmem>>, vector<1x1x64xf32>
    %20 = vector.shape_cast %19 : vector<1x1x64xf32> to vector<1x64xf32>
    %21 = vector.broadcast %20 : vector<1x64xf32> to vector<8x64xf32>
    %22 = arith.addf %18, %21 : vector<8x64xf32>
    %23 = vector.extract_strided_slice %14 {offsets = [0, 0], sizes = [8, 16], strides = [1, 1]} : vector<8x128xf32> to vector<8x16xf32>
    %24 = vector.extract_strided_slice %14 {offsets = [0, 16], sizes = [8, 16], strides = [1, 1]} : vector<8x128xf32> to vector<8x16xf32>
    %25 = vector.extract_strided_slice %14 {offsets = [0, 32], sizes = [8, 16], strides = [1, 1]} : vector<8x128xf32> to vector<8x16xf32>
    %26 = vector.extract_strided_slice %14 {offsets = [0, 48], sizes = [8, 16], strides = [1, 1]} : vector<8x128xf32> to vector<8x16xf32>
    %27 = vector.shape_cast %23 : vector<8x16xf32> to vector<1x8x16xf32>
    %28 = vector.shape_cast %24 : vector<8x16xf32> to vector<1x8x16xf32>
    %29 = vector.shape_cast %25 : vector<8x16xf32> to vector<1x8x16xf32>
    %30 = vector.shape_cast %26 : vector<8x16xf32> to vector<1x8x16xf32>
    %31 = tpu.concatenate %27, %28, %29, %30 in 0 : vector<1x8x16xf32>, vector<1x8x16xf32>, vector<1x8x16xf32>, vector<1x8x16xf32> -> vector<4x8x16xf32>
    %32 = arith.truncf %31 : vector<4x8x16xf32> to vector<4x8x16xbf16>
    %33 = vector.extract_strided_slice %14 {offsets = [0, 64], sizes = [8, 16], strides = [1, 1]} : vector<8x128xf32> to vector<8x16xf32>
    %34 = vector.extract_strided_slice %14 {offsets = [0, 80], sizes = [8, 16], strides = [1, 1]} : vector<8x128xf32> to vector<8x16xf32>
    %35 = vector.extract_strided_slice %14 {offsets = [0, 96], sizes = [8, 16], strides = [1, 1]} : vector<8x128xf32> to vector<8x16xf32>
    %36 = vector.extract_strided_slice %14 {offsets = [0, 112], sizes = [8, 16], strides = [1, 1]} : vector<8x128xf32> to vector<8x16xf32>
    %37 = vector.shape_cast %33 : vector<8x16xf32> to vector<1x8x16xf32>
    %38 = vector.shape_cast %34 : vector<8x16xf32> to vector<1x8x16xf32>
    %39 = vector.shape_cast %35 : vector<8x16xf32> to vector<1x8x16xf32>
    %40 = vector.shape_cast %36 : vector<8x16xf32> to vector<1x8x16xf32>
    %41 = tpu.concatenate %37, %38, %39, %40 in 0 : vector<1x8x16xf32>, vector<1x8x16xf32>, vector<1x8x16xf32>, vector<1x8x16xf32> -> vector<4x8x16xf32>
    %42 = arith.truncf %41 : vector<4x8x16xf32> to vector<4x8x16xbf16>
    %43 = vector.extract_strided_slice %22 {offsets = [0, 0], sizes = [8, 16], strides = [1, 1]} : vector<8x64xf32> to vector<8x16xf32>
    %44 = vector.extract_strided_slice %22 {offsets = [0, 16], sizes = [8, 16], strides = [1, 1]} : vector<8x64xf32> to vector<8x16xf32>
    %45 = vector.extract_strided_slice %22 {offsets = [0, 32], sizes = [8, 16], strides = [1, 1]} : vector<8x64xf32> to vector<8x16xf32>
    %46 = vector.extract_strided_slice %22 {offsets = [0, 48], sizes = [8, 16], strides = [1, 1]} : vector<8x64xf32> to vector<8x16xf32>
    %47 = vector.shape_cast %43 : vector<8x16xf32> to vector<1x8x16xf32>
    %48 = vector.shape_cast %44 : vector<8x16xf32> to vector<1x8x16xf32>
    %49 = vector.shape_cast %45 : vector<8x16xf32> to vector<1x8x16xf32>
    %50 = vector.shape_cast %46 : vector<8x16xf32> to vector<1x8x16xf32>
    %51 = tpu.concatenate %47, %48, %49, %50 in 0 : vector<1x8x16xf32>, vector<1x8x16xf32>, vector<1x8x16xf32>, vector<1x8x16xf32> -> vector<4x8x16xf32>
    %52 = arith.truncf %51 : vector<4x8x16xf32> to vector<4x8x16xbf16>
    %c0_18 = arith.constant 0 : index
    %c0_19 = arith.constant 0 : index
    %c0_20 = arith.constant 0 : index
    %c0_21 = arith.constant 0 : index
    %53 = vector.load %arg10[%c0_18, %c0_19, %c0_20, %c0_21] : memref<1x4x16x64xbf16, #tpu.memory_space<vmem>>, vector<1x4x16x64xbf16>
    %54 = vector.shape_cast %53 : vector<1x4x16x64xbf16> to vector<4x16x64xbf16>
    %c0_22 = arith.constant 0 : index
    %c0_23 = arith.constant 0 : index
    %c0_24 = arith.constant 0 : index
    %55 = vector.load %arg11[%c0_22, %c0_23, %c0_24] : memref<1x1x64xf32, #tpu.memory_space<vmem>>, vector<1x1x64xf32>
    %56 = vector.shape_cast %55 : vector<1x1x64xf32> to vector<1x64xf32>
    "tpu.trace_start"() <{level = 10 : i32, message = "htd,hsd->hts"}> : () -> ()
    %cst_25 = arith.constant dense<0.000000e+00> : vector<4x8x8xf32>
    %57 = tpu.matmul %32, %42, %cst_25 {dimension_numbers = #tpu.dot_dimension_numbers<[2], [2], [1], [1], [0, 0, 0, 1, 1, 1], [0], [0]>} : vector<4x8x16xbf16>, vector<4x8x16xbf16>, vector<4x8x8xf32> -> vector<4x8x8xf32>
    "tpu.trace_stop"() : () -> ()
    %cst_26 = arith.constant dense<0xFF800000> : vector<4x8xf32>
    %58 = vector.multi_reduction <maximumf>, %57, %cst_26 [2] : vector<4x8x8xf32> to vector<4x8xf32>
    %59 = vector.shape_cast %58 : vector<4x8xf32> to vector<4x8x1xf32>
    %60 = vector.broadcast %59 : vector<4x8x1xf32> to vector<4x8x8xf32>
    %61 = arith.subf %57, %60 : vector<4x8x8xf32>
    %62 = math.exp %61 : vector<4x8x8xf32>
    %cst_27 = arith.constant dense<0.000000e+00> : vector<4x8xf32>
    %63 = vector.multi_reduction <add>, %62, %cst_27 [2] : vector<4x8x8xf32> to vector<4x8xf32>
    %64 = vector.shape_cast %63 : vector<4x8xf32> to vector<4x8x1xf32>
    %65 = tpu.reciprocal %64 {approx = true} : vector<4x8x1xf32> -> vector<4x8x1xf32>
    %66 = vector.broadcast %65 : vector<4x8x1xf32> to vector<4x8x8xf32>
    %67 = arith.mulf %62, %66 : vector<4x8x8xf32>
    %68 = arith.truncf %67 : vector<4x8x8xf32> to vector<4x8x8xbf16>
    "tpu.trace_start"() <{level = 10 : i32, message = "hts,hsd->htd"}> : () -> ()
    %cst_28 = arith.constant dense<0.000000e+00> : vector<4x8x16xf32>
    %69 = tpu.matmul %68, %52, %cst_28 {dimension_numbers = #tpu.dot_dimension_numbers<[2], [1], [1], [2], [0, 0, 0, 1, 1, 2], [0], [0]>} : vector<4x8x8xbf16>, vector<4x8x16xbf16>, vector<4x8x16xf32> -> vector<4x8x16xf32>
    "tpu.trace_stop"() : () -> ()
    %70 = arith.truncf %69 : vector<4x8x16xf32> to vector<4x8x16xbf16>
    "tpu.trace_start"() <{level = 10 : i32, message = "htd,hdk->htk"}> : () -> ()
    %cst_29 = arith.constant dense<0.000000e+00> : vector<4x8x64xf32>
    %71 = tpu.matmul %70, %54, %cst_29 {dimension_numbers = #tpu.dot_dimension_numbers<[2], [1], [1], [2], [0, 0, 0, 1, 1, 2], [0], [0]>} : vector<4x8x16xbf16>, vector<4x16x64xbf16>, vector<4x8x64xf32> -> vector<4x8x64xf32>
    "tpu.trace_stop"() : () -> ()
    %cst_30 = arith.constant dense<0.000000e+00> : vector<8x64xf32>
    %72 = vector.multi_reduction <add>, %71, %cst_30 [0] : vector<4x8x64xf32> to vector<8x64xf32>
    %73 = vector.broadcast %56 : vector<1x64xf32> to vector<8x64xf32>
    %74 = arith.addf %72, %73 : vector<8x64xf32>
    %75 = arith.addf %3, %74 : vector<8x64xf32>
    %c0_31 = arith.constant 0 : index
    %c0_32 = arith.constant 0 : index
    %c0_33 = arith.constant 0 : index
    %76 = vector.load %arg24[%c0_31, %c0_32, %c0_33] : memref<1x1x64xf32, #tpu.memory_space<vmem>>, vector<1x1x64xf32>
    %77 = vector.shape_cast %76 : vector<1x1x64xf32> to vector<1x64xf32>
    %c0_34 = arith.constant 0 : index
    %c0_35 = arith.constant 0 : index
    %c0_36 = arith.constant 0 : index
    %78 = vector.load %arg25[%c0_34, %c0_35, %c0_36] : memref<1x1x64xf32, #tpu.memory_space<vmem>>, vector<1x1x64xf32>
    %79 = vector.shape_cast %78 : vector<1x1x64xf32> to vector<1x64xf32>
    %cst_37 = arith.constant dense<0.000000e+00> : vector<8xf32>
    %80 = vector.multi_reduction <add>, %75, %cst_37 [1] : vector<8x64xf32> to vector<8xf32>
    %81 = vector.shape_cast %80 : vector<8xf32> to vector<8x1xf32>
    %cst_38 = arith.constant 6.400000e+01 : f32
    %82 = vector.broadcast %cst_38 : f32 to vector<8x1xf32>
    %83 = arith.divf %81, %82 : vector<8x1xf32>
    %84 = vector.broadcast %83 : vector<8x1xf32> to vector<8x64xf32>
    %85 = arith.subf %75, %84 : vector<8x64xf32>
    %86 = arith.mulf %85, %85 : vector<8x64xf32>
    %cst_39 = arith.constant dense<0.000000e+00> : vector<8xf32>
    %87 = vector.multi_reduction <add>, %86, %cst_39 [1] : vector<8x64xf32> to vector<8xf32>
    %88 = vector.shape_cast %87 : vector<8xf32> to vector<8x1xf32>
    %cst_40 = arith.constant 6.400000e+01 : f32
    %89 = vector.broadcast %cst_40 : f32 to vector<8x1xf32>
    %90 = arith.divf %88, %89 : vector<8x1xf32>
    %91 = vector.broadcast %83 : vector<8x1xf32> to vector<8x64xf32>
    %92 = arith.subf %75, %91 : vector<8x64xf32>
    %cst_41 = arith.constant 9.99999974E-6 : f32
    %93 = vector.broadcast %cst_41 : f32 to vector<8x1xf32>
    %94 = arith.addf %90, %93 : vector<8x1xf32>
    %95 = math.rsqrt %94 : vector<8x1xf32>
    %96 = vector.broadcast %95 : vector<8x1xf32> to vector<8x64xf32>
    %97 = arith.mulf %92, %96 : vector<8x64xf32>
    %98 = vector.broadcast %77 : vector<1x64xf32> to vector<8x64xf32>
    %99 = arith.mulf %97, %98 : vector<8x64xf32>
    %100 = vector.broadcast %79 : vector<1x64xf32> to vector<8x64xf32>
    %101 = arith.addf %99, %100 : vector<8x64xf32>
    %102 = arith.addf %101, %5 : vector<8x64xf32>
    %103 = arith.truncf %102 : vector<8x64xf32> to vector<8x64xbf16>
    %c0_42 = arith.constant 0 : index
    %c0_43 = arith.constant 0 : index
    %c0_44 = arith.constant 0 : index
    %104 = vector.load %arg12[%c0_42, %c0_43, %c0_44] : memref<1x64x64xbf16, #tpu.memory_space<vmem>>, vector<1x64x64xbf16>
    %105 = vector.shape_cast %104 : vector<1x64x64xbf16> to vector<64x64xbf16>
    %cst_45 = arith.constant dense<0.000000e+00> : vector<8x64xf32>
    %106 = tpu.matmul %103, %105, %cst_45 {dimension_numbers = #tpu.dot_dimension_numbers<[1], [0], [0], [1], [0, 0, 1, 1], [], []>} : vector<8x64xbf16>, vector<64x64xbf16>, vector<8x64xf32> -> vector<8x64xf32>
    %c0_46 = arith.constant 0 : index
    %c0_47 = arith.constant 0 : index
    %c0_48 = arith.constant 0 : index
    %107 = vector.load %arg13[%c0_46, %c0_47, %c0_48] : memref<1x1x64xf32, #tpu.memory_space<vmem>>, vector<1x1x64xf32>
    %108 = vector.shape_cast %107 : vector<1x1x64xf32> to vector<1x64xf32>
    %109 = vector.broadcast %108 : vector<1x64xf32> to vector<8x64xf32>
    %110 = arith.addf %106, %109 : vector<8x64xf32>
    %c0_49 = arith.constant 0 : index
    %c0_50 = arith.constant 0 : index
    %c0_51 = arith.constant 0 : index
    %111 = vector.load %arg4[%c0_49, %c0_50, %c0_51] : memref<1x16x64xbf16, #tpu.memory_space<vmem>>, vector<1x16x64xbf16>
    %112 = vector.shape_cast %111 : vector<1x16x64xbf16> to vector<16x64xbf16>
    %c0_52 = arith.constant 0 : index
    %c0_53 = arith.constant 0 : index
    %c0_54 = arith.constant 0 : index
    %113 = vector.load %arg14[%c0_52, %c0_53, %c0_54] : memref<1x64x64xbf16, #tpu.memory_space<vmem>>, vector<1x64x64xbf16>
    %114 = vector.shape_cast %113 : vector<1x64x64xbf16> to vector<64x64xbf16>
    %cst_55 = arith.constant dense<0.000000e+00> : vector<16x64xf32>
    %115 = tpu.matmul %112, %114, %cst_55 {dimension_numbers = #tpu.dot_dimension_numbers<[1], [0], [0], [1], [0, 0, 1, 1], [], []>} : vector<16x64xbf16>, vector<64x64xbf16>, vector<16x64xf32> -> vector<16x64xf32>
    %c0_56 = arith.constant 0 : index
    %c0_57 = arith.constant 0 : index
    %c0_58 = arith.constant 0 : index
    %116 = vector.load %arg15[%c0_56, %c0_57, %c0_58] : memref<1x1x64xf32, #tpu.memory_space<vmem>>, vector<1x1x64xf32>
    %117 = vector.shape_cast %116 : vector<1x1x64xf32> to vector<1x64xf32>
    %118 = vector.broadcast %117 : vector<1x64xf32> to vector<16x64xf32>
    %119 = arith.addf %115, %118 : vector<16x64xf32>
    %c0_59 = arith.constant 0 : index
    %c0_60 = arith.constant 0 : index
    %c0_61 = arith.constant 0 : index
    %120 = vector.load %arg5[%c0_59, %c0_60, %c0_61] : memref<1x16x64xbf16, #tpu.memory_space<vmem>>, vector<1x16x64xbf16>
    %121 = vector.shape_cast %120 : vector<1x16x64xbf16> to vector<16x64xbf16>
    %c0_62 = arith.constant 0 : index
    %c0_63 = arith.constant 0 : index
    %c0_64 = arith.constant 0 : index
    %122 = vector.load %arg16[%c0_62, %c0_63, %c0_64] : memref<1x64x64xbf16, #tpu.memory_space<vmem>>, vector<1x64x64xbf16>
    %123 = vector.shape_cast %122 : vector<1x64x64xbf16> to vector<64x64xbf16>
    %cst_65 = arith.constant dense<0.000000e+00> : vector<16x64xf32>
    %124 = tpu.matmul %121, %123, %cst_65 {dimension_numbers = #tpu.dot_dimension_numbers<[1], [0], [0], [1], [0, 0, 1, 1], [], []>} : vector<16x64xbf16>, vector<64x64xbf16>, vector<16x64xf32> -> vector<16x64xf32>
    %c0_66 = arith.constant 0 : index
    %c0_67 = arith.constant 0 : index
    %c0_68 = arith.constant 0 : index
    %125 = vector.load %arg17[%c0_66, %c0_67, %c0_68] : memref<1x1x64xf32, #tpu.memory_space<vmem>>, vector<1x1x64xf32>
    %126 = vector.shape_cast %125 : vector<1x1x64xf32> to vector<1x64xf32>
    %127 = vector.broadcast %126 : vector<1x64xf32> to vector<16x64xf32>
    %128 = arith.addf %124, %127 : vector<16x64xf32>
    %129 = vector.extract_strided_slice %110 {offsets = [0, 0], sizes = [8, 16], strides = [1, 1]} : vector<8x64xf32> to vector<8x16xf32>
    %130 = vector.extract_strided_slice %110 {offsets = [0, 16], sizes = [8, 16], strides = [1, 1]} : vector<8x64xf32> to vector<8x16xf32>
    %131 = vector.extract_strided_slice %110 {offsets = [0, 32], sizes = [8, 16], strides = [1, 1]} : vector<8x64xf32> to vector<8x16xf32>
    %132 = vector.extract_strided_slice %110 {offsets = [0, 48], sizes = [8, 16], strides = [1, 1]} : vector<8x64xf32> to vector<8x16xf32>
    %133 = vector.shape_cast %129 : vector<8x16xf32> to vector<1x8x16xf32>
    %134 = vector.shape_cast %130 : vector<8x16xf32> to vector<1x8x16xf32>
    %135 = vector.shape_cast %131 : vector<8x16xf32> to vector<1x8x16xf32>
    %136 = vector.shape_cast %132 : vector<8x16xf32> to vector<1x8x16xf32>
    %137 = tpu.concatenate %133, %134, %135, %136 in 0 : vector<1x8x16xf32>, vector<1x8x16xf32>, vector<1x8x16xf32>, vector<1x8x16xf32> -> vector<4x8x16xf32>
    %138 = arith.truncf %137 : vector<4x8x16xf32> to vector<4x8x16xbf16>
    %139 = vector.extract_strided_slice %119 {offsets = [0, 0], sizes = [16, 16], strides = [1, 1]} : vector<16x64xf32> to vector<16x16xf32>
    %140 = vector.extract_strided_slice %119 {offsets = [0, 16], sizes = [16, 16], strides = [1, 1]} : vector<16x64xf32> to vector<16x16xf32>
    %141 = vector.extract_strided_slice %119 {offsets = [0, 32], sizes = [16, 16], strides = [1, 1]} : vector<16x64xf32> to vector<16x16xf32>
    %142 = vector.extract_strided_slice %119 {offsets = [0, 48], sizes = [16, 16], strides = [1, 1]} : vector<16x64xf32> to vector<16x16xf32>
    %143 = vector.shape_cast %139 : vector<16x16xf32> to vector<1x16x16xf32>
    %144 = vector.shape_cast %140 : vector<16x16xf32> to vector<1x16x16xf32>
    %145 = vector.shape_cast %141 : vector<16x16xf32> to vector<1x16x16xf32>
    %146 = vector.shape_cast %142 : vector<16x16xf32> to vector<1x16x16xf32>
    %147 = tpu.concatenate %143, %144, %145, %146 in 0 : vector<1x16x16xf32>, vector<1x16x16xf32>, vector<1x16x16xf32>, vector<1x16x16xf32> -> vector<4x16x16xf32>
    %148 = arith.truncf %147 : vector<4x16x16xf32> to vector<4x16x16xbf16>
    %149 = vector.extract_strided_slice %128 {offsets = [0, 0], sizes = [16, 16], strides = [1, 1]} : vector<16x64xf32> to vector<16x16xf32>
    %150 = vector.extract_strided_slice %128 {offsets = [0, 16], sizes = [16, 16], strides = [1, 1]} : vector<16x64xf32> to vector<16x16xf32>
    %151 = vector.extract_strided_slice %128 {offsets = [0, 32], sizes = [16, 16], strides = [1, 1]} : vector<16x64xf32> to vector<16x16xf32>
    %152 = vector.extract_strided_slice %128 {offsets = [0, 48], sizes = [16, 16], strides = [1, 1]} : vector<16x64xf32> to vector<16x16xf32>
    %153 = vector.shape_cast %149 : vector<16x16xf32> to vector<1x16x16xf32>
    %154 = vector.shape_cast %150 : vector<16x16xf32> to vector<1x16x16xf32>
    %155 = vector.shape_cast %151 : vector<16x16xf32> to vector<1x16x16xf32>
    %156 = vector.shape_cast %152 : vector<16x16xf32> to vector<1x16x16xf32>
    %157 = tpu.concatenate %153, %154, %155, %156 in 0 : vector<1x16x16xf32>, vector<1x16x16xf32>, vector<1x16x16xf32>, vector<1x16x16xf32> -> vector<4x16x16xf32>
    %158 = arith.truncf %157 : vector<4x16x16xf32> to vector<4x16x16xbf16>
    %c0_69 = arith.constant 0 : index
    %c0_70 = arith.constant 0 : index
    %c0_71 = arith.constant 0 : index
    %c0_72 = arith.constant 0 : index
    %159 = vector.load %arg18[%c0_69, %c0_70, %c0_71, %c0_72] : memref<1x4x16x64xbf16, #tpu.memory_space<vmem>>, vector<1x4x16x64xbf16>
    %160 = vector.shape_cast %159 : vector<1x4x16x64xbf16> to vector<4x16x64xbf16>
    %c0_73 = arith.constant 0 : index
    %c0_74 = arith.constant 0 : index
    %c0_75 = arith.constant 0 : index
    %161 = vector.load %arg19[%c0_73, %c0_74, %c0_75] : memref<1x1x64xf32, #tpu.memory_space<vmem>>, vector<1x1x64xf32>
    %162 = vector.shape_cast %161 : vector<1x1x64xf32> to vector<1x64xf32>
    "tpu.trace_start"() <{level = 10 : i32, message = "htd,hsd->hts"}> : () -> ()
    %cst_76 = arith.constant dense<0.000000e+00> : vector<4x8x16xf32>
    %163 = tpu.matmul %138, %148, %cst_76 {dimension_numbers = #tpu.dot_dimension_numbers<[2], [2], [1], [1], [0, 0, 0, 1, 1, 1], [0], [0]>} : vector<4x8x16xbf16>, vector<4x16x16xbf16>, vector<4x8x16xf32> -> vector<4x8x16xf32>
    "tpu.trace_stop"() : () -> ()
    %cst_77 = arith.constant dense<0xFF800000> : vector<4x8xf32>
    %164 = vector.multi_reduction <maximumf>, %163, %cst_77 [2] : vector<4x8x16xf32> to vector<4x8xf32>
    %165 = vector.shape_cast %164 : vector<4x8xf32> to vector<4x8x1xf32>
    %166 = vector.broadcast %165 : vector<4x8x1xf32> to vector<4x8x16xf32>
    %167 = arith.subf %163, %166 : vector<4x8x16xf32>
    %168 = math.exp %167 : vector<4x8x16xf32>
    %cst_78 = arith.constant dense<0.000000e+00> : vector<4x8xf32>
    %169 = vector.multi_reduction <add>, %168, %cst_78 [2] : vector<4x8x16xf32> to vector<4x8xf32>
    %170 = vector.shape_cast %169 : vector<4x8xf32> to vector<4x8x1xf32>
    %171 = tpu.reciprocal %170 {approx = true} : vector<4x8x1xf32> -> vector<4x8x1xf32>
    %172 = vector.broadcast %171 : vector<4x8x1xf32> to vector<4x8x16xf32>
    %173 = arith.mulf %168, %172 : vector<4x8x16xf32>
    %174 = arith.truncf %173 : vector<4x8x16xf32> to vector<4x8x16xbf16>
    "tpu.trace_start"() <{level = 10 : i32, message = "hts,hsd->htd"}> : () -> ()
    %cst_79 = arith.constant dense<0.000000e+00> : vector<4x8x16xf32>
    %175 = tpu.matmul %174, %158, %cst_79 {dimension_numbers = #tpu.dot_dimension_numbers<[2], [1], [1], [2], [0, 0, 0, 1, 1, 2], [0], [0]>} : vector<4x8x16xbf16>, vector<4x16x16xbf16>, vector<4x8x16xf32> -> vector<4x8x16xf32>
    "tpu.trace_stop"() : () -> ()
    %176 = arith.truncf %175 : vector<4x8x16xf32> to vector<4x8x16xbf16>
    "tpu.trace_start"() <{level = 10 : i32, message = "htd,hdk->htk"}> : () -> ()
    %cst_80 = arith.constant dense<0.000000e+00> : vector<4x8x64xf32>
    %177 = tpu.matmul %176, %160, %cst_80 {dimension_numbers = #tpu.dot_dimension_numbers<[2], [1], [1], [2], [0, 0, 0, 1, 1, 2], [0], [0]>} : vector<4x8x16xbf16>, vector<4x16x64xbf16>, vector<4x8x64xf32> -> vector<4x8x64xf32>
    "tpu.trace_stop"() : () -> ()
    %cst_81 = arith.constant dense<0.000000e+00> : vector<8x64xf32>
    %178 = vector.multi_reduction <add>, %177, %cst_81 [0] : vector<4x8x64xf32> to vector<8x64xf32>
    %179 = vector.broadcast %162 : vector<1x64xf32> to vector<8x64xf32>
    %180 = arith.addf %178, %179 : vector<8x64xf32>
    %181 = arith.addf %101, %180 : vector<8x64xf32>
    %c0_82 = arith.constant 0 : index
    %c0_83 = arith.constant 0 : index
    %c0_84 = arith.constant 0 : index
    %182 = vector.load %arg26[%c0_82, %c0_83, %c0_84] : memref<1x1x64xf32, #tpu.memory_space<vmem>>, vector<1x1x64xf32>
    %183 = vector.shape_cast %182 : vector<1x1x64xf32> to vector<1x64xf32>
    %c0_85 = arith.constant 0 : index
    %c0_86 = arith.constant 0 : index
    %c0_87 = arith.constant 0 : index
    %184 = vector.load %arg27[%c0_85, %c0_86, %c0_87] : memref<1x1x64xf32, #tpu.memory_space<vmem>>, vector<1x1x64xf32>
    %185 = vector.shape_cast %184 : vector<1x1x64xf32> to vector<1x64xf32>
    %cst_88 = arith.constant dense<0.000000e+00> : vector<8xf32>
    %186 = vector.multi_reduction <add>, %181, %cst_88 [1] : vector<8x64xf32> to vector<8xf32>
    %187 = vector.shape_cast %186 : vector<8xf32> to vector<8x1xf32>
    %cst_89 = arith.constant 6.400000e+01 : f32
    %188 = vector.broadcast %cst_89 : f32 to vector<8x1xf32>
    %189 = arith.divf %187, %188 : vector<8x1xf32>
    %190 = vector.broadcast %189 : vector<8x1xf32> to vector<8x64xf32>
    %191 = arith.subf %181, %190 : vector<8x64xf32>
    %192 = arith.mulf %191, %191 : vector<8x64xf32>
    %cst_90 = arith.constant dense<0.000000e+00> : vector<8xf32>
    %193 = vector.multi_reduction <add>, %192, %cst_90 [1] : vector<8x64xf32> to vector<8xf32>
    %194 = vector.shape_cast %193 : vector<8xf32> to vector<8x1xf32>
    %cst_91 = arith.constant 6.400000e+01 : f32
    %195 = vector.broadcast %cst_91 : f32 to vector<8x1xf32>
    %196 = arith.divf %194, %195 : vector<8x1xf32>
    %197 = vector.broadcast %189 : vector<8x1xf32> to vector<8x64xf32>
    %198 = arith.subf %181, %197 : vector<8x64xf32>
    %cst_92 = arith.constant 9.99999974E-6 : f32
    %199 = vector.broadcast %cst_92 : f32 to vector<8x1xf32>
    %200 = arith.addf %196, %199 : vector<8x1xf32>
    %201 = math.rsqrt %200 : vector<8x1xf32>
    %202 = vector.broadcast %201 : vector<8x1xf32> to vector<8x64xf32>
    %203 = arith.mulf %198, %202 : vector<8x64xf32>
    %204 = vector.broadcast %183 : vector<1x64xf32> to vector<8x64xf32>
    %205 = arith.mulf %203, %204 : vector<8x64xf32>
    %206 = vector.broadcast %185 : vector<1x64xf32> to vector<8x64xf32>
    %207 = arith.addf %205, %206 : vector<8x64xf32>
    %208 = arith.truncf %207 : vector<8x64xf32> to vector<8x64xbf16>
    %c0_93 = arith.constant 0 : index
    %c0_94 = arith.constant 0 : index
    %c0_95 = arith.constant 0 : index
    %209 = vector.load %arg20[%c0_93, %c0_94, %c0_95] : memref<1x64x128xbf16, #tpu.memory_space<vmem>>, vector<1x64x128xbf16>
    %210 = vector.shape_cast %209 : vector<1x64x128xbf16> to vector<64x128xbf16>
    %cst_96 = arith.constant dense<0.000000e+00> : vector<8x128xf32>
    %211 = tpu.matmul %208, %210, %cst_96 {dimension_numbers = #tpu.dot_dimension_numbers<[1], [0], [0], [1], [0, 0, 1, 1], [], []>} : vector<8x64xbf16>, vector<64x128xbf16>, vector<8x128xf32> -> vector<8x128xf32>
    %c0_97 = arith.constant 0 : index
    %c0_98 = arith.constant 0 : index
    %c0_99 = arith.constant 0 : index
    %212 = vector.load %arg21[%c0_97, %c0_98, %c0_99] : memref<1x1x128xf32, #tpu.memory_space<vmem>>, vector<1x1x128xf32>
    %213 = vector.shape_cast %212 : vector<1x1x128xf32> to vector<1x128xf32>
    %214 = vector.broadcast %213 : vector<1x128xf32> to vector<8x128xf32>
    %215 = arith.addf %211, %214 : vector<8x128xf32>
    %cst_100 = arith.constant 0.000000e+00 : f32
    %216 = vector.broadcast %cst_100 : f32 to vector<8x128xf32>
    %217 = arith.maximumf %215, %216 : vector<8x128xf32>
    %218 = arith.truncf %217 : vector<8x128xf32> to vector<8x128xbf16>
    %c0_101 = arith.constant 0 : index
    %c0_102 = arith.constant 0 : index
    %c0_103 = arith.constant 0 : index
    %219 = vector.load %arg22[%c0_101, %c0_102, %c0_103] : memref<1x128x64xbf16, #tpu.memory_space<vmem>>, vector<1x128x64xbf16>
    %220 = vector.shape_cast %219 : vector<1x128x64xbf16> to vector<128x64xbf16>
    %cst_104 = arith.constant dense<0.000000e+00> : vector<8x64xf32>
    %221 = tpu.matmul %218, %220, %cst_104 {dimension_numbers = #tpu.dot_dimension_numbers<[1], [0], [0], [1], [0, 0, 1, 1], [], []>} : vector<8x128xbf16>, vector<128x64xbf16>, vector<8x64xf32> -> vector<8x64xf32>
    %c0_105 = arith.constant 0 : index
    %c0_106 = arith.constant 0 : index
    %c0_107 = arith.constant 0 : index
    %222 = vector.load %arg23[%c0_105, %c0_106, %c0_107] : memref<1x1x64xf32, #tpu.memory_space<vmem>>, vector<1x1x64xf32>
    %223 = vector.shape_cast %222 : vector<1x1x64xf32> to vector<1x64xf32>
    %224 = vector.broadcast %223 : vector<1x64xf32> to vector<8x64xf32>
    %225 = arith.addf %221, %224 : vector<8x64xf32>
    %226 = arith.addf %207, %225 : vector<8x64xf32>
    %c0_108 = arith.constant 0 : index
    %c0_109 = arith.constant 0 : index
    %c0_110 = arith.constant 0 : index
    %227 = vector.load %arg28[%c0_108, %c0_109, %c0_110] : memref<1x1x64xf32, #tpu.memory_space<vmem>>, vector<1x1x64xf32>
    %228 = vector.shape_cast %227 : vector<1x1x64xf32> to vector<1x64xf32>
    %c0_111 = arith.constant 0 : index
    %c0_112 = arith.constant 0 : index
    %c0_113 = arith.constant 0 : index
    %229 = vector.load %arg29[%c0_111, %c0_112, %c0_113] : memref<1x1x64xf32, #tpu.memory_space<vmem>>, vector<1x1x64xf32>
    %230 = vector.shape_cast %229 : vector<1x1x64xf32> to vector<1x64xf32>
    %cst_114 = arith.constant dense<0.000000e+00> : vector<8xf32>
    %231 = vector.multi_reduction <add>, %226, %cst_114 [1] : vector<8x64xf32> to vector<8xf32>
    %232 = vector.shape_cast %231 : vector<8xf32> to vector<8x1xf32>
    %cst_115 = arith.constant 6.400000e+01 : f32
    %233 = vector.broadcast %cst_115 : f32 to vector<8x1xf32>
    %234 = arith.divf %232, %233 : vector<8x1xf32>
    %235 = vector.broadcast %234 : vector<8x1xf32> to vector<8x64xf32>
    %236 = arith.subf %226, %235 : vector<8x64xf32>
    %237 = arith.mulf %236, %236 : vector<8x64xf32>
    %cst_116 = arith.constant dense<0.000000e+00> : vector<8xf32>
    %238 = vector.multi_reduction <add>, %237, %cst_116 [1] : vector<8x64xf32> to vector<8xf32>
    %239 = vector.shape_cast %238 : vector<8xf32> to vector<8x1xf32>
    %cst_117 = arith.constant 6.400000e+01 : f32
    %240 = vector.broadcast %cst_117 : f32 to vector<8x1xf32>
    %241 = arith.divf %239, %240 : vector<8x1xf32>
    %242 = vector.broadcast %234 : vector<8x1xf32> to vector<8x64xf32>
    %243 = arith.subf %226, %242 : vector<8x64xf32>
    %cst_118 = arith.constant 9.99999974E-6 : f32
    %244 = vector.broadcast %cst_118 : f32 to vector<8x1xf32>
    %245 = arith.addf %241, %244 : vector<8x1xf32>
    %246 = math.rsqrt %245 : vector<8x1xf32>
    %247 = vector.broadcast %246 : vector<8x1xf32> to vector<8x64xf32>
    %248 = arith.mulf %243, %247 : vector<8x64xf32>
    %249 = vector.broadcast %228 : vector<1x64xf32> to vector<8x64xf32>
    %250 = arith.mulf %248, %249 : vector<8x64xf32>
    %251 = vector.broadcast %230 : vector<1x64xf32> to vector<8x64xf32>
    %252 = arith.addf %250, %251 : vector<8x64xf32>
    %c0_119 = arith.constant 0 : index
    %c0_120 = arith.constant 0 : index
    %253 = vector.load %arg34[%c0_119, %c0_120] : memref<8x64xf32, #tpu.memory_space<vmem>>, vector<8x64xf32>
    tpu.vector_store %arg34[%c0_119, %c0_120], %252 {strides = array<i32>} : memref<8x64xf32, #tpu.memory_space<vmem>>, vector<8x64xf32>,
    %c0_121 = arith.constant 0 : index
    %c0_122 = arith.constant 0 : index
    %c0_123 = arith.constant 0 : index
    %c0_124 = arith.constant 0 : index
    %254 = vector.load %arg32[%c0_121, %c0_122, %c0_123, %c0_124] : memref<1x1x8x64xf32, #tpu.memory_space<vmem>>, vector<1x1x8x64xf32>
    %255 = vector.shape_cast %254 : vector<1x1x8x64xf32> to vector<8x64xf32>
    %256 = vector.shape_cast %252 : vector<8x64xf32> to vector<1x1x8x64xf32>
    tpu.vector_store %arg32[%c0_121, %c0_122, %c0_123, %c0_124], %256 {strides = array<i32>} : memref<1x1x8x64xf32, #tpu.memory_space<vmem>>, vector<1x1x8x64xf32>,
    %c0_125 = arith.constant 0 : index
    %c0_126 = arith.constant 0 : index
    %257 = vector.load %arg30[%c0_125, %c0_126] : memref<1x64xf32, #tpu.memory_space<vmem>>, vector<1x64xf32>
    %c0_127 = arith.constant 0 : index
    %c0_128 = arith.constant 0 : index
    %258 = vector.load %arg31[%c0_127, %c0_128] : memref<1x64xf32, #tpu.memory_space<vmem>>, vector<1x64xf32>
    %cst_129 = arith.constant dense<0.000000e+00> : vector<8xf32>
    %259 = vector.multi_reduction <add>, %252, %cst_129 [1] : vector<8x64xf32> to vector<8xf32>
    %260 = vector.shape_cast %259 : vector<8xf32> to vector<8x1xf32>
    %cst_130 = arith.constant 6.400000e+01 : f32
    %261 = vector.broadcast %cst_130 : f32 to vector<8x1xf32>
    %262 = arith.divf %260, %261 : vector<8x1xf32>
    %263 = vector.broadcast %262 : vector<8x1xf32> to vector<8x64xf32>
    %264 = arith.subf %252, %263 : vector<8x64xf32>
    %265 = arith.mulf %264, %264 : vector<8x64xf32>
    %cst_131 = arith.constant dense<0.000000e+00> : vector<8xf32>
    %266 = vector.multi_reduction <add>, %265, %cst_131 [1] : vector<8x64xf32> to vector<8xf32>
    %267 = vector.shape_cast %266 : vector<8xf32> to vector<8x1xf32>
    %cst_132 = arith.constant 6.400000e+01 : f32
    %268 = vector.broadcast %cst_132 : f32 to vector<8x1xf32>
    %269 = arith.divf %267, %268 : vector<8x1xf32>
    %270 = vector.broadcast %262 : vector<8x1xf32> to vector<8x64xf32>
    %271 = arith.subf %252, %270 : vector<8x64xf32>
    %cst_133 = arith.constant 9.99999974E-6 : f32
    %272 = vector.broadcast %cst_133 : f32 to vector<8x1xf32>
    %273 = arith.addf %269, %272 : vector<8x1xf32>
    %274 = math.rsqrt %273 : vector<8x1xf32>
    %275 = vector.broadcast %274 : vector<8x1xf32> to vector<8x64xf32>
    %276 = arith.mulf %271, %275 : vector<8x64xf32>
    %277 = vector.broadcast %257 : vector<1x64xf32> to vector<8x64xf32>
    %278 = arith.mulf %276, %277 : vector<8x64xf32>
    %279 = vector.broadcast %258 : vector<1x64xf32> to vector<8x64xf32>
    %280 = arith.addf %278, %279 : vector<8x64xf32>
    %c0_134 = arith.constant 0 : index
    %c0_135 = arith.constant 0 : index
    %c0_136 = arith.constant 0 : index
    %c0_137 = arith.constant 0 : index
    %281 = vector.load %arg33[%c0_134, %c0_135, %c0_136, %c0_137] : memref<1x1x8x64xf32, #tpu.memory_space<vmem>>, vector<1x1x8x64xf32>
    %282 = vector.shape_cast %281 : vector<1x1x8x64xf32> to vector<8x64xf32>
    %283 = vector.shape_cast %280 : vector<8x64xf32> to vector<1x1x8x64xf32>
    tpu.vector_store %arg33[%c0_134, %c0_135, %c0_136, %c0_137], %283 {strides = array<i32>} : memref<1x1x8x64xf32, #tpu.memory_space<vmem>>, vector<1x1x8x64xf32>,
    return
  }
  func.func @transform_0(%arg0: i32, %arg1: i32) -> (i32, i32, i32) {
    %c0_i32 = arith.constant 0 : i32
    %c0_i32_0 = arith.constant 0 : i32
    %c0_i32_1 = arith.constant 0 : i32
    return %arg0, %c0_i32, %c0_i32_0 : i32, i32, i32
  }
  func.func @transform_1(%arg0: i32, %arg1: i32) -> (i32, i32, i32) {
    %c0_i32 = arith.constant 0 : i32
    %c0_i32_0 = arith.constant 0 : i32
    %c0_i32_1 = arith.constant 0 : i32
    return %arg0, %c0_i32, %c0_i32_0 : i32, i32, i32
  }
  func.func @transform_2(%arg0: i32, %arg1: i32) -> (i32, i32, i32) {
    %c0_i32 = arith.constant 0 : i32
    %c0_i32_0 = arith.constant 0 : i32
    %c0_i32_1 = arith.constant 0 : i32
    return %arg0, %c0_i32, %c0_i32_0 : i32, i32, i32
  }
  func.func @transform_3(%arg0: i32, %arg1: i32) -> (i32, i32, i32) {
    %c0_i32 = arith.constant 0 : i32
    %c0_i32_0 = arith.constant 0 : i32
    %c0_i32_1 = arith.constant 0 : i32
    return %arg0, %c0_i32, %c0_i32_0 : i32, i32, i32
  }
  func.func @transform_4(%arg0: i32, %arg1: i32) -> (i32, i32, i32) {
    %c0_i32 = arith.constant 0 : i32
    %c0_i32_0 = arith.constant 0 : i32
    %c0_i32_1 = arith.constant 0 : i32
    return %arg1, %c0_i32, %c0_i32_0 : i32, i32, i32
  }
  func.func @transform_5(%arg0: i32, %arg1: i32) -> (i32, i32, i32) {
    %c0_i32 = arith.constant 0 : i32
    %c0_i32_0 = arith.constant 0 : i32
    %c0_i32_1 = arith.constant 0 : i32
    return %arg1, %c0_i32, %c0_i32_0 : i32, i32, i32
  }
  func.func @transform_6(%arg0: i32, %arg1: i32) -> (i32, i32, i32) {
    %c0_i32 = arith.constant 0 : i32
    %c0_i32_0 = arith.constant 0 : i32
    %c0_i32_1 = arith.constant 0 : i32
    return %arg1, %c0_i32, %c0_i32_0 : i32, i32, i32
  }
  func.func @transform_7(%arg0: i32, %arg1: i32) -> (i32, i32, i32) {
    %c0_i32 = arith.constant 0 : i32
    %c0_i32_0 = arith.constant 0 : i32
    %c0_i32_1 = arith.constant 0 : i32
    return %arg1, %c0_i32, %c0_i32_0 : i32, i32, i32
  }
  func.func @transform_8(%arg0: i32, %arg1: i32) -> (i32, i32, i32, i32) {
    %c0_i32 = arith.constant 0 : i32
    %c0_i32_0 = arith.constant 0 : i32
    %c0_i32_1 = arith.constant 0 : i32
    %c0_i32_2 = arith.constant 0 : i32
    return %arg1, %c0_i32, %c0_i32_0, %c0_i32_1 : i32, i32, i32, i32
  }
  func.func @transform_9(%arg0: i32, %arg1: i32) -> (i32, i32, i32) {
    %c0_i32 = arith.constant 0 : i32
    %c0_i32_0 = arith.constant 0 : i32
    %c0_i32_1 = arith.constant 0 : i32
    return %arg1, %c0_i32, %c0_i32_0 : i32, i32, i32
  }
  func.func @transform_10(%arg0: i32, %arg1: i32) -> (i32, i32, i32) {
    %c0_i32 = arith.constant 0 : i32
    %c0_i32_0 = arith.constant 0 : i32
    %c0_i32_1 = arith.constant 0 : i32
    return %arg1, %c0_i32, %c0_i32_0 : i32, i32, i32
  }
  func.func @transform_11(%arg0: i32, %arg1: i32) -> (i32, i32, i32) {
    %c0_i32 = arith.constant 0 : i32
    %c0_i32_0 = arith.constant 0 : i32
    %c0_i32_1 = arith.constant 0 : i32
    return %arg1, %c0_i32, %c0_i32_0 : i32, i32, i32
  }
  func.func @transform_12(%arg0: i32, %arg1: i32) -> (i32, i32, i32) {
    %c0_i32 = arith.constant 0 : i32
    %c0_i32_0 = arith.constant 0 : i32
    %c0_i32_1 = arith.constant 0 : i32
    return %arg1, %c0_i32, %c0_i32_0 : i32, i32, i32
  }
  func.func @transform_13(%arg0: i32, %arg1: i32) -> (i32, i32, i32) {
    %c0_i32 = arith.constant 0 : i32
    %c0_i32_0 = arith.constant 0 : i32
    %c0_i32_1 = arith.constant 0 : i32
    return %arg1, %c0_i32, %c0_i32_0 : i32, i32, i32
  }
  func.func @transform_14(%arg0: i32, %arg1: i32) -> (i32, i32, i32) {
    %c0_i32 = arith.constant 0 : i32
    %c0_i32_0 = arith.constant 0 : i32
    %c0_i32_1 = arith.constant 0 : i32
    return %arg1, %c0_i32, %c0_i32_0 : i32, i32, i32
  }
  func.func @transform_15(%arg0: i32, %arg1: i32) -> (i32, i32, i32) {
    %c0_i32 = arith.constant 0 : i32
    %c0_i32_0 = arith.constant 0 : i32
    %c0_i32_1 = arith.constant 0 : i32
    return %arg1, %c0_i32, %c0_i32_0 : i32, i32, i32
  }
  func.func @transform_16(%arg0: i32, %arg1: i32) -> (i32, i32, i32, i32) {
    %c0_i32 = arith.constant 0 : i32
    %c0_i32_0 = arith.constant 0 : i32
    %c0_i32_1 = arith.constant 0 : i32
    %c0_i32_2 = arith.constant 0 : i32
    return %arg1, %c0_i32, %c0_i32_0, %c0_i32_1 : i32, i32, i32, i32
  }
  func.func @transform_17(%arg0: i32, %arg1: i32) -> (i32, i32, i32) {
    %c0_i32 = arith.constant 0 : i32
    %c0_i32_0 = arith.constant 0 : i32
    %c0_i32_1 = arith.constant 0 : i32
    return %arg1, %c0_i32, %c0_i32_0 : i32, i32, i32
  }
  func.func @transform_18(%arg0: i32, %arg1: i32) -> (i32, i32, i32) {
    %c0_i32 = arith.constant 0 : i32
    %c0_i32_0 = arith.constant 0 : i32
    %c0_i32_1 = arith.constant 0 : i32
    return %arg1, %c0_i32, %c0_i32_0 : i32, i32, i32
  }
  func.func @transform_19(%arg0: i32, %arg1: i32) -> (i32, i32, i32) {
    %c0_i32 = arith.constant 0 : i32
    %c0_i32_0 = arith.constant 0 : i32
    %c0_i32_1 = arith.constant 0 : i32
    return %arg1, %c0_i32, %c0_i32_0 : i32, i32, i32
  }
  func.func @transform_20(%arg0: i32, %arg1: i32) -> (i32, i32, i32) {
    %c0_i32 = arith.constant 0 : i32
    %c0_i32_0 = arith.constant 0 : i32
    %c0_i32_1 = arith.constant 0 : i32
    return %arg1, %c0_i32, %c0_i32_0 : i32, i32, i32
  }
  func.func @transform_21(%arg0: i32, %arg1: i32) -> (i32, i32, i32) {
    %c0_i32 = arith.constant 0 : i32
    %c0_i32_0 = arith.constant 0 : i32
    %c0_i32_1 = arith.constant 0 : i32
    return %arg1, %c0_i32, %c0_i32_0 : i32, i32, i32
  }
  func.func @transform_22(%arg0: i32, %arg1: i32) -> (i32, i32, i32) {
    %c0_i32 = arith.constant 0 : i32
    %c0_i32_0 = arith.constant 0 : i32
    %c0_i32_1 = arith.constant 0 : i32
    return %arg1, %c0_i32, %c0_i32_0 : i32, i32, i32
  }
  func.func @transform_23(%arg0: i32, %arg1: i32) -> (i32, i32, i32) {
    %c0_i32 = arith.constant 0 : i32
    %c0_i32_0 = arith.constant 0 : i32
    %c0_i32_1 = arith.constant 0 : i32
    return %arg1, %c0_i32, %c0_i32_0 : i32, i32, i32
  }
  func.func @transform_24(%arg0: i32, %arg1: i32) -> (i32, i32, i32) {
    %c0_i32 = arith.constant 0 : i32
    %c0_i32_0 = arith.constant 0 : i32
    %c0_i32_1 = arith.constant 0 : i32
    return %arg1, %c0_i32, %c0_i32_0 : i32, i32, i32
  }
  func.func @transform_25(%arg0: i32, %arg1: i32) -> (i32, i32, i32) {
    %c0_i32 = arith.constant 0 : i32
    %c0_i32_0 = arith.constant 0 : i32
    %c0_i32_1 = arith.constant 0 : i32
    return %arg1, %c0_i32, %c0_i32_0 : i32, i32, i32
  }
  func.func @transform_26(%arg0: i32, %arg1: i32) -> (i32, i32, i32) {
    %c0_i32 = arith.constant 0 : i32
    %c0_i32_0 = arith.constant 0 : i32
    %c0_i32_1 = arith.constant 0 : i32
    return %arg1, %c0_i32, %c0_i32_0 : i32, i32, i32
  }
  func.func @transform_27(%arg0: i32, %arg1: i32) -> (i32, i32, i32) {
    %c0_i32 = arith.constant 0 : i32
    %c0_i32_0 = arith.constant 0 : i32
    %c0_i32_1 = arith.constant 0 : i32
    return %arg1, %c0_i32, %c0_i32_0 : i32, i32, i32
  }
  func.func @transform_28(%arg0: i32, %arg1: i32) -> (i32, i32) {
    %c0_i32 = arith.constant 0 : i32
    %c0_i32_0 = arith.constant 0 : i32
    %c0_i32_1 = arith.constant 0 : i32
    return %c0_i32, %c0_i32_0 : i32, i32
  }
  func.func @transform_29(%arg0: i32, %arg1: i32) -> (i32, i32) {
    %c0_i32 = arith.constant 0 : i32
    %c0_i32_0 = arith.constant 0 : i32
    %c0_i32_1 = arith.constant 0 : i32
    return %c0_i32, %c0_i32_0 : i32, i32
  }
  func.func @transform_30(%arg0: i32, %arg1: i32) -> (i32, i32, i32, i32) {
    %c0_i32 = arith.constant 0 : i32
    %c0_i32_0 = arith.constant 0 : i32
    %c0_i32_1 = arith.constant 0 : i32
    return %arg1, %arg0, %c0_i32, %c0_i32_0 : i32, i32, i32, i32
  }
  func.func @transform_31(%arg0: i32, %arg1: i32) -> (i32, i32, i32, i32) {
    %c0_i32 = arith.constant 0 : i32
    %c0_i32_0 = arith.constant 0 : i32
    %c0_i32_1 = arith.constant 0 : i32
    return %arg1, %arg0, %c0_i32, %c0_i32_0 : i32, i32, i32, i32
  }
}

</mosaic_0001>

<llo_original>
// kernel: tpu_custom_call.1
$region0: #{tpu_custom_call.1}
  #allocation0 [shape = 'u32[]', space=smem, size = 0x4, offset = 0x4, fixed_abs, tag = 'smem constant byte address 0x4 - core index']
  #allocation1 [shape = 'u32[144,128]{1,0:T(1,128)}', space=vmem, size = 0x12000, scoped, tag = 'internal scratch']
  #allocation2 [shape = 'f32[8,64]{1,0:T(8,128)}', space=vmem, size = 0x1000, scoped, tag = 'scratch operand']
  %s0 = inlined_call_operand.smem [shape: u32[32], index: -1, kind: input, shape index: {}]
  %s1 = sld [smem:[%s0]]
  %s2 = scalar_lea.smem %s0, 1
  %s3 = sld [smem:[%s2]]
  %s4 = scalar_lea.smem %s0, 2
  %s5 = sld [smem:[%s4]]
  %s6 = scalar_lea.smem %s0, 3
  %s7 = sld [smem:[%s6]]
  %s8 = scalar_lea.smem %s0, 4
  %s9 = sld [smem:[%s8]]
  %s10 = scalar_lea.smem %s0, 5
  %s11 = sld [smem:[%s10]]
  %s12 = scalar_lea.smem %s0, 6
  %s13 = sld [smem:[%s12]]
  %s14 = scalar_lea.smem %s0, 7
  %s15 = sld [smem:[%s14]]
  %s16 = scalar_lea.smem %s0, 8
  %s17 = sld [smem:[%s16]]
  %s18 = scalar_lea.smem %s0, 9
  %s19 = sld [smem:[%s18]]
  %s20 = scalar_lea.smem %s0, 10
  %s21 = sld [smem:[%s20]]
  %s22 = scalar_lea.smem %s0, 11
  %s23 = sld [smem:[%s22]]
  %s24 = scalar_lea.smem %s0, 12
  %s25 = sld [smem:[%s24]]
  %s26 = scalar_lea.smem %s0, 13
  %s27 = sld [smem:[%s26]]
  %s28 = scalar_lea.smem %s0, 14
  %s29 = sld [smem:[%s28]]
  %s30 = scalar_lea.smem %s0, 15
  %s31 = sld [smem:[%s30]]
  %s32 = scalar_lea.smem %s0, 16
  %s33 = sld [smem:[%s32]]
  %s34 = scalar_lea.smem %s0, 17
  %s35 = sld [smem:[%s34]]
  %s36 = scalar_lea.smem %s0, 18
  %s37 = sld [smem:[%s36]]
  %s38 = scalar_lea.smem %s0, 19
  %s39 = sld [smem:[%s38]]
  %s40 = scalar_lea.smem %s0, 20
  %s41 = sld [smem:[%s40]]
  %s42 = scalar_lea.smem %s0, 21
  %s43 = sld [smem:[%s42]]
  %s44 = scalar_lea.smem %s0, 22
  %s45 = sld [smem:[%s44]]
  %s46 = scalar_lea.smem %s0, 23
  %s47 = sld [smem:[%s46]]
  %s48 = scalar_lea.smem %s0, 24
  %s49 = sld [smem:[%s48]]
  %s50 = scalar_lea.smem %s0, 25
  %s51 = sld [smem:[%s50]]
  %s52 = scalar_lea.smem %s0, 26
  %s53 = sld [smem:[%s52]]
  %s54 = scalar_lea.smem %s0, 27
  %s55 = sld [smem:[%s54]]
  %s56 = scalar_lea.smem %s0, 28
  %s57 = sld [smem:[%s56]]
  %s58 = scalar_lea.smem %s0, 29
  %s59 = sld [smem:[%s58]]
  %s60 = scalar_lea.smem %s0, 30
  %s61 = sld [smem:[%s60]]
  %s62 = scalar_lea.smem %s0, 31
  %s63 = sld [smem:[%s62]]
  %64 = xla_tuple %s61, %s63
  %s65 = sld [smem:[#allocation0]]
  $region201: #{tpu_custom_call.1} parent=0
    _
  %s67 = ssub.s32 1, %s65
  %s68 = scalar_select 0, %s67, %s65
  $region1: #{tpu_custom_call.1} parent=0
    #allocation3 [shape = 'u8[8192]{0}', space=vmem, size = 0x2000, scoped, tag = 'input window, operand 0']
    #allocation4 [shape = 's32[2]{0}', space=sflag, size = 0x8, scoped, tag = 'scoped memory for tpu_custom_call.1']
    #allocation5 [shape = 's32[2]{0}', space=sflag, size = 0x8, scoped, tag = 'scoped memory for tpu_custom_call.1']
    #allocation6 [shape = 'u8[8192]{0}', space=vmem, size = 0x2000, scoped, tag = 'input window, operand 1']
    #allocation7 [shape = 's32[2]{0}', space=sflag, size = 0x8, scoped, tag = 'scoped memory for tpu_custom_call.1']
    #allocation8 [shape = 'u8[8192]{0}', space=vmem, size = 0x2000, scoped, tag = 'input window, operand 2']
    #allocation9 [shape = 'u8[8192]{0}', space=vmem, size = 0x2000, scoped, tag = 'input window, operand 3']
    #allocation10 [shape = 's32[2]{0}', space=sflag, size = 0x8, scoped, tag = 'scoped memory for tpu_custom_call.1']
    #allocation11 [shape = 'u8[32768]{0}', space=vmem, size = 0x8000, scoped, tag = 'input window, operand 10']
    #allocation12 [shape = 'u8[32768]{0}', space=vmem, size = 0x8000, scoped, tag = 'input window, operand 12']
    #allocation13 [shape = 's32[2]{0}', space=sflag, size = 0x8, scoped, tag = 'scoped memory for tpu_custom_call.1']
    #allocation14 [shape = 'u8[32768]{0}', space=vmem, size = 0x8000, scoped, tag = 'input window, operand 14']
    #allocation15 [shape = 'u8[32768]{0}', space=vmem, size = 0x8000, scoped, tag = 'input window, operand 16']
    #allocation16 [shape = 's32[2]{0}', space=sflag, size = 0x8, scoped, tag = 'scoped memory for tpu_custom_call.1']
    #allocation17 [shape = 'u8[32768]{0}', space=vmem, size = 0x8000, scoped, tag = 'input window, operand 18']
    #allocation18 [shape = 'u8[8192]{0}', space=vmem, size = 0x2000, scoped, tag = 'output window, operand 0']
    #allocation19 [shape = 'u8[8192]{0}', space=vmem, size = 0x2000, scoped, tag = 'output window, operand 1']
    #allocation20 [shape = 's32[2]{0}', space=sflag, size = 0x8, scoped, tag = 'scoped memory for tpu_custom_call.1']
    %69 = vsyncpa [#allocation4], 0
    %s70 = scalar_lea.sflag [#allocation4], 1
    %71 = vsyncpa %s70, 0
    %72 = vsyncpa [#allocation7], 0
    %s73 = scalar_lea.sflag [#allocation7], 1
    %74 = vsyncpa %s73, 0
    %75 = vsyncpa [#allocation10], 0
    %s76 = scalar_lea.sflag [#allocation10], 1
    %77 = vsyncpa %s76, 0
    %78 = vsyncpa [#allocation13], 0
    %s79 = scalar_lea.sflag [#allocation13], 1
    %80 = vsyncpa %s79, 0
    %81 = vsyncpa [#allocation16], 0
    %s82 = scalar_lea.sflag [#allocation16], 1
    %83 = vsyncpa %s82, 0
    %84 = vsyncpa [#allocation5], 0
    %s85 = scalar_lea.sflag [#allocation5], 1
    %86 = vsyncpa %s85, 0
    %87 = vsyncpa [#allocation20], 0
    %s88 = scalar_lea.sflag [#allocation20], 1
    %89 = vsyncpa %s88, 0
    loop: start=0, step=1, limit=6
    $region2: #{tpu_custom_call.1} parent=1 // loop_pre_header
      _
    $region3: #{tpu_custom_call.1} parent=1 // loop_header
      %s91 = sphi 0, %s95
      %p92 = scmp.ge.s32.totalorder %s91, 6
      %s98 = sphi 0, %s110
      %s99 = sphi 0, %s106
      %s100 = sphi 0, %s98
      %s101 = sphi 0, %s99
      %s102 = sphi 0, %s100
      %s103 = sphi 0, %s101
      %s113 = sphi 0, %s115
      %s116 = sphi 0, %s113
      %s117 = sphi 0, %s116
      %s133 = sphi 0, %s117
      %s139 = sphi 0, %s141
      %s142 = sphi 0, %s139
      %s143 = sphi 0, %s142
      %s159 = sphi 0, %s143
      %s165 = sphi 0, %s167
      %s168 = sphi 0, %s165
      %s169 = sphi 0, %s168
      %s185 = sphi 0, %s169
      %s191 = sphi 0, %s193
      %s194 = sphi 0, %s191
      %s195 = sphi 0, %s194
      %s211 = sphi 0, %s195
      %s217 = sphi 0, %s219
      %s220 = sphi 0, %s217
      %s221 = sphi 0, %s220
      %s237 = sphi 0, %s221
      %s243 = sphi 0, %s245
      %s246 = sphi 0, %s243
      %s247 = sphi 0, %s246
      %s263 = sphi 0, %s247
      %s269 = sphi 0, %s271
      %s272 = sphi 0, %s269
      %s273 = sphi 0, %s272
      %s289 = sphi 0, %s273
      %s295 = sphi 0, %s297
      %s298 = sphi 0, %s295
      %s299 = sphi 0, %s298
      %s315 = sphi 0, %s299
      %s321 = sphi 0, %s323
      %s324 = sphi 0, %s321
      %s325 = sphi 0, %s324
      %s341 = sphi 0, %s325
      %s347 = sphi 0, %s349
      %s350 = sphi 0, %s347
      %s351 = sphi 0, %s350
      %s367 = sphi 0, %s351
      %s373 = sphi 0, %s375
      %s376 = sphi 0, %s373
      %s377 = sphi 0, %s376
      %s393 = sphi 0, %s377
      %s399 = sphi 0, %s401
      %s402 = sphi 0, %s399
      %s403 = sphi 0, %s402
      %s419 = sphi 0, %s403
      %s425 = sphi 0, %s427
      %s428 = sphi 0, %s425
      %s429 = sphi 0, %s428
      %s445 = sphi 0, %s429
      %s451 = sphi 0, %s453
      %s454 = sphi 0, %s451
      %s455 = sphi 0, %s454
      %s471 = sphi 0, %s455
      %s477 = sphi 0, %s479
      %s480 = sphi 0, %s477
      %s481 = sphi 0, %s480
      %s497 = sphi 0, %s481
      %s503 = sphi 0, %s505
      %s506 = sphi 0, %s503
      %s507 = sphi 0, %s506
      %s523 = sphi 0, %s507
      %s529 = sphi 0, %s531
      %s532 = sphi 0, %s529
      %s533 = sphi 0, %s532
      %s549 = sphi 0, %s533
      %s555 = sphi 0, %s557
      %s558 = sphi 0, %s555
      %s559 = sphi 0, %s558
      %s575 = sphi 0, %s559
      %s581 = sphi 0, %s583
      %s584 = sphi 0, %s581
      %s585 = sphi 0, %s584
      %s601 = sphi 0, %s585
      %s607 = sphi 0, %s609
      %s610 = sphi 0, %s607
      %s611 = sphi 0, %s610
      %s627 = sphi 0, %s611
      %s633 = sphi 0, %s635
      %s636 = sphi 0, %s633
      %s637 = sphi 0, %s636
      %s653 = sphi 0, %s637
      %s659 = sphi 0, %s661
      %s662 = sphi 0, %s659
      %s663 = sphi 0, %s662
      %s679 = sphi 0, %s663
      %s685 = sphi 0, %s687
      %s688 = sphi 0, %s685
      %s689 = sphi 0, %s688
      %s705 = sphi 0, %s689
      %s711 = sphi 0, %s713
      %s714 = sphi 0, %s711
      %s715 = sphi 0, %s714
      %s731 = sphi 0, %s715
      %s737 = sphi 0, %s739
      %s740 = sphi 0, %s737
      %s741 = sphi 0, %s740
      %s757 = sphi 0, %s741
      %s763 = sphi 0, %s765
      %s766 = sphi 0, %s763
      %s767 = sphi 0, %s766
      %s783 = sphi 0, %s767
      %s789 = sphi 0, %s791
      %s792 = sphi 0, %s789
      %s793 = sphi 0, %s792
      %s809 = sphi 0, %s793
      %s815 = sphi 0, %s817
      %s818 = sphi 0, %s815
      %s819 = sphi 0, %s818
      %s835 = sphi 0, %s819
      %s839 = sphi 0, %s839
      %s841 = sphi 0, %s839
      %s842 = sphi 0, %s841
      %s856 = sphi 0, %s842
      %s860 = sphi 0, %s860
      %s862 = sphi 0, %s860
      %s863 = sphi 0, %s862
      %s877 = sphi 0, %s863
      %s885 = sphi 0, %s887
      %s888 = sphi 0, %s885
      %s889 = sphi 0, %s888
      %s905 = sphi 0, %s889
      %s913 = sphi 0, %s915
      %s916 = sphi 0, %s913
      %s917 = sphi 0, %s916
      %s933 = sphi 0, %s917
    $region4: #{tpu_custom_call.1} parent=1 // loop_header_branch
      %94 = sbr.rel (%p92) target = $region8
    $region5: #{tpu_custom_call.1} parent=1 // loop_body
      %s96 = ssub.s32 %s91, 1
      %s97 = ssub.s32 %s91, 2
      %s104 = sadd.s32 1, %s99
      %p105 = scmp.ge.s32.totalorder %s104, 2
      %s106 = scalar_select %p105, 0, %s104
      %s107 = sadd.s32 1, %s98
      %s108 = scalar_select %p105, %s107, %s98
      %p109 = scmp.ge.s32.totalorder %s108, 2
      %s110 = scalar_select %p109, 0, %s108
      %s111 = ssub.s32 %s98, %s110
      %p112 = scmp.eq.s32.totalorder %s111, 0
      %s114 = sadd.s32 %s113, 1
      %s115 = scalar_select %p112, %s113, %s114
      %p118 = pneg %p112
      %p119 = scmp.eq.s32.totalorder %s91, 3
      %p120 = por %p118, %p119
      %p121 = scmp.ne.s32.totalorder %s113, %s116
      %p122 = scmp.eq.s32.totalorder %s91, 0
      %p123 = por %p121, %p122
      %p124 = scmp.ne.s32.totalorder %s113, %s116
      %p125 = scmp.eq.s32.totalorder %s96, 3
      %p126 = por %p124, %p125
      %p127 = scmp.ne.s32.totalorder %s116, %s117
      %p128 = scmp.eq.s32.totalorder %s96, 0
      %p129 = por %p127, %p128
      %p130 = scmp.ne.s32.totalorder %s116, %s117
      %p131 = scmp.eq.s32.totalorder %s97, 3
      %p132 = por %p130, %p131
      %p134 = scmp.ne.s32.totalorder %s117, %s133
      %p135 = scmp.eq.s32.totalorder %s97, 0
      %p136 = por %p134, %p135
      %s137 = ssub.s32 %s98, %s110
      %p138 = scmp.eq.s32.totalorder %s137, 0
      %s140 = sadd.s32 %s139, 1
      %s141 = scalar_select %p138, %s139, %s140
      %p144 = pneg %p138
      %p145 = scmp.eq.s32.totalorder %s91, 3
      %p146 = por %p144, %p145
      %p147 = scmp.ne.s32.totalorder %s139, %s142
      %p148 = scmp.eq.s32.totalorder %s91, 0
      %p149 = por %p147, %p148
      %p150 = scmp.ne.s32.totalorder %s139, %s142
      %p151 = scmp.eq.s32.totalorder %s96, 3
      %p152 = por %p150, %p151
      %p153 = scmp.ne.s32.totalorder %s142, %s143
      %p154 = scmp.eq.s32.totalorder %s96, 0
      %p155 = por %p153, %p154
      %p156 = scmp.ne.s32.totalorder %s142, %s143
      %p157 = scmp.eq.s32.totalorder %s97, 3
      %p158 = por %p156, %p157
      %p160 = scmp.ne.s32.totalorder %s143, %s159
      %p161 = scmp.eq.s32.totalorder %s97, 0
      %p162 = por %p160, %p161
      %s163 = ssub.s32 %s98, %s110
      %p164 = scmp.eq.s32.totalorder %s163, 0
      %s166 = sadd.s32 %s165, 1
      %s167 = scalar_select %p164, %s165, %s166
      %p170 = pneg %p164
      %p171 = scmp.eq.s32.totalorder %s91, 3
      %p172 = por %p170, %p171
      %p173 = scmp.ne.s32.totalorder %s165, %s168
      %p174 = scmp.eq.s32.totalorder %s91, 0
      %p175 = por %p173, %p174
      %p176 = scmp.ne.s32.totalorder %s165, %s168
      %p177 = scmp.eq.s32.totalorder %s96, 3
      %p178 = por %p176, %p177
      %p179 = scmp.ne.s32.totalorder %s168, %s169
      %p180 = scmp.eq.s32.totalorder %s96, 0
      %p181 = por %p179, %p180
      %p182 = scmp.ne.s32.totalorder %s168, %s169
      %p183 = scmp.eq.s32.totalorder %s97, 3
      %p184 = por %p182, %p183
      %p186 = scmp.ne.s32.totalorder %s169, %s185
      %p187 = scmp.eq.s32.totalorder %s97, 0
      %p188 = por %p186, %p187
      %s189 = ssub.s32 %s98, %s110
      %p190 = scmp.eq.s32.totalorder %s189, 0
      %s192 = sadd.s32 %s191, 1
      %s193 = scalar_select %p190, %s191, %s192
      %p196 = pneg %p190
      %p197 = scmp.eq.s32.totalorder %s91, 3
      %p198 = por %p196, %p197
      %p199 = scmp.ne.s32.totalorder %s191, %s194
      %p200 = scmp.eq.s32.totalorder %s91, 0
      %p201 = por %p199, %p200
      %p202 = scmp.ne.s32.totalorder %s191, %s194
      %p203 = scmp.eq.s32.totalorder %s96, 3
      %p204 = por %p202, %p203
      %p205 = scmp.ne.s32.totalorder %s194, %s195
      %p206 = scmp.eq.s32.totalorder %s96, 0
      %p207 = por %p205, %p206
      %p208 = scmp.ne.s32.totalorder %s194, %s195
      %p209 = scmp.eq.s32.totalorder %s97, 3
      %p210 = por %p208, %p209
      %p212 = scmp.ne.s32.totalorder %s195, %s211
      %p213 = scmp.eq.s32.totalorder %s97, 0
      %p214 = por %p212, %p213
      %s215 = ssub.s32 %s99, %s106
      %p216 = scmp.eq.s32.totalorder %s215, 0
      %s218 = sadd.s32 %s217, 1
      %s219 = scalar_select %p216, %s217, %s218
      %p222 = pneg %p216
      %p223 = scmp.eq.s32.totalorder %s91, 3
      %p224 = por %p222, %p223
      %p225 = scmp.ne.s32.totalorder %s217, %s220
      %p226 = scmp.eq.s32.totalorder %s91, 0
      %p227 = por %p225, %p226
      %p228 = scmp.ne.s32.totalorder %s217, %s220
      %p229 = scmp.eq.s32.totalorder %s96, 3
      %p230 = por %p228, %p229
      %p231 = scmp.ne.s32.totalorder %s220, %s221
      %p232 = scmp.eq.s32.totalorder %s96, 0
      %p233 = por %p231, %p232
      %p234 = scmp.ne.s32.totalorder %s220, %s221
      %p235 = scmp.eq.s32.totalorder %s97, 3
      %p236 = por %p234, %p235
      %p238 = scmp.ne.s32.totalorder %s221, %s237
      %p239 = scmp.eq.s32.totalorder %s97, 0
      %p240 = por %p238, %p239
      %s241 = ssub.s32 %s99, %s106
      %p242 = scmp.eq.s32.totalorder %s241, 0
      %s244 = sadd.s32 %s243, 1
      %s245 = scalar_select %p242, %s243, %s244
      %p248 = pneg %p242
      %p249 = scmp.eq.s32.totalorder %s91, 3
      %p250 = por %p248, %p249
      %p251 = scmp.ne.s32.totalorder %s243, %s246
      %p252 = scmp.eq.s32.totalorder %s91, 0
      %p253 = por %p251, %p252
      %p254 = scmp.ne.s32.totalorder %s243, %s246
      %p255 = scmp.eq.s32.totalorder %s96, 3
      %p256 = por %p254, %p255
      %p257 = scmp.ne.s32.totalorder %s246, %s247
      %p258 = scmp.eq.s32.totalorder %s96, 0
      %p259 = por %p257, %p258
      %p260 = scmp.ne.s32.totalorder %s246, %s247
      %p261 = scmp.eq.s32.totalorder %s97, 3
      %p262 = por %p260, %p261
      %p264 = scmp.ne.s32.totalorder %s247, %s263
      %p265 = scmp.eq.s32.totalorder %s97, 0
      %p266 = por %p264, %p265
      %s267 = ssub.s32 %s99, %s106
      %p268 = scmp.eq.s32.totalorder %s267, 0
      %s270 = sadd.s32 %s269, 1
      %s271 = scalar_select %p268, %s269, %s270
      %p274 = pneg %p268
      %p275 = scmp.eq.s32.totalorder %s91, 3
      %p276 = por %p274, %p275
      %p277 = scmp.ne.s32.totalorder %s269, %s272
      %p278 = scmp.eq.s32.totalorder %s91, 0
      %p279 = por %p277, %p278
      %p280 = scmp.ne.s32.totalorder %s269, %s272
      %p281 = scmp.eq.s32.totalorder %s96, 3
      %p282 = por %p280, %p281
      %p283 = scmp.ne.s32.totalorder %s272, %s273
      %p284 = scmp.eq.s32.totalorder %s96, 0
      %p285 = por %p283, %p284
      %p286 = scmp.ne.s32.totalorder %s272, %s273
      %p287 = scmp.eq.s32.totalorder %s97, 3
      %p288 = por %p286, %p287
      %p290 = scmp.ne.s32.totalorder %s273, %s289
      %p291 = scmp.eq.s32.totalorder %s97, 0
      %p292 = por %p290, %p291
      %s293 = ssub.s32 %s99, %s106
      %p294 = scmp.eq.s32.totalorder %s293, 0
      %s296 = sadd.s32 %s295, 1
      %s297 = scalar_select %p294, %s295, %s296
      %p300 = pneg %p294
      %p301 = scmp.eq.s32.totalorder %s91, 3
      %p302 = por %p300, %p301
      %p303 = scmp.ne.s32.totalorder %s295, %s298
      %p304 = scmp.eq.s32.totalorder %s91, 0
      %p305 = por %p303, %p304
      %p306 = scmp.ne.s32.totalorder %s295, %s298
      %p307 = scmp.eq.s32.totalorder %s96, 3
      %p308 = por %p306, %p307
      %p309 = scmp.ne.s32.totalorder %s298, %s299
      %p310 = scmp.eq.s32.totalorder %s96, 0
      %p311 = por %p309, %p310
      %p312 = scmp.ne.s32.totalorder %s298, %s299
      %p313 = scmp.eq.s32.totalorder %s97, 3
      %p314 = por %p312, %p313
      %p316 = scmp.ne.s32.totalorder %s299, %s315
      %p317 = scmp.eq.s32.totalorder %s97, 0
      %p318 = por %p316, %p317
      %s319 = ssub.s32 %s99, %s106
      %p320 = scmp.eq.s32.totalorder %s319, 0
      %s322 = sadd.s32 %s321, 1
      %s323 = scalar_select %p320, %s321, %s322
      %p326 = pneg %p320
      %p327 = scmp.eq.s32.totalorder %s91, 3
      %p328 = por %p326, %p327
      %p329 = scmp.ne.s32.totalorder %s321, %s324
      %p330 = scmp.eq.s32.totalorder %s91, 0
      %p331 = por %p329, %p330
      %p332 = scmp.ne.s32.totalorder %s321, %s324
      %p333 = scmp.eq.s32.totalorder %s96, 3
      %p334 = por %p332, %p333
      %p335 = scmp.ne.s32.totalorder %s324, %s325
      %p336 = scmp.eq.s32.totalorder %s96, 0
      %p337 = por %p335, %p336
      %p338 = scmp.ne.s32.totalorder %s324, %s325
      %p339 = scmp.eq.s32.totalorder %s97, 3
      %p340 = por %p338, %p339
      %p342 = scmp.ne.s32.totalorder %s325, %s341
      %p343 = scmp.eq.s32.totalorder %s97, 0
      %p344 = por %p342, %p343
      %s345 = ssub.s32 %s99, %s106
      %p346 = scmp.eq.s32.totalorder %s345, 0
      %s348 = sadd.s32 %s347, 1
      %s349 = scalar_select %p346, %s347, %s348
      %p352 = pneg %p346
      %p353 = scmp.eq.s32.totalorder %s91, 3
      %p354 = por %p352, %p353
      %p355 = scmp.ne.s32.totalorder %s347, %s350
      %p356 = scmp.eq.s32.totalorder %s91, 0
      %p357 = por %p355, %p356
      %p358 = scmp.ne.s32.totalorder %s347, %s350
      %p359 = scmp.eq.s32.totalorder %s96, 3
      %p360 = por %p358, %p359
      %p361 = scmp.ne.s32.totalorder %s350, %s351
      %p362 = scmp.eq.s32.totalorder %s96, 0
      %p363 = por %p361, %p362
      %p364 = scmp.ne.s32.totalorder %s350, %s351
      %p365 = scmp.eq.s32.totalorder %s97, 3
      %p366 = por %p364, %p365
      %p368 = scmp.ne.s32.totalorder %s351, %s367
      %p369 = scmp.eq.s32.totalorder %s97, 0
      %p370 = por %p368, %p369
      %s371 = ssub.s32 %s99, %s106
      %p372 = scmp.eq.s32.totalorder %s371, 0
      %s374 = sadd.s32 %s373, 1
      %s375 = scalar_select %p372, %s373, %s374
      %p378 = pneg %p372
      %p379 = scmp.eq.s32.totalorder %s91, 3
      %p380 = por %p378, %p379
      %p381 = scmp.ne.s32.totalorder %s373, %s376
      %p382 = scmp.eq.s32.totalorder %s91, 0
      %p383 = por %p381, %p382
      %p384 = scmp.ne.s32.totalorder %s373, %s376
      %p385 = scmp.eq.s32.totalorder %s96, 3
      %p386 = por %p384, %p385
      %p387 = scmp.ne.s32.totalorder %s376, %s377
      %p388 = scmp.eq.s32.totalorder %s96, 0
      %p389 = por %p387, %p388
      %p390 = scmp.ne.s32.totalorder %s376, %s377
      %p391 = scmp.eq.s32.totalorder %s97, 3
      %p392 = por %p390, %p391
      %p394 = scmp.ne.s32.totalorder %s377, %s393
      %p395 = scmp.eq.s32.totalorder %s97, 0
      %p396 = por %p394, %p395
      %s397 = ssub.s32 %s99, %s106
      %p398 = scmp.eq.s32.totalorder %s397, 0
      %s400 = sadd.s32 %s399, 1
      %s401 = scalar_select %p398, %s399, %s400
      %p404 = pneg %p398
      %p405 = scmp.eq.s32.totalorder %s91, 3
      %p406 = por %p404, %p405
      %p407 = scmp.ne.s32.totalorder %s399, %s402
      %p408 = scmp.eq.s32.totalorder %s91, 0
      %p409 = por %p407, %p408
      %p410 = scmp.ne.s32.totalorder %s399, %s402
      %p411 = scmp.eq.s32.totalorder %s96, 3
      %p412 = por %p410, %p411
      %p413 = scmp.ne.s32.totalorder %s402, %s403
      %p414 = scmp.eq.s32.totalorder %s96, 0
      %p415 = por %p413, %p414
      %p416 = scmp.ne.s32.totalorder %s402, %s403
      %p417 = scmp.eq.s32.totalorder %s97, 3
      %p418 = por %p416, %p417
      %p420 = scmp.ne.s32.totalorder %s403, %s419
      %p421 = scmp.eq.s32.totalorder %s97, 0
      %p422 = por %p420, %p421
      %s423 = ssub.s32 %s99, %s106
      %p424 = scmp.eq.s32.totalorder %s423, 0
      %s426 = sadd.s32 %s425, 1
      %s427 = scalar_select %p424, %s425, %s426
      %p430 = pneg %p424
      %p431 = scmp.eq.s32.totalorder %s91, 3
      %p432 = por %p430, %p431
      %p433 = scmp.ne.s32.totalorder %s425, %s428
      %p434 = scmp.eq.s32.totalorder %s91, 0
      %p435 = por %p433, %p434
      %p436 = scmp.ne.s32.totalorder %s425, %s428
      %p437 = scmp.eq.s32.totalorder %s96, 3
      %p438 = por %p436, %p437
      %p439 = scmp.ne.s32.totalorder %s428, %s429
      %p440 = scmp.eq.s32.totalorder %s96, 0
      %p441 = por %p439, %p440
      %p442 = scmp.ne.s32.totalorder %s428, %s429
      %p443 = scmp.eq.s32.totalorder %s97, 3
      %p444 = por %p442, %p443
      %p446 = scmp.ne.s32.totalorder %s429, %s445
      %p447 = scmp.eq.s32.totalorder %s97, 0
      %p448 = por %p446, %p447
      %s449 = ssub.s32 %s99, %s106
      %p450 = scmp.eq.s32.totalorder %s449, 0
      %s452 = sadd.s32 %s451, 1
      %s453 = scalar_select %p450, %s451, %s452
      %p456 = pneg %p450
      %p457 = scmp.eq.s32.totalorder %s91, 3
      %p458 = por %p456, %p457
      %p459 = scmp.ne.s32.totalorder %s451, %s454
      %p460 = scmp.eq.s32.totalorder %s91, 0
      %p461 = por %p459, %p460
      %p462 = scmp.ne.s32.totalorder %s451, %s454
      %p463 = scmp.eq.s32.totalorder %s96, 3
      %p464 = por %p462, %p463
      %p465 = scmp.ne.s32.totalorder %s454, %s455
      %p466 = scmp.eq.s32.totalorder %s96, 0
      %p467 = por %p465, %p466
      %p468 = scmp.ne.s32.totalorder %s454, %s455
      %p469 = scmp.eq.s32.totalorder %s97, 3
      %p470 = por %p468, %p469
      %p472 = scmp.ne.s32.totalorder %s455, %s471
      %p473 = scmp.eq.s32.totalorder %s97, 0
      %p474 = por %p472, %p473
      %s475 = ssub.s32 %s99, %s106
      %p476 = scmp.eq.s32.totalorder %s475, 0
      %s478 = sadd.s32 %s477, 1
      %s479 = scalar_select %p476, %s477, %s478
      %p482 = pneg %p476
      %p483 = scmp.eq.s32.totalorder %s91, 3
      %p484 = por %p482, %p483
      %p485 = scmp.ne.s32.totalorder %s477, %s480
      %p486 = scmp.eq.s32.totalorder %s91, 0
      %p487 = por %p485, %p486
      %p488 = scmp.ne.s32.totalorder %s477, %s480
      %p489 = scmp.eq.s32.totalorder %s96, 3
      %p490 = por %p488, %p489
      %p491 = scmp.ne.s32.totalorder %s480, %s481
      %p492 = scmp.eq.s32.totalorder %s96, 0
      %p493 = por %p491, %p492
      %p494 = scmp.ne.s32.totalorder %s480, %s481
      %p495 = scmp.eq.s32.totalorder %s97, 3
      %p496 = por %p494, %p495
      %p498 = scmp.ne.s32.totalorder %s481, %s497
      %p499 = scmp.eq.s32.totalorder %s97, 0
      %p500 = por %p498, %p499
      %s501 = ssub.s32 %s99, %s106
      %p502 = scmp.eq.s32.totalorder %s501, 0
      %s504 = sadd.s32 %s503, 1
      %s505 = scalar_select %p502, %s503, %s504
      %p508 = pneg %p502
      %p509 = scmp.eq.s32.totalorder %s91, 3
      %p510 = por %p508, %p509
      %p511 = scmp.ne.s32.totalorder %s503, %s506
      %p512 = scmp.eq.s32.totalorder %s91, 0
      %p513 = por %p511, %p512
      %p514 = scmp.ne.s32.totalorder %s503, %s506
      %p515 = scmp.eq.s32.totalorder %s96, 3
      %p516 = por %p514, %p515
      %p517 = scmp.ne.s32.totalorder %s506, %s507
      %p518 = scmp.eq.s32.totalorder %s96, 0
      %p519 = por %p517, %p518
      %p520 = scmp.ne.s32.totalorder %s506, %s507
      %p521 = scmp.eq.s32.totalorder %s97, 3
      %p522 = por %p520, %p521
      %p524 = scmp.ne.s32.totalorder %s507, %s523
      %p525 = scmp.eq.s32.totalorder %s97, 0
      %p526 = por %p524, %p525
      %s527 = ssub.s32 %s99, %s106
      %p528 = scmp.eq.s32.totalorder %s527, 0
      %s530 = sadd.s32 %s529, 1
      %s531 = scalar_select %p528, %s529, %s530
      %p534 = pneg %p528
      %p535 = scmp.eq.s32.totalorder %s91, 3
      %p536 = por %p534, %p535
      %p537 = scmp.ne.s32.totalorder %s529, %s532
      %p538 = scmp.eq.s32.totalorder %s91, 0
      %p539 = por %p537, %p538
      %p540 = scmp.ne.s32.totalorder %s529, %s532
      %p541 = scmp.eq.s32.totalorder %s96, 3
      %p542 = por %p540, %p541
      %p543 = scmp.ne.s32.totalorder %s532, %s533
      %p544 = scmp.eq.s32.totalorder %s96, 0
      %p545 = por %p543, %p544
      %p546 = scmp.ne.s32.totalorder %s532, %s533
      %p547 = scmp.eq.s32.totalorder %s97, 3
      %p548 = por %p546, %p547
      %p550 = scmp.ne.s32.totalorder %s533, %s549
      %p551 = scmp.eq.s32.totalorder %s97, 0
      %p552 = por %p550, %p551
      %s553 = ssub.s32 %s99, %s106
      %p554 = scmp.eq.s32.totalorder %s553, 0
      %s556 = sadd.s32 %s555, 1
      %s557 = scalar_select %p554, %s555, %s556
      %p560 = pneg %p554
      %p561 = scmp.eq.s32.totalorder %s91, 3
      %p562 = por %p560, %p561
      %p563 = scmp.ne.s32.totalorder %s555, %s558
      %p564 = scmp.eq.s32.totalorder %s91, 0
      %p565 = por %p563, %p564
      %p566 = scmp.ne.s32.totalorder %s555, %s558
      %p567 = scmp.eq.s32.totalorder %s96, 3
      %p568 = por %p566, %p567
      %p569 = scmp.ne.s32.totalorder %s558, %s559
      %p570 = scmp.eq.s32.totalorder %s96, 0
      %p571 = por %p569, %p570
      %p572 = scmp.ne.s32.totalorder %s558, %s559
      %p573 = scmp.eq.s32.totalorder %s97, 3
      %p574 = por %p572, %p573
      %p576 = scmp.ne.s32.totalorder %s559, %s575
      %p577 = scmp.eq.s32.totalorder %s97, 0
      %p578 = por %p576, %p577
      %s579 = ssub.s32 %s99, %s106
      %p580 = scmp.eq.s32.totalorder %s579, 0
      %s582 = sadd.s32 %s581, 1
      %s583 = scalar_select %p580, %s581, %s582
      %p586 = pneg %p580
      %p587 = scmp.eq.s32.totalorder %s91, 3
      %p588 = por %p586, %p587
      %p589 = scmp.ne.s32.totalorder %s581, %s584
      %p590 = scmp.eq.s32.totalorder %s91, 0
      %p591 = por %p589, %p590
      %p592 = scmp.ne.s32.totalorder %s581, %s584
      %p593 = scmp.eq.s32.totalorder %s96, 3
      %p594 = por %p592, %p593
      %p595 = scmp.ne.s32.totalorder %s584, %s585
      %p596 = scmp.eq.s32.totalorder %s96, 0
      %p597 = por %p595, %p596
      %p598 = scmp.ne.s32.totalorder %s584, %s585
      %p599 = scmp.eq.s32.totalorder %s97, 3
      %p600 = por %p598, %p599
      %p602 = scmp.ne.s32.totalorder %s585, %s601
      %p603 = scmp.eq.s32.totalorder %s97, 0
      %p604 = por %p602, %p603
      %s605 = ssub.s32 %s99, %s106
      %p606 = scmp.eq.s32.totalorder %s605, 0
      %s608 = sadd.s32 %s607, 1
      %s609 = scalar_select %p606, %s607, %s608
      %p612 = pneg %p606
      %p613 = scmp.eq.s32.totalorder %s91, 3
      %p614 = por %p612, %p613
      %p615 = scmp.ne.s32.totalorder %s607, %s610
      %p616 = scmp.eq.s32.totalorder %s91, 0
      %p617 = por %p615, %p616
      %p618 = scmp.ne.s32.totalorder %s607, %s610
      %p619 = scmp.eq.s32.totalorder %s96, 3
      %p620 = por %p618, %p619
      %p621 = scmp.ne.s32.totalorder %s610, %s611
      %p622 = scmp.eq.s32.totalorder %s96, 0
      %p623 = por %p621, %p622
      %p624 = scmp.ne.s32.totalorder %s610, %s611
      %p625 = scmp.eq.s32.totalorder %s97, 3
      %p626 = por %p624, %p625
      %p628 = scmp.ne.s32.totalorder %s611, %s627
      %p629 = scmp.eq.s32.totalorder %s97, 0
      %p630 = por %p628, %p629
      %s631 = ssub.s32 %s99, %s106
      %p632 = scmp.eq.s32.totalorder %s631, 0
      %s634 = sadd.s32 %s633, 1
      %s635 = scalar_select %p632, %s633, %s634
      %p638 = pneg %p632
      %p639 = scmp.eq.s32.totalorder %s91, 3
      %p640 = por %p638, %p639
      %p641 = scmp.ne.s32.totalorder %s633, %s636
      %p642 = scmp.eq.s32.totalorder %s91, 0
      %p643 = por %p641, %p642
      %p644 = scmp.ne.s32.totalorder %s633, %s636
      %p645 = scmp.eq.s32.totalorder %s96, 3
      %p646 = por %p644, %p645
      %p647 = scmp.ne.s32.totalorder %s636, %s637
      %p648 = scmp.eq.s32.totalorder %s96, 0
      %p649 = por %p647, %p648
      %p650 = scmp.ne.s32.totalorder %s636, %s637
      %p651 = scmp.eq.s32.totalorder %s97, 3
      %p652 = por %p650, %p651
      %p654 = scmp.ne.s32.totalorder %s637, %s653
      %p655 = scmp.eq.s32.totalorder %s97, 0
      %p656 = por %p654, %p655
      %s657 = ssub.s32 %s99, %s106
      %p658 = scmp.eq.s32.totalorder %s657, 0
      %s660 = sadd.s32 %s659, 1
      %s661 = scalar_select %p658, %s659, %s660
      %p664 = pneg %p658
      %p665 = scmp.eq.s32.totalorder %s91, 3
      %p666 = por %p664, %p665
      %p667 = scmp.ne.s32.totalorder %s659, %s662
      %p668 = scmp.eq.s32.totalorder %s91, 0
      %p669 = por %p667, %p668
      %p670 = scmp.ne.s32.totalorder %s659, %s662
      %p671 = scmp.eq.s32.totalorder %s96, 3
      %p672 = por %p670, %p671
      %p673 = scmp.ne.s32.totalorder %s662, %s663
      %p674 = scmp.eq.s32.totalorder %s96, 0
      %p675 = por %p673, %p674
      %p676 = scmp.ne.s32.totalorder %s662, %s663
      %p677 = scmp.eq.s32.totalorder %s97, 3
      %p678 = por %p676, %p677
      %p680 = scmp.ne.s32.totalorder %s663, %s679
      %p681 = scmp.eq.s32.totalorder %s97, 0
      %p682 = por %p680, %p681
      %s683 = ssub.s32 %s99, %s106
      %p684 = scmp.eq.s32.totalorder %s683, 0
      %s686 = sadd.s32 %s685, 1
      %s687 = scalar_select %p684, %s685, %s686
      %p690 = pneg %p684
      %p691 = scmp.eq.s32.totalorder %s91, 3
      %p692 = por %p690, %p691
      %p693 = scmp.ne.s32.totalorder %s685, %s688
      %p694 = scmp.eq.s32.totalorder %s91, 0
      %p695 = por %p693, %p694
      %p696 = scmp.ne.s32.totalorder %s685, %s688
      %p697 = scmp.eq.s32.totalorder %s96, 3
      %p698 = por %p696, %p697
      %p699 = scmp.ne.s32.totalorder %s688, %s689
      %p700 = scmp.eq.s32.totalorder %s96, 0
      %p701 = por %p699, %p700
      %p702 = scmp.ne.s32.totalorder %s688, %s689
      %p703 = scmp.eq.s32.totalorder %s97, 3
      %p704 = por %p702, %p703
      %p706 = scmp.ne.s32.totalorder %s689, %s705
      %p707 = scmp.eq.s32.totalorder %s97, 0
      %p708 = por %p706, %p707
      %s709 = ssub.s32 %s99, %s106
      %p710 = scmp.eq.s32.totalorder %s709, 0
      %s712 = sadd.s32 %s711, 1
      %s713 = scalar_select %p710, %s711, %s712
      %p716 = pneg %p710
      %p717 = scmp.eq.s32.totalorder %s91, 3
      %p718 = por %p716, %p717
      %p719 = scmp.ne.s32.totalorder %s711, %s714
      %p720 = scmp.eq.s32.totalorder %s91, 0
      %p721 = por %p719, %p720
      %p722 = scmp.ne.s32.totalorder %s711, %s714
      %p723 = scmp.eq.s32.totalorder %s96, 3
      %p724 = por %p722, %p723
      %p725 = scmp.ne.s32.totalorder %s714, %s715
      %p726 = scmp.eq.s32.totalorder %s96, 0
      %p727 = por %p725, %p726
      %p728 = scmp.ne.s32.totalorder %s714, %s715
      %p729 = scmp.eq.s32.totalorder %s97, 3
      %p730 = por %p728, %p729
      %p732 = scmp.ne.s32.totalorder %s715, %s731
      %p733 = scmp.eq.s32.totalorder %s97, 0
      %p734 = por %p732, %p733
      %s735 = ssub.s32 %s99, %s106
      %p736 = scmp.eq.s32.totalorder %s735, 0
      %s738 = sadd.s32 %s737, 1
      %s739 = scalar_select %p736, %s737, %s738
      %p742 = pneg %p736
      %p743 = scmp.eq.s32.totalorder %s91, 3
      %p744 = por %p742, %p743
      %p745 = scmp.ne.s32.totalorder %s737, %s740
      %p746 = scmp.eq.s32.totalorder %s91, 0
      %p747 = por %p745, %p746
      %p748 = scmp.ne.s32.totalorder %s737, %s740
      %p749 = scmp.eq.s32.totalorder %s96, 3
      %p750 = por %p748, %p749
      %p751 = scmp.ne.s32.totalorder %s740, %s741
      %p752 = scmp.eq.s32.totalorder %s96, 0
      %p753 = por %p751, %p752
      %p754 = scmp.ne.s32.totalorder %s740, %s741
      %p755 = scmp.eq.s32.totalorder %s97, 3
      %p756 = por %p754, %p755
      %p758 = scmp.ne.s32.totalorder %s741, %s757
      %p759 = scmp.eq.s32.totalorder %s97, 0
      %p760 = por %p758, %p759
      %s761 = ssub.s32 %s99, %s106
      %p762 = scmp.eq.s32.totalorder %s761, 0
      %s764 = sadd.s32 %s763, 1
      %s765 = scalar_select %p762, %s763, %s764
      %p768 = pneg %p762
      %p769 = scmp.eq.s32.totalorder %s91, 3
      %p770 = por %p768, %p769
      %p771 = scmp.ne.s32.totalorder %s763, %s766
      %p772 = scmp.eq.s32.totalorder %s91, 0
      %p773 = por %p771, %p772
      %p774 = scmp.ne.s32.totalorder %s763, %s766
      %p775 = scmp.eq.s32.totalorder %s96, 3
      %p776 = por %p774, %p775
      %p777 = scmp.ne.s32.totalorder %s766, %s767
      %p778 = scmp.eq.s32.totalorder %s96, 0
      %p779 = por %p777, %p778
      %p780 = scmp.ne.s32.totalorder %s766, %s767
      %p781 = scmp.eq.s32.totalorder %s97, 3
      %p782 = por %p780, %p781
      %p784 = scmp.ne.s32.totalorder %s767, %s783
      %p785 = scmp.eq.s32.totalorder %s97, 0
      %p786 = por %p784, %p785
      %s787 = ssub.s32 %s99, %s106
      %p788 = scmp.eq.s32.totalorder %s787, 0
      %s790 = sadd.s32 %s789, 1
      %s791 = scalar_select %p788, %s789, %s790
      %p794 = pneg %p788
      %p795 = scmp.eq.s32.totalorder %s91, 3
      %p796 = por %p794, %p795
      %p797 = scmp.ne.s32.totalorder %s789, %s792
      %p798 = scmp.eq.s32.totalorder %s91, 0
      %p799 = por %p797, %p798
      %p800 = scmp.ne.s32.totalorder %s789, %s792
      %p801 = scmp.eq.s32.totalorder %s96, 3
      %p802 = por %p800, %p801
      %p803 = scmp.ne.s32.totalorder %s792, %s793
      %p804 = scmp.eq.s32.totalorder %s96, 0
      %p805 = por %p803, %p804
      %p806 = scmp.ne.s32.totalorder %s792, %s793
      %p807 = scmp.eq.s32.totalorder %s97, 3
      %p808 = por %p806, %p807
      %p810 = scmp.ne.s32.totalorder %s793, %s809
      %p811 = scmp.eq.s32.totalorder %s97, 0
      %p812 = por %p810, %p811
      %s813 = ssub.s32 %s99, %s106
      %p814 = scmp.eq.s32.totalorder %s813, 0
      %s816 = sadd.s32 %s815, 1
      %s817 = scalar_select %p814, %s815, %s816
      %p820 = pneg %p814
      %p821 = scmp.eq.s32.totalorder %s91, 3
      %p822 = por %p820, %p821
      %p823 = scmp.ne.s32.totalorder %s815, %s818
      %p824 = scmp.eq.s32.totalorder %s91, 0
      %p825 = por %p823, %p824
      %p826 = scmp.ne.s32.totalorder %s815, %s818
      %p827 = scmp.eq.s32.totalorder %s96, 3
      %p828 = por %p826, %p827
      %p829 = scmp.ne.s32.totalorder %s818, %s819
      %p830 = scmp.eq.s32.totalorder %s96, 0
      %p831 = por %p829, %p830
      %p832 = scmp.ne.s32.totalorder %s818, %s819
      %p833 = scmp.eq.s32.totalorder %s97, 3
      %p834 = por %p832, %p833
      %p836 = scmp.ne.s32.totalorder %s819, %s835
      %p837 = scmp.eq.s32.totalorder %s97, 0
      %p838 = por %p836, %p837
      %s840 = sadd.s32 %s839, 1
      %p843 = scmp.eq.s32.totalorder %s91, 3
      %p844 = scmp.ne.s32.totalorder %s839, %s841
      %p845 = scmp.eq.s32.totalorder %s91, 0
      %p846 = por %p844, %p845
      %p847 = scmp.ne.s32.totalorder %s839, %s841
      %p848 = scmp.eq.s32.totalorder %s96, 3
      %p849 = por %p847, %p848
      %p850 = scmp.ne.s32.totalorder %s841, %s842
      %p851 = scmp.eq.s32.totalorder %s96, 0
      %p852 = por %p850, %p851
      %p853 = scmp.ne.s32.totalorder %s841, %s842
      %p854 = scmp.eq.s32.totalorder %s97, 3
      %p855 = por %p853, %p854
      %p857 = scmp.ne.s32.totalorder %s842, %s856
      %p858 = scmp.eq.s32.totalorder %s97, 0
      %p859 = por %p857, %p858
      %s861 = sadd.s32 %s860, 1
      %p864 = scmp.eq.s32.totalorder %s91, 3
      %p865 = scmp.ne.s32.totalorder %s860, %s862
      %p866 = scmp.eq.s32.totalorder %s91, 0
      %p867 = por %p865, %p866
      %p868 = scmp.ne.s32.totalorder %s860, %s862
      %p869 = scmp.eq.s32.totalorder %s96, 3
      %p870 = por %p868, %p869
      %p871 = scmp.ne.s32.totalorder %s862, %s863
      %p872 = scmp.eq.s32.totalorder %s96, 0
      %p873 = por %p871, %p872
      %p874 = scmp.ne.s32.totalorder %s862, %s863
      %p875 = scmp.eq.s32.totalorder %s97, 3
      %p876 = por %p874, %p875
      %p878 = scmp.ne.s32.totalorder %s863, %s877
      %p879 = scmp.eq.s32.totalorder %s97, 0
      %p880 = por %p878, %p879
      %s881 = ssub.s32 %s99, %s106
      %s882 = ssub.s32 %s98, %s110
      %s883 = sor.u32 %s881, %s882
      %p884 = scmp.eq.s32.totalorder %s883, 0
      %s886 = sadd.s32 %s885, 1
      %s887 = scalar_select %p884, %s885, %s886
      %p890 = pneg %p884
      %p891 = scmp.eq.s32.totalorder %s91, 3
      %p892 = por %p890, %p891
      %p893 = scmp.ne.s32.totalorder %s885, %s888
      %p894 = scmp.eq.s32.totalorder %s91, 0
      %p895 = por %p893, %p894
      %p896 = scmp.ne.s32.totalorder %s885, %s888
      %p897 = scmp.eq.s32.totalorder %s96, 3
      %p898 = por %p896, %p897
      %p899 = scmp.ne.s32.totalorder %s888, %s889
      %p900 = scmp.eq.s32.totalorder %s96, 0
      %p901 = por %p899, %p900
      %p902 = scmp.ne.s32.totalorder %s888, %s889
      %p903 = scmp.eq.s32.totalorder %s97, 3
      %p904 = por %p902, %p903
      %p906 = scmp.ne.s32.totalorder %s889, %s905
      %p907 = scmp.eq.s32.totalorder %s97, 0
      %p908 = por %p906, %p907
      %s909 = ssub.s32 %s99, %s106
      %s910 = ssub.s32 %s98, %s110
      %s911 = sor.u32 %s909, %s910
      %p912 = scmp.eq.s32.totalorder %s911, 0
      %s914 = sadd.s32 %s913, 1
      %s915 = scalar_select %p912, %s913, %s914
      %p918 = pneg %p912
      %p919 = scmp.eq.s32.totalorder %s91, 3
      %p920 = por %p918, %p919
      %p921 = scmp.ne.s32.totalorder %s913, %s916
      %p922 = scmp.eq.s32.totalorder %s91, 0
      %p923 = por %p921, %p922
      %p924 = scmp.ne.s32.totalorder %s913, %s916
      %p925 = scmp.eq.s32.totalorder %s96, 3
      %p926 = por %p924, %p925
      %p927 = scmp.ne.s32.totalorder %s916, %s917
      %p928 = scmp.eq.s32.totalorder %s96, 0
      %p929 = por %p927, %p928
      %p930 = scmp.ne.s32.totalorder %s916, %s917
      %p931 = scmp.eq.s32.totalorder %s97, 3
      %p932 = por %p930, %p931
      %p934 = scmp.ne.s32.totalorder %s917, %s933
      %p935 = scmp.eq.s32.totalorder %s97, 0
      %p936 = por %p934, %p935
      %p937 = scmp.le.s32.totalorder 1, %s91
      %p938 = scmp.lt.s32.totalorder %s91, 5
      %p939 = pnand %p937, %p938
      %p940 = pneg %p939
      // Predicated region
      $region9: #{tpu_custom_call.1} parent=5 // pred_check
        _
      $region10: #{tpu_custom_call.1} parent=5 // pred_check_branch
        %942 = sbr.rel (%p939) target = $region12
      $region11: #{tpu_custom_call.1} parent=5 // pred_region
        %s943 = ssub.s32 %s91, 1
        // Predicated region
        $region13: #{tpu_custom_call.1} parent=11 // pred_check
          %p944 = pneg %p852
        $region14: #{tpu_custom_call.1} parent=11 // pred_check_branch
          %946 = sbr.rel (%p944) target = $region16
        $region15: #{tpu_custom_call.1} parent=11 // pred_region
          _
        $region16: #{tpu_custom_call.1} parent=11 // pred_fallthru
          _
        // Predicated region
        $region17: #{tpu_custom_call.1} parent=11 // pred_check
          %p947 = pneg %p873
        $region18: #{tpu_custom_call.1} parent=11 // pred_check_branch
          %949 = sbr.rel (%p947) target = $region20
        $region19: #{tpu_custom_call.1} parent=11 // pred_region
          _
        $region20: #{tpu_custom_call.1} parent=11 // pred_fallthru
          _
      $region12: #{tpu_custom_call.1} parent=5 // pred_fallthru
        _
      %p950 = scmp.lt.s32.totalorder %s91, 4
      // Predicated region
      $region21: #{tpu_custom_call.1} parent=5 // pred_check
        %p951 = pneg %p950
      $region22: #{tpu_custom_call.1} parent=5 // pred_check_branch
        %953 = sbr.rel (%p951) target = $region24
      $region23: #{tpu_custom_call.1} parent=5 // pred_region
        // Predicated region
        $region25: #{tpu_custom_call.1} parent=23 // pred_check
          %p954 = pneg %p123
        $region26: #{tpu_custom_call.1} parent=23 // pred_check_branch
          %956 = sbr.rel (%p954) target = $region28
        $region27: #{tpu_custom_call.1} parent=23 // pred_region
          %s957 = sand.u32 %s113, 1
          %s958 = scalar_lea.sflag [#allocation4], %s957
          %s959 = sand.u32 %s113, 1
          %s960 = smul.addr %s959, 8
          %s961 = scalar_lea.vmem [#allocation3], %s960
          %s963 = ssub.s32 128, 128
          %964 = vsyncadd %s958, %s963
          %s965 = smul.addr %s98, 128
          %s966 = scalar_lea.hbm %s1, %s965
          %s968 = sshll.u32 %s961, 4
          %s969 = int_to_ptr.vmem [resolvable:$true] %s968
          %971 = dma.hbm_to_vmem [thread:$0]  %s966, 128, %s969, %s958
        $region28: #{tpu_custom_call.1} parent=23 // pred_fallthru
          _
        // Predicated region
        $region29: #{tpu_custom_call.1} parent=23 // pred_check
          %p972 = pneg %p149
        $region30: #{tpu_custom_call.1} parent=23 // pred_check_branch
          %974 = sbr.rel (%p972) target = $region32
        $region31: #{tpu_custom_call.1} parent=23 // pred_region
          %s975 = sand.u32 %s91, 1
          %s976 = scalar_lea.sflag [#allocation7], %s975
          %s977 = sand.u32 %s139, 1
          %s978 = smul.addr %s977, 8
          %s979 = scalar_lea.vmem [#allocation6], %s978
          %s981 = ssub.s32 128, 128
          %982 = vsyncadd %s976, %s981
          %s983 = smul.addr %s98, 128
          %s984 = scalar_lea.hbm %s3, %s983
          %s986 = sshll.u32 %s979, 4
          %s987 = int_to_ptr.vmem [resolvable:$true] %s986
          %989 = dma.hbm_to_vmem [thread:$0]  %s984, 128, %s987, %s976
        $region32: #{tpu_custom_call.1} parent=23 // pred_fallthru
          _
        // Predicated region
        $region33: #{tpu_custom_call.1} parent=23 // pred_check
          %p990 = pneg %p175
        $region34: #{tpu_custom_call.1} parent=23 // pred_check_branch
          %992 = sbr.rel (%p990) target = $region36
        $region35: #{tpu_custom_call.1} parent=23 // pred_region
          %s993 = sand.u32 %s91, 1
          %s994 = scalar_lea.sflag [#allocation7], %s993
          %s995 = sand.u32 %s165, 1
          %s996 = smul.addr %s995, 8
          %s997 = scalar_lea.vmem [#allocation8], %s996
          %s999 = ssub.s32 128, 128
          %1000 = vsyncadd %s994, %s999
          %s1001 = smul.addr %s98, 2
          %s1002 = smul.addr %s1001, 64
          %s1003 = scalar_lea.hbm %s5, %s1002
          %s1004 = sshll.u32 %s997, 4
          %s1005 = int_to_ptr.vmem [resolvable:$true] %s1004
          %1010 = dma.hbm_to_vmem [thread:$0]  %s1003, 128, %s1005, %s994, 64, 64, 4
        $region36: #{tpu_custom_call.1} parent=23 // pred_fallthru
          _
        // Predicated region
        $region37: #{tpu_custom_call.1} parent=23 // pred_check
          %p1011 = pneg %p201
        $region38: #{tpu_custom_call.1} parent=23 // pred_check_branch
          %1013 = sbr.rel (%p1011) target = $region40
        $region39: #{tpu_custom_call.1} parent=23 // pred_region
          %s1014 = sand.u32 %s91, 1
          %s1015 = scalar_lea.sflag [#allocation10], %s1014
          %s1016 = sand.u32 %s191, 1
          %s1017 = smul.addr %s1016, 8
          %s1018 = scalar_lea.vmem [#allocation9], %s1017
          %s1020 = ssub.s32 128, 128
          %1021 = vsyncadd %s1015, %s1020
          %s1022 = smul.addr %s98, 2
          %s1023 = smul.addr %s1022, 64
          %s1024 = scalar_lea.hbm %s7, %s1023
          %s1025 = sshll.u32 %s1018, 4
          %s1026 = int_to_ptr.vmem [resolvable:$true] %s1025
          %1031 = dma.hbm_to_vmem [thread:$0]  %s1024, 128, %s1026, %s1015, 64, 64, 4
        $region40: #{tpu_custom_call.1} parent=23 // pred_fallthru
          _
        // Predicated region
        $region41: #{tpu_custom_call.1} parent=23 // pred_check
          %p1032 = pneg %p227
        $region42: #{tpu_custom_call.1} parent=23 // pred_check_branch
          %1034 = sbr.rel (%p1032) target = $region44
        $region43: #{tpu_custom_call.1} parent=23 // pred_region
          %p1035 = scmp.lt.s32.totalorder %s99, 1
          %s1036 = scalar_select %p1035, %s99, 1
          %s1037 = smul.addr %s1036, 8
          %s1038 = smul.addr %s1037, 4
          %s1039 = scalar_lea.vmem %s9, %s1038
        $region44: #{tpu_custom_call.1} parent=23 // pred_fallthru
          _
        // Predicated region
        $region45: #{tpu_custom_call.1} parent=23 // pred_check
          %p1040 = pneg %p253
        $region46: #{tpu_custom_call.1} parent=23 // pred_check_branch
          %1042 = sbr.rel (%p1040) target = $region48
        $region47: #{tpu_custom_call.1} parent=23 // pred_region
          %p1043 = scmp.lt.s32.totalorder %s99, 1
          %s1044 = scalar_select %p1043, %s99, 1
          %s1045 = scalar_lea.vmem %s11, %s1044
        $region48: #{tpu_custom_call.1} parent=23 // pred_fallthru
          _
        // Predicated region
        $region49: #{tpu_custom_call.1} parent=23 // pred_check
          %p1046 = pneg %p279
        $region50: #{tpu_custom_call.1} parent=23 // pred_check_branch
          %1048 = sbr.rel (%p1046) target = $region52
        $region51: #{tpu_custom_call.1} parent=23 // pred_region
          %p1049 = scmp.lt.s32.totalorder %s99, 1
          %s1050 = scalar_select %p1049, %s99, 1
          %s1051 = smul.addr %s1050, 8
          %s1052 = smul.addr %s1051, 4
          %s1053 = scalar_lea.vmem %s13, %s1052
        $region52: #{tpu_custom_call.1} parent=23 // pred_fallthru
          _
        // Predicated region
        $region53: #{tpu_custom_call.1} parent=23 // pred_check
          %p1054 = pneg %p305
        $region54: #{tpu_custom_call.1} parent=23 // pred_check_branch
          %1056 = sbr.rel (%p1054) target = $region56
        $region55: #{tpu_custom_call.1} parent=23 // pred_region
          %p1057 = scmp.lt.s32.totalorder %s99, 1
          %s1058 = scalar_select %p1057, %s99, 1
          %s1059 = scalar_lea.vmem %s15, %s1058
        $region56: #{tpu_custom_call.1} parent=23 // pred_fallthru
          _
        // Predicated region
        $region57: #{tpu_custom_call.1} parent=23 // pred_check
          %p1060 = pneg %p331
        $region58: #{tpu_custom_call.1} parent=23 // pred_check_branch
          %1062 = sbr.rel (%p1060) target = $region60
        $region59: #{tpu_custom_call.1} parent=23 // pred_region
          %p1063 = scmp.lt.s32.totalorder %s99, 1
          %s1064 = scalar_select %p1063, %s99, 1
          %s1065 = smul.addr %s1064, 8
          %s1066 = smul.addr %s1065, 4
          %s1067 = scalar_lea.vmem %s17, %s1066
        $region60: #{tpu_custom_call.1} parent=23 // pred_fallthru
          _
        // Predicated region
        $region61: #{tpu_custom_call.1} parent=23 // pred_check
          %p1068 = pneg %p357
        $region62: #{tpu_custom_call.1} parent=23 // pred_check_branch
          %1070 = sbr.rel (%p1068) target = $region64
        $region63: #{tpu_custom_call.1} parent=23 // pred_region
          %p1071 = scmp.lt.s32.totalorder %s99, 1
          %s1072 = scalar_select %p1071, %s99, 1
          %s1073 = scalar_lea.vmem %s19, %s1072
        $region64: #{tpu_custom_call.1} parent=23 // pred_fallthru
          _
        // Predicated region
        $region65: #{tpu_custom_call.1} parent=23 // pred_check
          %p1074 = pneg %p383
        $region66: #{tpu_custom_call.1} parent=23 // pred_check_branch
          %1076 = sbr.rel (%p1074) target = $region68
        $region67: #{tpu_custom_call.1} parent=23 // pred_region
          %s1077 = sand.u32 %s91, 1
          %s1078 = scalar_lea.sflag [#allocation10], %s1077
          %s1079 = sand.u32 %s373, 1
          %s1080 = smul.addr %s1079, 32
          %s1081 = scalar_lea.vmem [#allocation11], %s1080
          %s1083 = ssub.s32 512, 512
          %1084 = vsyncadd %s1078, %s1083
          %s1085 = smul.addr %s99, 8
          %s1086 = smul.addr %s1085, 64
          %s1087 = scalar_lea.hbm %s21, %s1086
          %s1088 = sshll.u32 %s1081, 4
          %s1089 = int_to_ptr.vmem [resolvable:$true] %s1088
          %1094 = dma.hbm_to_vmem [thread:$0]  %s1087, 512, %s1089, %s1078, 64, 64, 4
        $region68: #{tpu_custom_call.1} parent=23 // pred_fallthru
          _
        // Predicated region
        $region69: #{tpu_custom_call.1} parent=23 // pred_check
          %p1095 = pneg %p409
        $region70: #{tpu_custom_call.1} parent=23 // pred_check_branch
          %1097 = sbr.rel (%p1095) target = $region72
        $region71: #{tpu_custom_call.1} parent=23 // pred_region
          %p1098 = scmp.lt.s32.totalorder %s99, 1
          %s1099 = scalar_select %p1098, %s99, 1
          %s1100 = scalar_lea.vmem %s23, %s1099
        $region72: #{tpu_custom_call.1} parent=23 // pred_fallthru
          _
        // Predicated region
        $region73: #{tpu_custom_call.1} parent=23 // pred_check
          %p1101 = pneg %p435
        $region74: #{tpu_custom_call.1} parent=23 // pred_check_branch
          %1103 = sbr.rel (%p1101) target = $region76
        $region75: #{tpu_custom_call.1} parent=23 // pred_region
          %s1104 = sand.u32 %s91, 1
          %s1105 = scalar_lea.sflag [#allocation13], %s1104
          %s1106 = sand.u32 %s425, 1
          %s1107 = smul.addr %s1106, 32
          %s1108 = scalar_lea.vmem [#allocation12], %s1107
          %s1110 = ssub.s32 512, 512
          %1111 = vsyncadd %s1105, %s1110
          %s1112 = smul.addr %s99, 8
          %s1113 = smul.addr %s1112, 64
          %s1114 = scalar_lea.hbm %s25, %s1113
          %s1115 = sshll.u32 %s1108, 4
          %s1116 = int_to_ptr.vmem [resolvable:$true] %s1115
          %1121 = dma.hbm_to_vmem [thread:$0]  %s1114, 512, %s1116, %s1105, 64, 64, 4
        $region76: #{tpu_custom_call.1} parent=23 // pred_fallthru
          _
        // Predicated region
        $region77: #{tpu_custom_call.1} parent=23 // pred_check
          %p1122 = pneg %p461
        $region78: #{tpu_custom_call.1} parent=23 // pred_check_branch
          %1124 = sbr.rel (%p1122) target = $region80
        $region79: #{tpu_custom_call.1} parent=23 // pred_region
          %p1125 = scmp.lt.s32.totalorder %s99, 1
          %s1126 = scalar_select %p1125, %s99, 1
          %s1127 = scalar_lea.vmem %s27, %s1126
        $region80: #{tpu_custom_call.1} parent=23 // pred_fallthru
          _
        // Predicated region
        $region81: #{tpu_custom_call.1} parent=23 // pred_check
          %p1128 = pneg %p487
        $region82: #{tpu_custom_call.1} parent=23 // pred_check_branch
          %1130 = sbr.rel (%p1128) target = $region84
        $region83: #{tpu_custom_call.1} parent=23 // pred_region
          %s1131 = sand.u32 %s91, 1
          %s1132 = scalar_lea.sflag [#allocation13], %s1131
          %s1133 = sand.u32 %s477, 1
          %s1134 = smul.addr %s1133, 32
          %s1135 = scalar_lea.vmem [#allocation14], %s1134
          %s1137 = ssub.s32 512, 512
          %1138 = vsyncadd %s1132, %s1137
          %s1139 = smul.addr %s99, 8
          %s1140 = smul.addr %s1139, 64
          %s1141 = scalar_lea.hbm %s29, %s1140
          %s1142 = sshll.u32 %s1135, 4
          %s1143 = int_to_ptr.vmem [resolvable:$true] %s1142
          %1148 = dma.hbm_to_vmem [thread:$0]  %s1141, 512, %s1143, %s1132, 64, 64, 4
        $region84: #{tpu_custom_call.1} parent=23 // pred_fallthru
          _
        // Predicated region
        $region85: #{tpu_custom_call.1} parent=23 // pred_check
          %p1149 = pneg %p513
        $region86: #{tpu_custom_call.1} parent=23 // pred_check_branch
          %1151 = sbr.rel (%p1149) target = $region88
        $region87: #{tpu_custom_call.1} parent=23 // pred_region
          %p1152 = scmp.lt.s32.totalorder %s99, 1
          %s1153 = scalar_select %p1152, %s99, 1
          %s1154 = scalar_lea.vmem %s31, %s1153
        $region88: #{tpu_custom_call.1} parent=23 // pred_fallthru
          _
        // Predicated region
        $region89: #{tpu_custom_call.1} parent=23 // pred_check
          %p1155 = pneg %p539
        $region90: #{tpu_custom_call.1} parent=23 // pred_check_branch
          %1157 = sbr.rel (%p1155) target = $region92
        $region91: #{tpu_custom_call.1} parent=23 // pred_region
          %s1158 = sand.u32 %s91, 1
          %s1159 = scalar_lea.sflag [#allocation16], %s1158
          %s1160 = sand.u32 %s529, 1
          %s1161 = smul.addr %s1160, 32
          %s1162 = scalar_lea.vmem [#allocation15], %s1161
          %s1164 = ssub.s32 512, 512
          %1165 = vsyncadd %s1159, %s1164
          %s1166 = smul.addr %s99, 8
          %s1167 = smul.addr %s1166, 64
          %s1168 = scalar_lea.hbm %s33, %s1167
          %s1169 = sshll.u32 %s1162, 4
          %s1170 = int_to_ptr.vmem [resolvable:$true] %s1169
          %1175 = dma.hbm_to_vmem [thread:$0]  %s1168, 512, %s1170, %s1159, 64, 64, 4
        $region92: #{tpu_custom_call.1} parent=23 // pred_fallthru
          _
        // Predicated region
        $region93: #{tpu_custom_call.1} parent=23 // pred_check
          %p1176 = pneg %p565
        $region94: #{tpu_custom_call.1} parent=23 // pred_check_branch
          %1178 = sbr.rel (%p1176) target = $region96
        $region95: #{tpu_custom_call.1} parent=23 // pred_region
          %p1179 = scmp.lt.s32.totalorder %s99, 1
          %s1180 = scalar_select %p1179, %s99, 1
          %s1181 = scalar_lea.vmem %s35, %s1180
        $region96: #{tpu_custom_call.1} parent=23 // pred_fallthru
          _
        // Predicated region
        $region97: #{tpu_custom_call.1} parent=23 // pred_check
          %p1182 = pneg %p591
        $region98: #{tpu_custom_call.1} parent=23 // pred_check_branch
          %1184 = sbr.rel (%p1182) target = $region100
        $region99: #{tpu_custom_call.1} parent=23 // pred_region
          %s1185 = sand.u32 %s91, 1
          %s1186 = scalar_lea.sflag [#allocation16], %s1185
          %s1187 = sand.u32 %s581, 1
          %s1188 = smul.addr %s1187, 32
          %s1189 = scalar_lea.vmem [#allocation17], %s1188
          %s1191 = ssub.s32 512, 512
          %1192 = vsyncadd %s1186, %s1191
          %s1193 = smul.addr %s99, 8
          %s1194 = smul.addr %s1193, 64
          %s1195 = scalar_lea.hbm %s37, %s1194
          %s1196 = sshll.u32 %s1189, 4
          %s1197 = int_to_ptr.vmem [resolvable:$true] %s1196
          %1202 = dma.hbm_to_vmem [thread:$0]  %s1195, 512, %s1197, %s1186, 64, 64, 4
        $region100: #{tpu_custom_call.1} parent=23 // pred_fallthru
          _
        // Predicated region
        $region101: #{tpu_custom_call.1} parent=23 // pred_check
          %p1203 = pneg %p617
        $region102: #{tpu_custom_call.1} parent=23 // pred_check_branch
          %1205 = sbr.rel (%p1203) target = $region104
        $region103: #{tpu_custom_call.1} parent=23 // pred_region
          %p1206 = scmp.lt.s32.totalorder %s99, 1
          %s1207 = scalar_select %p1206, %s99, 1
          %s1208 = scalar_lea.vmem %s39, %s1207
        $region104: #{tpu_custom_call.1} parent=23 // pred_fallthru
          _
        // Predicated region
        $region105: #{tpu_custom_call.1} parent=23 // pred_check
          %p1209 = pneg %p643
        $region106: #{tpu_custom_call.1} parent=23 // pred_check_branch
          %1211 = sbr.rel (%p1209) target = $region108
        $region107: #{tpu_custom_call.1} parent=23 // pred_region
          %p1212 = scmp.lt.s32.totalorder %s99, 1
          %s1213 = scalar_select %p1212, %s99, 1
          %s1214 = smul.addr %s1213, 16
          %s1215 = smul.addr %s1214, 4
          %s1216 = scalar_lea.vmem %s41, %s1215
        $region108: #{tpu_custom_call.1} parent=23 // pred_fallthru
          _
        // Predicated region
        $region109: #{tpu_custom_call.1} parent=23 // pred_check
          %p1217 = pneg %p669
        $region110: #{tpu_custom_call.1} parent=23 // pred_check_branch
          %1219 = sbr.rel (%p1217) target = $region112
        $region111: #{tpu_custom_call.1} parent=23 // pred_region
          %p1220 = scmp.lt.s32.totalorder %s99, 1
          %s1221 = scalar_select %p1220, %s99, 1
          %s1222 = scalar_lea.vmem %s43, %s1221
        $region112: #{tpu_custom_call.1} parent=23 // pred_fallthru
          _
        // Predicated region
        $region113: #{tpu_custom_call.1} parent=23 // pred_check
          %p1223 = pneg %p695
        $region114: #{tpu_custom_call.1} parent=23 // pred_check_branch
          %1225 = sbr.rel (%p1223) target = $region116
        $region115: #{tpu_custom_call.1} parent=23 // pred_region
          %p1226 = scmp.lt.s32.totalorder %s99, 1
          %s1227 = scalar_select %p1226, %s99, 1
          %s1228 = scalar_lea.vmem %s45, %s1227
        $region116: #{tpu_custom_call.1} parent=23 // pred_fallthru
          _
        // Predicated region
        $region117: #{tpu_custom_call.1} parent=23 // pred_check
          %p1229 = pneg %p721
        $region118: #{tpu_custom_call.1} parent=23 // pred_check_branch
          %1231 = sbr.rel (%p1229) target = $region120
        $region119: #{tpu_custom_call.1} parent=23 // pred_region
          %p1232 = scmp.lt.s32.totalorder %s99, 1
          %s1233 = scalar_select %p1232, %s99, 1
          %s1234 = scalar_lea.vmem %s47, %s1233
        $region120: #{tpu_custom_call.1} parent=23 // pred_fallthru
          _
        // Predicated region
        $region121: #{tpu_custom_call.1} parent=23 // pred_check
          %p1235 = pneg %p747
        $region122: #{tpu_custom_call.1} parent=23 // pred_check_branch
          %1237 = sbr.rel (%p1235) target = $region124
        $region123: #{tpu_custom_call.1} parent=23 // pred_region
          %p1238 = scmp.lt.s32.totalorder %s99, 1
          %s1239 = scalar_select %p1238, %s99, 1
          %s1240 = scalar_lea.vmem %s49, %s1239
        $region124: #{tpu_custom_call.1} parent=23 // pred_fallthru
          _
        // Predicated region
        $region125: #{tpu_custom_call.1} parent=23 // pred_check
          %p1241 = pneg %p773
        $region126: #{tpu_custom_call.1} parent=23 // pred_check_branch
          %1243 = sbr.rel (%p1241) target = $region128
        $region127: #{tpu_custom_call.1} parent=23 // pred_region
          %p1244 = scmp.lt.s32.totalorder %s99, 1
          %s1245 = scalar_select %p1244, %s99, 1
          %s1246 = scalar_lea.vmem %s51, %s1245
        $region128: #{tpu_custom_call.1} parent=23 // pred_fallthru
          _
        // Predicated region
        $region129: #{tpu_custom_call.1} parent=23 // pred_check
          %p1247 = pneg %p799
        $region130: #{tpu_custom_call.1} parent=23 // pred_check_branch
          %1249 = sbr.rel (%p1247) target = $region132
        $region131: #{tpu_custom_call.1} parent=23 // pred_region
          %p1250 = scmp.lt.s32.totalorder %s99, 1
          %s1251 = scalar_select %p1250, %s99, 1
          %s1252 = scalar_lea.vmem %s53, %s1251
        $region132: #{tpu_custom_call.1} parent=23 // pred_fallthru
          _
        // Predicated region
        $region133: #{tpu_custom_call.1} parent=23 // pred_check
          %p1253 = pneg %p825
        $region134: #{tpu_custom_call.1} parent=23 // pred_check_branch
          %1255 = sbr.rel (%p1253) target = $region136
        $region135: #{tpu_custom_call.1} parent=23 // pred_region
          %p1256 = scmp.lt.s32.totalorder %s99, 1
          %s1257 = scalar_select %p1256, %s99, 1
          %s1258 = scalar_lea.vmem %s55, %s1257
        $region136: #{tpu_custom_call.1} parent=23 // pred_fallthru
          _
      $region24: #{tpu_custom_call.1} parent=5 // pred_fallthru
        _
      %p1259 = scmp.le.s32.totalorder 1, %s91
      %p1260 = scmp.lt.s32.totalorder %s91, 5
      %p1261 = pnand %p1259, %p1260
      %p1262 = pneg %p1261
      // Predicated region
      $region137: #{tpu_custom_call.1} parent=5 // pred_check
        _
      $region138: #{tpu_custom_call.1} parent=5 // pred_check_branch
        %1264 = sbr.rel (%p1261) target = $region140
      $region139: #{tpu_custom_call.1} parent=5 // pred_region
        %s1265 = ssub.s32 %s91, 1
        %s1266 = sand.u32 %s116, 1
        %s1267 = scalar_lea.sflag [#allocation4], %s1266
        %s1268 = sand.u32 %s116, 1
        %s1269 = smul.addr %s1268, 8
        %s1270 = scalar_lea.vmem [#allocation3], %s1269
        // Predicated region
        $region141: #{tpu_custom_call.1} parent=139 // pred_check
          %p1271 = pneg %p129
        $region142: #{tpu_custom_call.1} parent=139 // pred_check_branch
          %1273 = sbr.rel (%p1271) target = $region144
        $region143: #{tpu_custom_call.1} parent=139 // pred_region
          %1274 = dma.done %s1267, 128
        $region144: #{tpu_custom_call.1} parent=139 // pred_fallthru
          _
        %s1275 = sand.u32 %s96, 1
        %s1276 = scalar_lea.sflag [#allocation7], %s1275
        %s1277 = sand.u32 %s142, 1
        %s1278 = smul.addr %s1277, 8
        %s1279 = scalar_lea.vmem [#allocation6], %s1278
        // Predicated region
        $region145: #{tpu_custom_call.1} parent=139 // pred_check
          %p1280 = pneg %p155
        $region146: #{tpu_custom_call.1} parent=139 // pred_check_branch
          %1282 = sbr.rel (%p1280) target = $region148
        $region147: #{tpu_custom_call.1} parent=139 // pred_region
          %1283 = dma.done %s1276, 128
        $region148: #{tpu_custom_call.1} parent=139 // pred_fallthru
          _
        %s1284 = sand.u32 %s96, 1
        %s1285 = scalar_lea.sflag [#allocation7], %s1284
        %s1286 = sand.u32 %s168, 1
        %s1287 = smul.addr %s1286, 8
        %s1288 = scalar_lea.vmem [#allocation8], %s1287
        // Predicated region
        $region149: #{tpu_custom_call.1} parent=139 // pred_check
          %p1289 = pneg %p181
        $region150: #{tpu_custom_call.1} parent=139 // pred_check_branch
          %1291 = sbr.rel (%p1289) target = $region152
        $region151: #{tpu_custom_call.1} parent=139 // pred_region
          %1292 = dma.done %s1285, 128
        $region152: #{tpu_custom_call.1} parent=139 // pred_fallthru
          _
        %s1293 = sand.u32 %s96, 1
        %s1294 = scalar_lea.sflag [#allocation10], %s1293
        %s1295 = sand.u32 %s194, 1
        %s1296 = smul.addr %s1295, 8
        %s1297 = scalar_lea.vmem [#allocation9], %s1296
        // Predicated region
        $region153: #{tpu_custom_call.1} parent=139 // pred_check
          %p1298 = pneg %p207
        $region154: #{tpu_custom_call.1} parent=139 // pred_check_branch
          %1300 = sbr.rel (%p1298) target = $region156
        $region155: #{tpu_custom_call.1} parent=139 // pred_region
          %1301 = dma.done %s1294, 128
        $region156: #{tpu_custom_call.1} parent=139 // pred_fallthru
          _
        %s1302 = sand.u32 %s96, 1
        %s1303 = scalar_lea.sflag [#allocation10], %s1302
        %s1304 = sand.u32 %s376, 1
        %s1305 = smul.addr %s1304, 32
        %s1306 = scalar_lea.vmem [#allocation11], %s1305
        // Predicated region
        $region157: #{tpu_custom_call.1} parent=139 // pred_check
          %p1307 = pneg %p389
        $region158: #{tpu_custom_call.1} parent=139 // pred_check_branch
          %1309 = sbr.rel (%p1307) target = $region160
        $region159: #{tpu_custom_call.1} parent=139 // pred_region
          %1310 = dma.done %s1303, 512
        $region160: #{tpu_custom_call.1} parent=139 // pred_fallthru
          _
        %s1311 = sand.u32 %s96, 1
        %s1312 = scalar_lea.sflag [#allocation13], %s1311
        %s1313 = sand.u32 %s428, 1
        %s1314 = smul.addr %s1313, 32
        %s1315 = scalar_lea.vmem [#allocation12], %s1314
        // Predicated region
        $region161: #{tpu_custom_call.1} parent=139 // pred_check
          %p1316 = pneg %p441
        $region162: #{tpu_custom_call.1} parent=139 // pred_check_branch
          %1318 = sbr.rel (%p1316) target = $region164
        $region163: #{tpu_custom_call.1} parent=139 // pred_region
          %1319 = dma.done %s1312, 512
        $region164: #{tpu_custom_call.1} parent=139 // pred_fallthru
          _
        %s1320 = sand.u32 %s96, 1
        %s1321 = scalar_lea.sflag [#allocation13], %s1320
        %s1322 = sand.u32 %s480, 1
        %s1323 = smul.addr %s1322, 32
        %s1324 = scalar_lea.vmem [#allocation14], %s1323
        // Predicated region
        $region165: #{tpu_custom_call.1} parent=139 // pred_check
          %p1325 = pneg %p493
        $region166: #{tpu_custom_call.1} parent=139 // pred_check_branch
          %1327 = sbr.rel (%p1325) target = $region168
        $region167: #{tpu_custom_call.1} parent=139 // pred_region
          %1328 = dma.done %s1321, 512
        $region168: #{tpu_custom_call.1} parent=139 // pred_fallthru
          _
        %s1329 = sand.u32 %s96, 1
        %s1330 = scalar_lea.sflag [#allocation16], %s1329
        %s1331 = sand.u32 %s532, 1
        %s1332 = smul.addr %s1331, 32
        %s1333 = scalar_lea.vmem [#allocation15], %s1332
        // Predicated region
        $region169: #{tpu_custom_call.1} parent=139 // pred_check
          %p1334 = pneg %p545
        $region170: #{tpu_custom_call.1} parent=139 // pred_check_branch
          %1336 = sbr.rel (%p1334) target = $region172
        $region171: #{tpu_custom_call.1} parent=139 // pred_region
          %1337 = dma.done %s1330, 512
        $region172: #{tpu_custom_call.1} parent=139 // pred_fallthru
          _
        %s1338 = sand.u32 %s96, 1
        %s1339 = scalar_lea.sflag [#allocation16], %s1338
        %s1340 = sand.u32 %s584, 1
        %s1341 = smul.addr %s1340, 32
        %s1342 = scalar_lea.vmem [#allocation17], %s1341
        // Predicated region
        $region173: #{tpu_custom_call.1} parent=139 // pred_check
          %p1343 = pneg %p597
        $region174: #{tpu_custom_call.1} parent=139 // pred_check_branch
          %1345 = sbr.rel (%p1343) target = $region176
        $region175: #{tpu_custom_call.1} parent=139 // pred_region
          %1346 = dma.done %s1339, 512
        $region176: #{tpu_custom_call.1} parent=139 // pred_fallthru
          _
        %s1347 = sand.u32 %s116, 1
        %s1348 = scalar_lea.sflag [#allocation4], %s1347
        %s1349 = sand.u32 %s116, 1
        %s1350 = smul.addr %s1349, 8
        %s1351 = scalar_lea.vmem [#allocation3], %s1350
        %p1352 = pneg %p129
        %p1353 = pneg %p126
        %s1354 = sand.u32 %s96, 1
        %s1355 = scalar_lea.sflag [#allocation7], %s1354
        %s1356 = sand.u32 %s142, 1
        %s1357 = smul.addr %s1356, 8
        %s1358 = scalar_lea.vmem [#allocation6], %s1357
        %p1359 = pneg %p155
        %p1360 = pneg %p152
        %s1361 = sand.u32 %s96, 1
        %s1362 = scalar_lea.sflag [#allocation7], %s1361
        %s1363 = sand.u32 %s168, 1
        %s1364 = smul.addr %s1363, 8
        %s1365 = scalar_lea.vmem [#allocation8], %s1364
        %p1366 = pneg %p181
        %p1367 = pneg %p178
        %s1368 = sand.u32 %s96, 1
        %s1369 = scalar_lea.sflag [#allocation10], %s1368
        %s1370 = sand.u32 %s194, 1
        %s1371 = smul.addr %s1370, 8
        %s1372 = scalar_lea.vmem [#allocation9], %s1371
        %p1373 = pneg %p207
        %p1374 = pneg %p204
        %p1375 = scmp.lt.s32.totalorder %s101, 1
        %s1376 = scalar_select %p1375, %s101, 1
        %s1377 = smul.addr %s1376, 8
        %s1378 = smul.addr %s1377, 4
        %s1379 = scalar_lea.vmem %s9, %s1378
        %p1380 = pneg %p233
        %p1381 = pneg %p230
        %p1382 = scmp.lt.s32.totalorder %s101, 1
        %s1383 = scalar_select %p1382, %s101, 1
        %s1384 = scalar_lea.vmem %s11, %s1383
        %p1385 = pneg %p259
        %p1386 = pneg %p256
        %p1387 = scmp.lt.s32.totalorder %s101, 1
        %s1388 = scalar_select %p1387, %s101, 1
        %s1389 = smul.addr %s1388, 8
        %s1390 = smul.addr %s1389, 4
        %s1391 = scalar_lea.vmem %s13, %s1390
        %p1392 = pneg %p285
        %p1393 = pneg %p282
        %p1394 = scmp.lt.s32.totalorder %s101, 1
        %s1395 = scalar_select %p1394, %s101, 1
        %s1396 = scalar_lea.vmem %s15, %s1395
        %p1397 = pneg %p311
        %p1398 = pneg %p308
        %p1399 = scmp.lt.s32.totalorder %s101, 1
        %s1400 = scalar_select %p1399, %s101, 1
        %s1401 = smul.addr %s1400, 8
        %s1402 = smul.addr %s1401, 4
        %s1403 = scalar_lea.vmem %s17, %s1402
        %p1404 = pneg %p337
        %p1405 = pneg %p334
        %p1406 = scmp.lt.s32.totalorder %s101, 1
        %s1407 = scalar_select %p1406, %s101, 1
        %s1408 = scalar_lea.vmem %s19, %s1407
        %p1409 = pneg %p363
        %p1410 = pneg %p360
        %s1411 = sand.u32 %s96, 1
        %s1412 = scalar_lea.sflag [#allocation10], %s1411
        %s1413 = sand.u32 %s376, 1
        %s1414 = smul.addr %s1413, 32
        %s1415 = scalar_lea.vmem [#allocation11], %s1414
        %p1416 = pneg %p389
        %p1417 = pneg %p386
        %p1418 = scmp.lt.s32.totalorder %s101, 1
        %s1419 = scalar_select %p1418, %s101, 1
        %s1420 = scalar_lea.vmem %s23, %s1419
        %p1421 = pneg %p415
        %p1422 = pneg %p412
        %s1423 = sand.u32 %s96, 1
        %s1424 = scalar_lea.sflag [#allocation13], %s1423
        %s1425 = sand.u32 %s428, 1
        %s1426 = smul.addr %s1425, 32
        %s1427 = scalar_lea.vmem [#allocation12], %s1426
        %p1428 = pneg %p441
        %p1429 = pneg %p438
        %p1430 = scmp.lt.s32.totalorder %s101, 1
        %s1431 = scalar_select %p1430, %s101, 1
        %s1432 = scalar_lea.vmem %s27, %s1431
        %p1433 = pneg %p467
        %p1434 = pneg %p464
        %s1435 = sand.u32 %s96, 1
        %s1436 = scalar_lea.sflag [#allocation13], %s1435
        %s1437 = sand.u32 %s480, 1
        %s1438 = smul.addr %s1437, 32
        %s1439 = scalar_lea.vmem [#allocation14], %s1438
        %p1440 = pneg %p493
        %p1441 = pneg %p490
        %p1442 = scmp.lt.s32.totalorder %s101, 1
        %s1443 = scalar_select %p1442, %s101, 1
        %s1444 = scalar_lea.vmem %s31, %s1443
        %p1445 = pneg %p519
        %p1446 = pneg %p516
        %s1447 = sand.u32 %s96, 1
        %s1448 = scalar_lea.sflag [#allocation16], %s1447
        %s1449 = sand.u32 %s532, 1
        %s1450 = smul.addr %s1449, 32
        %s1451 = scalar_lea.vmem [#allocation15], %s1450
        %p1452 = pneg %p545
        %p1453 = pneg %p542
        %p1454 = scmp.lt.s32.totalorder %s101, 1
        %s1455 = scalar_select %p1454, %s101, 1
        %s1456 = scalar_lea.vmem %s35, %s1455
        %p1457 = pneg %p571
        %p1458 = pneg %p568
        %s1459 = sand.u32 %s96, 1
        %s1460 = scalar_lea.sflag [#allocation16], %s1459
        %s1461 = sand.u32 %s584, 1
        %s1462 = smul.addr %s1461, 32
        %s1463 = scalar_lea.vmem [#allocation17], %s1462
        %p1464 = pneg %p597
        %p1465 = pneg %p594
        %p1466 = scmp.lt.s32.totalorder %s101, 1
        %s1467 = scalar_select %p1466, %s101, 1
        %s1468 = scalar_lea.vmem %s39, %s1467
        %p1469 = pneg %p623
        %p1470 = pneg %p620
        %p1471 = scmp.lt.s32.totalorder %s101, 1
        %s1472 = scalar_select %p1471, %s101, 1
        %s1473 = smul.addr %s1472, 16
        %s1474 = smul.addr %s1473, 4
        %s1475 = scalar_lea.vmem %s41, %s1474
        %p1476 = pneg %p649
        %p1477 = pneg %p646
        %p1478 = scmp.lt.s32.totalorder %s101, 1
        %s1479 = scalar_select %p1478, %s101, 1
        %s1480 = scalar_lea.vmem %s43, %s1479
        %p1481 = pneg %p675
        %p1482 = pneg %p672
        %p1483 = scmp.lt.s32.totalorder %s101, 1
        %s1484 = scalar_select %p1483, %s101, 1
        %s1485 = scalar_lea.vmem %s45, %s1484
        %p1486 = pneg %p701
        %p1487 = pneg %p698
        %p1488 = scmp.lt.s32.totalorder %s101, 1
        %s1489 = scalar_select %p1488, %s101, 1
        %s1490 = scalar_lea.vmem %s47, %s1489
        %p1491 = pneg %p727
        %p1492 = pneg %p724
        %p1493 = scmp.lt.s32.totalorder %s101, 1
        %s1494 = scalar_select %p1493, %s101, 1
        %s1495 = scalar_lea.vmem %s49, %s1494
        %p1496 = pneg %p753
        %p1497 = pneg %p750
        %p1498 = scmp.lt.s32.totalorder %s101, 1
        %s1499 = scalar_select %p1498, %s101, 1
        %s1500 = scalar_lea.vmem %s51, %s1499
        %p1501 = pneg %p779
        %p1502 = pneg %p776
        %p1503 = scmp.lt.s32.totalorder %s101, 1
        %s1504 = scalar_select %p1503, %s101, 1
        %s1505 = scalar_lea.vmem %s53, %s1504
        %p1506 = pneg %p805
        %p1507 = pneg %p802
        %p1508 = scmp.lt.s32.totalorder %s101, 1
        %s1509 = scalar_select %p1508, %s101, 1
        %s1510 = scalar_lea.vmem %s55, %s1509
        %p1511 = pneg %p831
        %p1512 = pneg %p828
        %p1513 = pneg %p852
        %p1514 = pneg %p849
        %p1515 = pneg %p873
        %p1516 = pneg %p870
        %p1517 = pneg %p901
        %p1518 = pneg %p898
        %s1519 = sand.u32 %s888, 1
        %s1520 = scalar_lea.sflag [#allocation5], %s1519
        %s1521 = sand.u32 %s888, 1
        %s1522 = smul.addr %s1521, 8
        %s1523 = scalar_lea.vmem [#allocation18], %s1522
        %p1524 = pneg %p929
        %p1525 = pneg %p926
        %s1526 = sand.u32 %s916, 1
        %s1527 = scalar_lea.sflag [#allocation20], %s1526
        %s1528 = sand.u32 %s916, 1
        %s1529 = smul.addr %s1528, 8
        %s1530 = scalar_lea.vmem [#allocation19], %s1529
        %p1531 = scmp.lt.s32.totalorder %s101, 1
        %s1532 = scalar_select %p1531, %s101, 1
        %s1533 = smul.addr %s1532, 8
        %s1534 = smul.addr %s1533, 4
        %s1535 = scalar_lea.vmem %s9, %s1534
        %p1536 = scmp.lt.s32.totalorder %s101, 1
        %s1537 = scalar_select %p1536, %s101, 1
        %s1538 = scalar_lea.vmem %s11, %s1537
        %p1539 = scmp.lt.s32.totalorder %s101, 1
        %s1540 = scalar_select %p1539, %s101, 1
        %s1541 = smul.addr %s1540, 8
        %s1542 = smul.addr %s1541, 4
        %s1543 = scalar_lea.vmem %s13, %s1542
        %p1544 = scmp.lt.s32.totalorder %s101, 1
        %s1545 = scalar_select %p1544, %s101, 1
        %s1546 = scalar_lea.vmem %s15, %s1545
        %p1547 = scmp.lt.s32.totalorder %s101, 1
        %s1548 = scalar_select %p1547, %s101, 1
        %s1549 = smul.addr %s1548, 8
        %s1550 = smul.addr %s1549, 4
        %s1551 = scalar_lea.vmem %s17, %s1550
        %p1552 = scmp.lt.s32.totalorder %s101, 1
        %s1553 = scalar_select %p1552, %s101, 1
        %s1554 = scalar_lea.vmem %s19, %s1553
        %p1555 = scmp.lt.s32.totalorder %s101, 1
        %s1556 = scalar_select %p1555, %s101, 1
        %s1557 = scalar_lea.vmem %s23, %s1556
        %p1558 = scmp.lt.s32.totalorder %s101, 1
        %s1559 = scalar_select %p1558, %s101, 1
        %s1560 = scalar_lea.vmem %s27, %s1559
        %p1561 = scmp.lt.s32.totalorder %s101, 1
        %s1562 = scalar_select %p1561, %s101, 1
        %s1563 = scalar_lea.vmem %s31, %s1562
        %p1564 = scmp.lt.s32.totalorder %s101, 1
        %s1565 = scalar_select %p1564, %s101, 1
        %s1566 = scalar_lea.vmem %s35, %s1565
        %p1567 = scmp.lt.s32.totalorder %s101, 1
        %s1568 = scalar_select %p1567, %s101, 1
        %s1569 = scalar_lea.vmem %s39, %s1568
        %p1570 = scmp.lt.s32.totalorder %s101, 1
        %s1571 = scalar_select %p1570, %s101, 1
        %s1572 = smul.addr %s1571, 16
        %s1573 = smul.addr %s1572, 4
        %s1574 = scalar_lea.vmem %s41, %s1573
        %p1575 = scmp.lt.s32.totalorder %s101, 1
        %s1576 = scalar_select %p1575, %s101, 1
        %s1577 = scalar_lea.vmem %s43, %s1576
        %p1578 = scmp.lt.s32.totalorder %s101, 1
        %s1579 = scalar_select %p1578, %s101, 1
        %s1580 = scalar_lea.vmem %s45, %s1579
        %p1581 = scmp.lt.s32.totalorder %s101, 1
        %s1582 = scalar_select %p1581, %s101, 1
        %s1583 = scalar_lea.vmem %s47, %s1582
        %p1584 = scmp.lt.s32.totalorder %s101, 1
        %s1585 = scalar_select %p1584, %s101, 1
        %s1586 = scalar_lea.vmem %s49, %s1585
        %p1587 = scmp.lt.s32.totalorder %s101, 1
        %s1588 = scalar_select %p1587, %s101, 1
        %s1589 = scalar_lea.vmem %s51, %s1588
        %p1590 = scmp.lt.s32.totalorder %s101, 1
        %s1591 = scalar_select %p1590, %s101, 1
        %s1592 = scalar_lea.vmem %s53, %s1591
        %p1593 = scmp.lt.s32.totalorder %s101, 1
        %s1594 = scalar_select %p1593, %s101, 1
        %s1595 = scalar_lea.vmem %s55, %s1594
        %p1597 = scmp.eq.s32.totalorder %s101, 0
        // Predicated region
        $region177: #{tpu_custom_call.1} parent=139 // pred_check
          %p1598 = pneg %p1597
        $region178: #{tpu_custom_call.1} parent=139 // pred_check_branch
          %1600 = sbr.rel (%p1598) target = $region180
        $region179: #{tpu_custom_call.1} parent=139 // pred_region
          %v1601 = vld [vmem:[%s1270] sm:$0xff]
          %vm1602 = vcmask 523264
          %1603 = vst.msk [vmem:[#allocation2] sm:$0xff] %vm1602, %v1601
        $region180: #{tpu_custom_call.1} parent=139 // pred_fallthru
          _
        %v1604 = vld [vmem:[#allocation2] sm:$0xff]
        %v1605 = vld [vmem:[%s1279] sm:$0xff]
        %v1606 = vadd.f32 %v1604, %v1605
        %v1607 = vpack.c.bf16 %v1606, %v1606
        %v1608 = vld [vmem:[%s1535] sm:$0xf]
        %v1609 = vld [vmem:[%s1535 + $0x4] sm:$0xf]
        %v1610 = vld [vmem:[%s1535 + $0x8] sm:$0xf]
        %v1611 = vld [vmem:[%s1535 + $0xc] sm:$0xf]
        %v1612 = vld [vmem:[%s1535 + $0x10] sm:$0xf]
        %v1613 = vld [vmem:[%s1535 + $0x14] sm:$0xf]
        %v1614 = vld [vmem:[%s1535 + $0x18] sm:$0xf]
        %v1615 = vld [vmem:[%s1535 + $0x1c] sm:$0xf]
        %v1616 = vld [vmem:[%s1538] sm:$0x1]
        %v1618 = vlaneseq
        %v1619 = vshrl.u32 %v1618, 7
        %v1620 = vsub.s32 0, %v1619
        %v1621 = vrot.slane %v1616, %v1620
        %v1631 = vunpack.c.l.b16 %v1608
        %v1632 = vunpack.c.l.b16 %v1609
        %v1633 = vunpack.c.l.b16 %v1610
        %v1634 = vunpack.c.l.b16 %v1611
        %v1635 = vunpack.c.l.b16 %v1612
        %v1636 = vunpack.c.l.b16 %v1613
        %v1637 = vunpack.c.l.b16 %v1614
        %v1638 = vunpack.c.l.b16 %v1615
        %v1639 = vpack.c.b16 %v1632, %v1631
        %v1640 = vpack.c.b16 %v1634, %v1633
        %v1641 = vpack.c.b16 %v1636, %v1635
        %v1642 = vpack.c.b16 %v1638, %v1637
        %vm1647 = vcmask 523264
        %v1649 = vsel %vm1647, %v1607, 0
        %1651 = vmatprep.subr.bf16.mxu0 0
        %1652 = vmatpush1.bf16.msra.mxu0 0
        %1653 = vmatprep.subr.bf16.mxu0 0
        %1654 = vmatpush1.bf16.msra.mxu0 0
        %1655 = vmatprep.subr.bf16.mxu0 0
        %1656 = vmatpush1.bf16.msra.mxu0 0
        %1657 = vmatprep.subr.bf16.mxu0 0
        %1658 = vmatpush1.bf16.msra.mxu0 0
        %1659 = vmatprep.subr.bf16.mxu0 0
        %1660 = vmatpush1.bf16.msra.mxu0 %v1642
        %1661 = vmatprep.subr.bf16.mxu0 0
        %1662 = vmatpush1.bf16.msra.mxu0 %v1641
        %1663 = vmatprep.subr.bf16.mxu0 0
        %1664 = vmatpush1.bf16.msra.mxu0 %v1640
        %1665 = vmatprep.subr.bf16.mxu0 0
        %1666 = vmatpush1.bf16.msra.mxu0 %v1639
        %1667 = vmatprep.subr.bf16.mxu0 0
        %1668 = vmatpush2.bf16.msra.mxu0 0
        %1669 = vmatprep.subr.bf16.mxu0 0
        %1670 = vmatpush2.bf16.msra.mxu0 0
        %1671 = vmatprep.subr.bf16.mxu0 0
        %1672 = vmatpush2.bf16.msra.mxu0 0
        %1673 = vmatprep.subr.bf16.mxu0 0
        %1674 = vmatpush2.bf16.msra.mxu0 0
        %1675 = vmatprep.subr.bf16.mxu0 0
        %1676 = vmatpush2.bf16.msra.mxu0 0
        %1677 = vmatprep.subr.bf16.mxu0 0
        %1678 = vmatpush2.bf16.msra.mxu0 0
        %1679 = vmatprep.subr.bf16.mxu0 0
        %1680 = vmatpush2.bf16.msra.mxu0 0
        %1681 = vmatprep.subr.bf16.mxu0 0
        %1682 = vmatpush2.bf16.msra.mxu0 0
        %1683 = vmatprep.mubr.bf16.mxu0 0
        %1684 = vmatmul.mubr.bf16.gmra.mxu0 %v1649
        %v1685 = vpop.f32.mrf.mxu0
        %v1686 = vadd.f32 %v1621, %v1685
        %v1687 = vpop.f32.mrf.mxu0
        %v1688 = vpop.f32.mrf.mxu0
        %v1689 = vpop.f32.mrf.mxu0
        %1690 = vdwg.mxu0
        %v1691 = vpack.c.bf16 %v1604, %v1604
        %v1692 = vld [vmem:[%s1543] sm:$0xf]
        %v1693 = vld [vmem:[%s1543 + $0x4] sm:$0xf]
        %v1694 = vld [vmem:[%s1543 + $0x8] sm:$0xf]
        %v1695 = vld [vmem:[%s1543 + $0xc] sm:$0xf]
        %v1696 = vld [vmem:[%s1543 + $0x10] sm:$0xf]
        %v1697 = vld [vmem:[%s1543 + $0x14] sm:$0xf]
        %v1698 = vld [vmem:[%s1543 + $0x18] sm:$0xf]
        %v1699 = vld [vmem:[%s1543 + $0x1c] sm:$0xf]
        %v1700 = vld [vmem:[%s1546] sm:$0x1]
        %v1702 = vlaneseq
        %v1703 = vshrl.u32 %v1702, 7
        %v1704 = vsub.s32 0, %v1703
        %v1705 = vrot.slane %v1700, %v1704
        %v1715 = vunpack.c.l.b16 %v1692
        %v1716 = vunpack.c.l.b16 %v1693
        %v1717 = vunpack.c.l.b16 %v1694
        %v1718 = vunpack.c.l.b16 %v1695
        %v1719 = vunpack.c.l.b16 %v1696
        %v1720 = vunpack.c.l.b16 %v1697
        %v1721 = vunpack.c.l.b16 %v1698
        %v1722 = vunpack.c.l.b16 %v1699
        %v1723 = vpack.c.b16 %v1716, %v1715
        %v1724 = vpack.c.b16 %v1718, %v1717
        %v1725 = vpack.c.b16 %v1720, %v1719
        %v1726 = vpack.c.b16 %v1722, %v1721
        %v1732 = vsel %vm1647, %v1691, 0
        %1734 = vmatprep.subr.bf16.mxu0 0
        %1735 = vmatpush1.bf16.msra.mxu0 0
        %1736 = vmatprep.subr.bf16.mxu0 0
        %1737 = vmatpush1.bf16.msra.mxu0 0
        %1738 = vmatprep.subr.bf16.mxu0 0
        %1739 = vmatpush1.bf16.msra.mxu0 0
        %1740 = vmatprep.subr.bf16.mxu0 0
        %1741 = vmatpush1.bf16.msra.mxu0 0
        %1742 = vmatprep.subr.bf16.mxu0 0
        %1743 = vmatpush1.bf16.msra.mxu0 %v1726
        %1744 = vmatprep.subr.bf16.mxu0 0
        %1745 = vmatpush1.bf16.msra.mxu0 %v1725
        %1746 = vmatprep.subr.bf16.mxu0 0
        %1747 = vmatpush1.bf16.msra.mxu0 %v1724
        %1748 = vmatprep.subr.bf16.mxu0 0
        %1749 = vmatpush1.bf16.msra.mxu0 %v1723
        %1750 = vmatprep.subr.bf16.mxu0 0
        %1751 = vmatpush2.bf16.msra.mxu0 0
        %1752 = vmatprep.subr.bf16.mxu0 0
        %1753 = vmatpush2.bf16.msra.mxu0 0
        %1754 = vmatprep.subr.bf16.mxu0 0
        %1755 = vmatpush2.bf16.msra.mxu0 0
        %1756 = vmatprep.subr.bf16.mxu0 0
        %1757 = vmatpush2.bf16.msra.mxu0 0
        %1758 = vmatprep.subr.bf16.mxu0 0
        %1759 = vmatpush2.bf16.msra.mxu0 0
        %1760 = vmatprep.subr.bf16.mxu0 0
        %1761 = vmatpush2.bf16.msra.mxu0 0
        %1762 = vmatprep.subr.bf16.mxu0 0
        %1763 = vmatpush2.bf16.msra.mxu0 0
        %1764 = vmatprep.subr.bf16.mxu0 0
        %1765 = vmatpush2.bf16.msra.mxu0 0
        %1766 = vmatprep.mubr.bf16.mxu0 0
        %1767 = vmatmul.mubr.bf16.gmra.mxu0 %v1732
        %v1768 = vpop.f32.mrf.mxu0
        %v1769 = vadd.f32 %v1705, %v1768
        %v1770 = vpop.f32.mrf.mxu0
        %v1771 = vpop.f32.mrf.mxu0
        %v1772 = vpop.f32.mrf.mxu0
        %1773 = vdwg.mxu0
        %1775 = vrot.lane.b32.xlu0 %v1686, 112
        %v1776 = vpop.permute.xlu0 %1775
        %1778 = vrot.lane.b32.xlu0 %v1686, 96
        %v1779 = vpop.permute.xlu0 %1778
        %1781 = vrot.lane.b32.xlu0 %v1686, 80
        %v1782 = vpop.permute.xlu0 %1781
        %v1784 = vpack.c.bf16 %v1686, %v1686
        %v1785 = vpack.c.bf16 %v1776, %v1776
        %v1786 = vpack.c.bf16 %v1779, %v1779
        %v1787 = vpack.c.bf16 %v1782, %v1782
        %1789 = vrot.lane.b32.xlu0 %v1769, 112
        %v1790 = vpop.permute.xlu0 %1789
        %1792 = vrot.lane.b32.xlu0 %v1769, 96
        %v1793 = vpop.permute.xlu0 %1792
        %1795 = vrot.lane.b32.xlu0 %v1769, 80
        %v1796 = vpop.permute.xlu0 %1795
        %v1798 = vpack.c.bf16 %v1769, %v1769
        %v1799 = vpack.c.bf16 %v1790, %v1790
        %v1800 = vpack.c.bf16 %v1793, %v1793
        %v1801 = vpack.c.bf16 %v1796, %v1796
        %v1802 = vld [vmem:[%s1551] sm:$0xf]
        %v1803 = vld [vmem:[%s1551 + $0x4] sm:$0xf]
        %v1804 = vld [vmem:[%s1551 + $0x8] sm:$0xf]
        %v1805 = vld [vmem:[%s1551 + $0xc] sm:$0xf]
        %v1806 = vld [vmem:[%s1551 + $0x10] sm:$0xf]
        %v1807 = vld [vmem:[%s1551 + $0x14] sm:$0xf]
        %v1808 = vld [vmem:[%s1551 + $0x18] sm:$0xf]
        %v1809 = vld [vmem:[%s1551 + $0x1c] sm:$0xf]
        %v1810 = vld [vmem:[%s1554] sm:$0x1]
        %1812 = vrot.lane.b32.xlu0 %v1784, 64
        %v1813 = vpop.permute.xlu0 %1812
        %vm1814 = vcmask 130048
        %v1816 = vsel %vm1814, %v1784, 0
        %v1819 = vsel %vm1814, %v1813, 0
        %1821 = vmatprep.subr.bf16.mxu0 0
        %1822 = vmatpush1.bf16.xpose.msra.mxu0 0
        %1823 = vmatprep.subr.bf16.mxu0 0
        %1824 = vmatpush1.bf16.xpose.msra.mxu0 0
        %1825 = vmatprep.subr.bf16.mxu0 0
        %1826 = vmatpush1.bf16.xpose.msra.mxu0 0
        %1827 = vmatprep.subr.bf16.mxu0 0
        %1828 = vmatpush1.bf16.xpose.msra.mxu0 0
        %1829 = vmatprep.subr.bf16.mxu0 0
        %1830 = vmatpush1.bf16.xpose.msra.mxu0 0
        %1831 = vmatprep.subr.bf16.mxu0 0
        %1832 = vmatpush1.bf16.xpose.msra.mxu0 0
        %1833 = vmatprep.subr.bf16.mxu0 0
        %1834 = vmatpush1.bf16.xpose.msra.mxu0 0
        %1835 = vmatprep.subr.bf16.mxu0 0
        %1836 = vmatpush1.bf16.xpose.msra.mxu0 %v1819
        %1837 = vmatprep.subr.bf16.mxu0 0
        %1838 = vmatpush2.bf16.xpose.msra.mxu0 0
        %1839 = vmatprep.subr.bf16.mxu0 0
        %1840 = vmatpush2.bf16.xpose.msra.mxu0 0
        %1841 = vmatprep.subr.bf16.mxu0 0
        %1842 = vmatpush2.bf16.xpose.msra.mxu0 0
        %1843 = vmatprep.subr.bf16.mxu0 0
        %1844 = vmatpush2.bf16.xpose.msra.mxu0 0
        %1845 = vmatprep.subr.bf16.mxu0 0
        %1846 = vmatpush2.bf16.xpose.msra.mxu0 0
        %1847 = vmatprep.subr.bf16.mxu0 0
        %1848 = vmatpush2.bf16.xpose.msra.mxu0 0
        %1849 = vmatprep.subr.bf16.mxu0 0
        %1850 = vmatpush2.bf16.xpose.msra.mxu0 0
        %1851 = vmatprep.subr.bf16.mxu0 0
        %1852 = vmatpush2.bf16.xpose.msra.mxu0 0
        %1853 = vmatprep.mubr.bf16.mxu0 0
        %1854 = vmatmul.mubr.bf16.gmra.mxu0 %v1816
        %v1855 = vpop.f32.mrf.mxu0
        %v1856 = vadd.f32 0.0, %v1855
        %v1857 = vpop.f32.mrf.mxu0
        %v1858 = vpop.f32.mrf.mxu0
        %v1859 = vpop.f32.mrf.mxu0
        %1860 = vdwg.mxu0
        %1862 = vrot.lane.b32.xlu0 %v1785, 64
        %v1863 = vpop.permute.xlu0 %1862
        %v1865 = vsel %vm1814, %v1785, 0
        %v1868 = vsel %vm1814, %v1863, 0
        %1870 = vmatprep.subr.bf16.mxu0 0
        %1871 = vmatpush1.bf16.xpose.msra.mxu0 0
        %1872 = vmatprep.subr.bf16.mxu0 0
        %1873 = vmatpush1.bf16.xpose.msra.mxu0 0
        %1874 = vmatprep.subr.bf16.mxu0 0
        %1875 = vmatpush1.bf16.xpose.msra.mxu0 0
        %1876 = vmatprep.subr.bf16.mxu0 0
        %1877 = vmatpush1.bf16.xpose.msra.mxu0 0
        %1878 = vmatprep.subr.bf16.mxu0 0
        %1879 = vmatpush1.bf16.xpose.msra.mxu0 0
        %1880 = vmatprep.subr.bf16.mxu0 0
        %1881 = vmatpush1.bf16.xpose.msra.mxu0 0
        %1882 = vmatprep.subr.bf16.mxu0 0
        %1883 = vmatpush1.bf16.xpose.msra.mxu0 0
        %1884 = vmatprep.subr.bf16.mxu0 0
        %1885 = vmatpush1.bf16.xpose.msra.mxu0 %v1868
        %1886 = vmatprep.subr.bf16.mxu0 0
        %1887 = vmatpush2.bf16.xpose.msra.mxu0 0
        %1888 = vmatprep.subr.bf16.mxu0 0
        %1889 = vmatpush2.bf16.xpose.msra.mxu0 0
        %1890 = vmatprep.subr.bf16.mxu0 0
        %1891 = vmatpush2.bf16.xpose.msra.mxu0 0
        %1892 = vmatprep.subr.bf16.mxu0 0
        %1893 = vmatpush2.bf16.xpose.msra.mxu0 0
        %1894 = vmatprep.subr.bf16.mxu0 0
        %1895 = vmatpush2.bf16.xpose.msra.mxu0 0
        %1896 = vmatprep.subr.bf16.mxu0 0
        %1897 = vmatpush2.bf16.xpose.msra.mxu0 0
        %1898 = vmatprep.subr.bf16.mxu0 0
        %1899 = vmatpush2.bf16.xpose.msra.mxu0 0
        %1900 = vmatprep.subr.bf16.mxu0 0
        %1901 = vmatpush2.bf16.xpose.msra.mxu0 0
        %1902 = vmatprep.mubr.bf16.mxu0 0
        %1903 = vmatmul.mubr.bf16.gmra.mxu0 %v1865
        %v1904 = vpop.f32.mrf.mxu0
        %v1905 = vadd.f32 0.0, %v1904
        %v1906 = vpop.f32.mrf.mxu0
        %v1907 = vpop.f32.mrf.mxu0
        %v1908 = vpop.f32.mrf.mxu0
        %1909 = vdwg.mxu0
        %1911 = vrot.lane.b32.xlu0 %v1786, 64
        %v1912 = vpop.permute.xlu0 %1911
        %v1914 = vsel %vm1814, %v1786, 0
        %v1917 = vsel %vm1814, %v1912, 0
        %1919 = vmatprep.subr.bf16.mxu0 0
        %1920 = vmatpush1.bf16.xpose.msra.mxu0 0
        %1921 = vmatprep.subr.bf16.mxu0 0
        %1922 = vmatpush1.bf16.xpose.msra.mxu0 0
        %1923 = vmatprep.subr.bf16.mxu0 0
        %1924 = vmatpush1.bf16.xpose.msra.mxu0 0
        %1925 = vmatprep.subr.bf16.mxu0 0
        %1926 = vmatpush1.bf16.xpose.msra.mxu0 0
        %1927 = vmatprep.subr.bf16.mxu0 0
        %1928 = vmatpush1.bf16.xpose.msra.mxu0 0
        %1929 = vmatprep.subr.bf16.mxu0 0
        %1930 = vmatpush1.bf16.xpose.msra.mxu0 0
        %1931 = vmatprep.subr.bf16.mxu0 0
        %1932 = vmatpush1.bf16.xpose.msra.mxu0 0
        %1933 = vmatprep.subr.bf16.mxu0 0
        %1934 = vmatpush1.bf16.xpose.msra.mxu0 %v1917
        %1935 = vmatprep.subr.bf16.mxu0 0
        %1936 = vmatpush2.bf16.xpose.msra.mxu0 0
        %1937 = vmatprep.subr.bf16.mxu0 0
        %1938 = vmatpush2.bf16.xpose.msra.mxu0 0
        %1939 = vmatprep.subr.bf16.mxu0 0
        %1940 = vmatpush2.bf16.xpose.msra.mxu0 0
        %1941 = vmatprep.subr.bf16.mxu0 0
        %1942 = vmatpush2.bf16.xpose.msra.mxu0 0
        %1943 = vmatprep.subr.bf16.mxu0 0
        %1944 = vmatpush2.bf16.xpose.msra.mxu0 0
        %1945 = vmatprep.subr.bf16.mxu0 0
        %1946 = vmatpush2.bf16.xpose.msra.mxu0 0
        %1947 = vmatprep.subr.bf16.mxu0 0
        %1948 = vmatpush2.bf16.xpose.msra.mxu0 0
        %1949 = vmatprep.subr.bf16.mxu0 0
        %1950 = vmatpush2.bf16.xpose.msra.mxu0 0
        %1951 = vmatprep.mubr.bf16.mxu0 0
        %1952 = vmatmul.mubr.bf16.gmra.mxu0 %v1914
        %v1953 = vpop.f32.mrf.mxu0
        %v1954 = vadd.f32 0.0, %v1953
        %v1955 = vpop.f32.mrf.mxu0
        %v1956 = vpop.f32.mrf.mxu0
        %v1957 = vpop.f32.mrf.mxu0
        %1958 = vdwg.mxu0
        %1960 = vrot.lane.b32.xlu0 %v1787, 64
        %v1961 = vpop.permute.xlu0 %1960
        %v1963 = vsel %vm1814, %v1787, 0
        %v1966 = vsel %vm1814, %v1961, 0
        %1968 = vmatprep.subr.bf16.mxu0 0
        %1969 = vmatpush1.bf16.xpose.msra.mxu0 0
        %1970 = vmatprep.subr.bf16.mxu0 0
        %1971 = vmatpush1.bf16.xpose.msra.mxu0 0
        %1972 = vmatprep.subr.bf16.mxu0 0
        %1973 = vmatpush1.bf16.xpose.msra.mxu0 0
        %1974 = vmatprep.subr.bf16.mxu0 0
        %1975 = vmatpush1.bf16.xpose.msra.mxu0 0
        %1976 = vmatprep.subr.bf16.mxu0 0
        %1977 = vmatpush1.bf16.xpose.msra.mxu0 0
        %1978 = vmatprep.subr.bf16.mxu0 0
        %1979 = vmatpush1.bf16.xpose.msra.mxu0 0
        %1980 = vmatprep.subr.bf16.mxu0 0
        %1981 = vmatpush1.bf16.xpose.msra.mxu0 0
        %1982 = vmatprep.subr.bf16.mxu0 0
        %1983 = vmatpush1.bf16.xpose.msra.mxu0 %v1966
        %1984 = vmatprep.subr.bf16.mxu0 0
        %1985 = vmatpush2.bf16.xpose.msra.mxu0 0
        %1986 = vmatprep.subr.bf16.mxu0 0
        %1987 = vmatpush2.bf16.xpose.msra.mxu0 0
        %1988 = vmatprep.subr.bf16.mxu0 0
        %1989 = vmatpush2.bf16.xpose.msra.mxu0 0
        %1990 = vmatprep.subr.bf16.mxu0 0
        %1991 = vmatpush2.bf16.xpose.msra.mxu0 0
        %1992 = vmatprep.subr.bf16.mxu0 0
        %1993 = vmatpush2.bf16.xpose.msra.mxu0 0
        %1994 = vmatprep.subr.bf16.mxu0 0
        %1995 = vmatpush2.bf16.xpose.msra.mxu0 0
        %1996 = vmatprep.subr.bf16.mxu0 0
        %1997 = vmatpush2.bf16.xpose.msra.mxu0 0
        %1998 = vmatprep.subr.bf16.mxu0 0
        %1999 = vmatpush2.bf16.xpose.msra.mxu0 0
        %2000 = vmatprep.mubr.bf16.mxu0 0
        %2001 = vmatmul.mubr.bf16.gmra.mxu0 %v1963
        %v2002 = vpop.f32.mrf.mxu0
        %v2003 = vadd.f32 0.0, %v2002
        %v2004 = vpop.f32.mrf.mxu0
        %v2005 = vpop.f32.mrf.mxu0
        %v2006 = vpop.f32.mrf.mxu0
        %2007 = vdwg.mxu0
        %vm2008 = vcmask 64512
        %v2009 = vsel %vm2008, %v1856, -inf
        %2010 = vmax.xlane.f32.xlu0 %v2009
        %v2011 = vpop.xlane.xlu0 %2010
        %v2012 = vsel %vm2008, %v1905, -inf
        %2013 = vmax.xlane.f32.xlu0 %v2012
        %v2014 = vpop.xlane.xlu0 %2013
        %v2015 = vsel %vm2008, %v1954, -inf
        %2016 = vmax.xlane.f32.xlu0 %v2015
        %v2017 = vpop.xlane.xlu0 %2016
        %v2018 = vsel %vm2008, %v2003, -inf
        %2019 = vmax.xlane.f32.xlu0 %v2018
        %v2020 = vpop.xlane.xlu0 %2019
        %v2021 = vsub.f32 %v1856, %v2011
        %v2022 = vsub.f32 %v1905, %v2014
        %v2023 = vsub.f32 %v1954, %v2017
        %v2024 = vsub.f32 %v2003, %v2020
        %v2025 = vmul.f32 %v2021, 1.442695
        %v2026 = vpow.pop %v2025
        %v2027 = vmul.f32 %v2022, 1.442695
        %v2028 = vpow.pop %v2027
        %v2029 = vmul.f32 %v2023, 1.442695
        %v2030 = vpow.pop %v2029
        %v2031 = vmul.f32 %v2024, 1.442695
        %v2032 = vpow.pop %v2031
        %v2033 = vsel %vm2008, %v2026, 0.0
        %2034 = vadd.xlane.f32.xlu0 %v2033
        %v2035 = vpop.xlane.xlu0 %2034
        %v2036 = vsel %vm2008, %v2028, 0.0
        %2037 = vadd.xlane.f32.xlu0 %v2036
        %v2038 = vpop.xlane.xlu0 %2037
        %v2039 = vsel %vm2008, %v2030, 0.0
        %2040 = vadd.xlane.f32.xlu0 %v2039
        %v2041 = vpop.xlane.xlu0 %2040
        %v2042 = vsel %vm2008, %v2032, 0.0
        %2043 = vadd.xlane.f32.xlu0 %v2042
        %v2044 = vpop.xlane.xlu0 %2043
        %v2045 = vrcp.pop %v2035
        %v2046 = vrcp.pop %v2038
        %v2047 = vrcp.pop %v2041
        %v2048 = vrcp.pop %v2044
        %v2049 = vmul.f32 %v2026, %v2045
        %v2050 = vmul.f32 %v2028, %v2046
        %v2051 = vmul.f32 %v2030, %v2047
        %v2052 = vmul.f32 %v2032, %v2048
        %v2053 = vpack.c.bf16 %v2049, %v2049
        %v2054 = vpack.c.bf16 %v2050, %v2050
        %v2055 = vpack.c.bf16 %v2051, %v2051
        %v2056 = vpack.c.bf16 %v2052, %v2052
        %v2058 = vsel %vm2008, %v2053, 0
        %vm2060 = vcmask 1043456
        %v2062 = vsel %vm2060, %v1798, 0
        %2064 = vmatprep.subr.bf16.mxu0 0
        %2065 = vmatpush1.bf16.msra.mxu0 0
        %2066 = vmatprep.subr.bf16.mxu0 0
        %2067 = vmatpush1.bf16.msra.mxu0 0
        %2068 = vmatprep.subr.bf16.mxu0 0
        %2069 = vmatpush1.bf16.msra.mxu0 0
        %2070 = vmatprep.subr.bf16.mxu0 0
        %2071 = vmatpush1.bf16.msra.mxu0 0
        %2072 = vmatprep.subr.bf16.mxu0 0
        %2073 = vmatpush1.bf16.msra.mxu0 0
        %2074 = vmatprep.subr.bf16.mxu0 0
        %2075 = vmatpush1.bf16.msra.mxu0 0
        %2076 = vmatprep.subr.bf16.mxu0 0
        %2077 = vmatpush1.bf16.msra.mxu0 0
        %2078 = vmatprep.subr.bf16.mxu0 0
        %2079 = vmatpush1.bf16.msra.mxu0 %v2062
        %2080 = vmatprep.subr.bf16.mxu0 0
        %2081 = vmatpush2.bf16.msra.mxu0 0
        %2082 = vmatprep.subr.bf16.mxu0 0
        %2083 = vmatpush2.bf16.msra.mxu0 0
        %2084 = vmatprep.subr.bf16.mxu0 0
        %2085 = vmatpush2.bf16.msra.mxu0 0
        %2086 = vmatprep.subr.bf16.mxu0 0
        %2087 = vmatpush2.bf16.msra.mxu0 0
        %2088 = vmatprep.subr.bf16.mxu0 0
        %2089 = vmatpush2.bf16.msra.mxu0 0
        %2090 = vmatprep.subr.bf16.mxu0 0
        %2091 = vmatpush2.bf16.msra.mxu0 0
        %2092 = vmatprep.subr.bf16.mxu0 0
        %2093 = vmatpush2.bf16.msra.mxu0 0
        %2094 = vmatprep.subr.bf16.mxu0 0
        %2095 = vmatpush2.bf16.msra.mxu0 0
        %2096 = vmatprep.mubr.bf16.mxu0 0
        %2097 = vmatmul.mubr.bf16.gmra.mxu0 %v2058
        %v2098 = vpop.f32.mrf.mxu0
        %v2099 = vadd.f32 0.0, %v2098
        %v2100 = vpop.f32.mrf.mxu0
        %v2101 = vpop.f32.mrf.mxu0
        %v2102 = vpop.f32.mrf.mxu0
        %2103 = vdwg.mxu0
        %v2105 = vsel %vm2008, %v2054, 0
        %v2108 = vsel %vm2060, %v1799, 0
        %2110 = vmatprep.subr.bf16.mxu0 0
        %2111 = vmatpush1.bf16.msra.mxu0 0
        %2112 = vmatprep.subr.bf16.mxu0 0
        %2113 = vmatpush1.bf16.msra.mxu0 0
        %2114 = vmatprep.subr.bf16.mxu0 0
        %2115 = vmatpush1.bf16.msra.mxu0 0
        %2116 = vmatprep.subr.bf16.mxu0 0
        %2117 = vmatpush1.bf16.msra.mxu0 0
        %2118 = vmatprep.subr.bf16.mxu0 0
        %2119 = vmatpush1.bf16.msra.mxu0 0
        %2120 = vmatprep.subr.bf16.mxu0 0
        %2121 = vmatpush1.bf16.msra.mxu0 0
        %2122 = vmatprep.subr.bf16.mxu0 0
        %2123 = vmatpush1.bf16.msra.mxu0 0
        %2124 = vmatprep.subr.bf16.mxu0 0
        %2125 = vmatpush1.bf16.msra.mxu0 %v2108
        %2126 = vmatprep.subr.bf16.mxu0 0
        %2127 = vmatpush2.bf16.msra.mxu0 0
        %2128 = vmatprep.subr.bf16.mxu0 0
        %2129 = vmatpush2.bf16.msra.mxu0 0
        %2130 = vmatprep.subr.bf16.mxu0 0
        %2131 = vmatpush2.bf16.msra.mxu0 0
        %2132 = vmatprep.subr.bf16.mxu0 0
        %2133 = vmatpush2.bf16.msra.mxu0 0
        %2134 = vmatprep.subr.bf16.mxu0 0
        %2135 = vmatpush2.bf16.msra.mxu0 0
        %2136 = vmatprep.subr.bf16.mxu0 0
        %2137 = vmatpush2.bf16.msra.mxu0 0
        %2138 = vmatprep.subr.bf16.mxu0 0
        %2139 = vmatpush2.bf16.msra.mxu0 0
        %2140 = vmatprep.subr.bf16.mxu0 0
        %2141 = vmatpush2.bf16.msra.mxu0 0
        %2142 = vmatprep.mubr.bf16.mxu0 0
        %2143 = vmatmul.mubr.bf16.gmra.mxu0 %v2105
        %v2144 = vpop.f32.mrf.mxu0
        %v2145 = vadd.f32 0.0, %v2144
        %v2146 = vpop.f32.mrf.mxu0
        %v2147 = vpop.f32.mrf.mxu0
        %v2148 = vpop.f32.mrf.mxu0
        %2149 = vdwg.mxu0
        %v2151 = vsel %vm2008, %v2055, 0
        %v2154 = vsel %vm2060, %v1800, 0
        %2156 = vmatprep.subr.bf16.mxu0 0
        %2157 = vmatpush1.bf16.msra.mxu0 0
        %2158 = vmatprep.subr.bf16.mxu0 0
        %2159 = vmatpush1.bf16.msra.mxu0 0
        %2160 = vmatprep.subr.bf16.mxu0 0
        %2161 = vmatpush1.bf16.msra.mxu0 0
        %2162 = vmatprep.subr.bf16.mxu0 0
        %2163 = vmatpush1.bf16.msra.mxu0 0
        %2164 = vmatprep.subr.bf16.mxu0 0
        %2165 = vmatpush1.bf16.msra.mxu0 0
        %2166 = vmatprep.subr.bf16.mxu0 0
        %2167 = vmatpush1.bf16.msra.mxu0 0
        %2168 = vmatprep.subr.bf16.mxu0 0
        %2169 = vmatpush1.bf16.msra.mxu0 0
        %2170 = vmatprep.subr.bf16.mxu0 0
        %2171 = vmatpush1.bf16.msra.mxu0 %v2154
        %2172 = vmatprep.subr.bf16.mxu0 0
        %2173 = vmatpush2.bf16.msra.mxu0 0
        %2174 = vmatprep.subr.bf16.mxu0 0
        %2175 = vmatpush2.bf16.msra.mxu0 0
        %2176 = vmatprep.subr.bf16.mxu0 0
        %2177 = vmatpush2.bf16.msra.mxu0 0
        %2178 = vmatprep.subr.bf16.mxu0 0
        %2179 = vmatpush2.bf16.msra.mxu0 0
        %2180 = vmatprep.subr.bf16.mxu0 0
        %2181 = vmatpush2.bf16.msra.mxu0 0
        %2182 = vmatprep.subr.bf16.mxu0 0
        %2183 = vmatpush2.bf16.msra.mxu0 0
        %2184 = vmatprep.subr.bf16.mxu0 0
        %2185 = vmatpush2.bf16.msra.mxu0 0
        %2186 = vmatprep.subr.bf16.mxu0 0
        %2187 = vmatpush2.bf16.msra.mxu0 0
        %2188 = vmatprep.mubr.bf16.mxu0 0
        %2189 = vmatmul.mubr.bf16.gmra.mxu0 %v2151
        %v2190 = vpop.f32.mrf.mxu0
        %v2191 = vadd.f32 0.0, %v2190
        %v2192 = vpop.f32.mrf.mxu0
        %v2193 = vpop.f32.mrf.mxu0
        %v2194 = vpop.f32.mrf.mxu0
        %2195 = vdwg.mxu0
        %v2197 = vsel %vm2008, %v2056, 0
        %v2200 = vsel %vm2060, %v1801, 0
        %2202 = vmatprep.subr.bf16.mxu0 0
        %2203 = vmatpush1.bf16.msra.mxu0 0
        %2204 = vmatprep.subr.bf16.mxu0 0
        %2205 = vmatpush1.bf16.msra.mxu0 0
        %2206 = vmatprep.subr.bf16.mxu0 0
        %2207 = vmatpush1.bf16.msra.mxu0 0
        %2208 = vmatprep.subr.bf16.mxu0 0
        %2209 = vmatpush1.bf16.msra.mxu0 0
        %2210 = vmatprep.subr.bf16.mxu0 0
        %2211 = vmatpush1.bf16.msra.mxu0 0
        %2212 = vmatprep.subr.bf16.mxu0 0
        %2213 = vmatpush1.bf16.msra.mxu0 0
        %2214 = vmatprep.subr.bf16.mxu0 0
        %2215 = vmatpush1.bf16.msra.mxu0 0
        %2216 = vmatprep.subr.bf16.mxu0 0
        %2217 = vmatpush1.bf16.msra.mxu0 %v2200
        %2218 = vmatprep.subr.bf16.mxu0 0
        %2219 = vmatpush2.bf16.msra.mxu0 0
        %2220 = vmatprep.subr.bf16.mxu0 0
        %2221 = vmatpush2.bf16.msra.mxu0 0
        %2222 = vmatprep.subr.bf16.mxu0 0
        %2223 = vmatpush2.bf16.msra.mxu0 0
        %2224 = vmatprep.subr.bf16.mxu0 0
        %2225 = vmatpush2.bf16.msra.mxu0 0
        %2226 = vmatprep.subr.bf16.mxu0 0
        %2227 = vmatpush2.bf16.msra.mxu0 0
        %2228 = vmatprep.subr.bf16.mxu0 0
        %2229 = vmatpush2.bf16.msra.mxu0 0
        %2230 = vmatprep.subr.bf16.mxu0 0
        %2231 = vmatpush2.bf16.msra.mxu0 0
        %2232 = vmatprep.subr.bf16.mxu0 0
        %2233 = vmatpush2.bf16.msra.mxu0 0
        %2234 = vmatprep.mubr.bf16.mxu0 0
        %2235 = vmatmul.mubr.bf16.gmra.mxu0 %v2197
        %v2236 = vpop.f32.mrf.mxu0
        %v2237 = vadd.f32 0.0, %v2236
        %v2238 = vpop.f32.mrf.mxu0
        %v2239 = vpop.f32.mrf.mxu0
        %v2240 = vpop.f32.mrf.mxu0
        %2241 = vdwg.mxu0
        %v2242 = vpack.c.bf16 %v2099, %v2099
        %v2243 = vpack.c.bf16 %v2145, %v2145
        %v2244 = vpack.c.bf16 %v2191, %v2191
        %v2245 = vpack.c.bf16 %v2237, %v2237
        %v2248 = vunpack.c.l.b16 %v1802
        %v2249 = vunpack.c.l.b16 %v1803
        %v2250 = vpack.c.b16 %v2249, %v2248
        %v2253 = vsel %vm1814, %v2242, 0
        %2255 = vmatprep.subr.bf16.mxu0 0
        %2256 = vmatpush1.bf16.msra.mxu0 0
        %2257 = vmatprep.subr.bf16.mxu0 0
        %2258 = vmatpush1.bf16.msra.mxu0 0
        %2259 = vmatprep.subr.bf16.mxu0 0
        %2260 = vmatpush1.bf16.msra.mxu0 0
        %2261 = vmatprep.subr.bf16.mxu0 0
        %2262 = vmatpush1.bf16.msra.mxu0 0
        %2263 = vmatprep.subr.bf16.mxu0 0
        %2264 = vmatpush1.bf16.msra.mxu0 0
        %2265 = vmatprep.subr.bf16.mxu0 0
        %2266 = vmatpush1.bf16.msra.mxu0 0
        %2267 = vmatprep.subr.bf16.mxu0 0
        %2268 = vmatpush1.bf16.msra.mxu0 0
        %2269 = vmatprep.subr.bf16.mxu0 0
        %2270 = vmatpush1.bf16.msra.mxu0 %v2250
        %2271 = vmatprep.subr.bf16.mxu0 0
        %2272 = vmatpush2.bf16.msra.mxu0 0
        %2273 = vmatprep.subr.bf16.mxu0 0
        %2274 = vmatpush2.bf16.msra.mxu0 0
        %2275 = vmatprep.subr.bf16.mxu0 0
        %2276 = vmatpush2.bf16.msra.mxu0 0
        %2277 = vmatprep.subr.bf16.mxu0 0
        %2278 = vmatpush2.bf16.msra.mxu0 0
        %2279 = vmatprep.subr.bf16.mxu0 0
        %2280 = vmatpush2.bf16.msra.mxu0 0
        %2281 = vmatprep.subr.bf16.mxu0 0
        %2282 = vmatpush2.bf16.msra.mxu0 0
        %2283 = vmatprep.subr.bf16.mxu0 0
        %2284 = vmatpush2.bf16.msra.mxu0 0
        %2285 = vmatprep.subr.bf16.mxu0 0
        %2286 = vmatpush2.bf16.msra.mxu0 0
        %2287 = vmatprep.mubr.bf16.mxu0 0
        %2288 = vmatmul.mubr.bf16.gmra.mxu0 %v2253
        %v2289 = vpop.f32.mrf.mxu0
        %v2290 = vadd.f32 0.0, %v2289
        %v2291 = vpop.f32.mrf.mxu0
        %v2292 = vpop.f32.mrf.mxu0
        %v2293 = vpop.f32.mrf.mxu0
        %2294 = vdwg.mxu0
        %v2297 = vunpack.c.l.b16 %v1804
        %v2298 = vunpack.c.l.b16 %v1805
        %v2299 = vpack.c.b16 %v2298, %v2297
        %v2302 = vsel %vm1814, %v2243, 0
        %2304 = vmatprep.subr.bf16.mxu0 0
        %2305 = vmatpush1.bf16.msra.mxu0 0
        %2306 = vmatprep.subr.bf16.mxu0 0
        %2307 = vmatpush1.bf16.msra.mxu0 0
        %2308 = vmatprep.subr.bf16.mxu0 0
        %2309 = vmatpush1.bf16.msra.mxu0 0
        %2310 = vmatprep.subr.bf16.mxu0 0
        %2311 = vmatpush1.bf16.msra.mxu0 0
        %2312 = vmatprep.subr.bf16.mxu0 0
        %2313 = vmatpush1.bf16.msra.mxu0 0
        %2314 = vmatprep.subr.bf16.mxu0 0
        %2315 = vmatpush1.bf16.msra.mxu0 0
        %2316 = vmatprep.subr.bf16.mxu0 0
        %2317 = vmatpush1.bf16.msra.mxu0 0
        %2318 = vmatprep.subr.bf16.mxu0 0
        %2319 = vmatpush1.bf16.msra.mxu0 %v2299
        %2320 = vmatprep.subr.bf16.mxu0 0
        %2321 = vmatpush2.bf16.msra.mxu0 0
        %2322 = vmatprep.subr.bf16.mxu0 0
        %2323 = vmatpush2.bf16.msra.mxu0 0
        %2324 = vmatprep.subr.bf16.mxu0 0
        %2325 = vmatpush2.bf16.msra.mxu0 0
        %2326 = vmatprep.subr.bf16.mxu0 0
        %2327 = vmatpush2.bf16.msra.mxu0 0
        %2328 = vmatprep.subr.bf16.mxu0 0
        %2329 = vmatpush2.bf16.msra.mxu0 0
        %2330 = vmatprep.subr.bf16.mxu0 0
        %2331 = vmatpush2.bf16.msra.mxu0 0
        %2332 = vmatprep.subr.bf16.mxu0 0
        %2333 = vmatpush2.bf16.msra.mxu0 0
        %2334 = vmatprep.subr.bf16.mxu0 0
        %2335 = vmatpush2.bf16.msra.mxu0 0
        %2336 = vmatprep.mubr.bf16.mxu0 0
        %2337 = vmatmul.mubr.bf16.gmra.mxu0 %v2302
        %v2338 = vpop.f32.mrf.mxu0
        %v2339 = vadd.f32 0.0, %v2338
        %v2340 = vpop.f32.mrf.mxu0
        %v2341 = vpop.f32.mrf.mxu0
        %v2342 = vpop.f32.mrf.mxu0
        %2343 = vdwg.mxu0
        %v2346 = vunpack.c.l.b16 %v1806
        %v2347 = vunpack.c.l.b16 %v1807
        %v2348 = vpack.c.b16 %v2347, %v2346
        %v2351 = vsel %vm1814, %v2244, 0
        %2353 = vmatprep.subr.bf16.mxu0 0
        %2354 = vmatpush1.bf16.msra.mxu0 0
        %2355 = vmatprep.subr.bf16.mxu0 0
        %2356 = vmatpush1.bf16.msra.mxu0 0
        %2357 = vmatprep.subr.bf16.mxu0 0
        %2358 = vmatpush1.bf16.msra.mxu0 0
        %2359 = vmatprep.subr.bf16.mxu0 0
        %2360 = vmatpush1.bf16.msra.mxu0 0
        %2361 = vmatprep.subr.bf16.mxu0 0
        %2362 = vmatpush1.bf16.msra.mxu0 0
        %2363 = vmatprep.subr.bf16.mxu0 0
        %2364 = vmatpush1.bf16.msra.mxu0 0
        %2365 = vmatprep.subr.bf16.mxu0 0
        %2366 = vmatpush1.bf16.msra.mxu0 0
        %2367 = vmatprep.subr.bf16.mxu0 0
        %2368 = vmatpush1.bf16.msra.mxu0 %v2348
        %2369 = vmatprep.subr.bf16.mxu0 0
        %2370 = vmatpush2.bf16.msra.mxu0 0
        %2371 = vmatprep.subr.bf16.mxu0 0
        %2372 = vmatpush2.bf16.msra.mxu0 0
        %2373 = vmatprep.subr.bf16.mxu0 0
        %2374 = vmatpush2.bf16.msra.mxu0 0
        %2375 = vmatprep.subr.bf16.mxu0 0
        %2376 = vmatpush2.bf16.msra.mxu0 0
        %2377 = vmatprep.subr.bf16.mxu0 0
        %2378 = vmatpush2.bf16.msra.mxu0 0
        %2379 = vmatprep.subr.bf16.mxu0 0
        %2380 = vmatpush2.bf16.msra.mxu0 0
        %2381 = vmatprep.subr.bf16.mxu0 0
        %2382 = vmatpush2.bf16.msra.mxu0 0
        %2383 = vmatprep.subr.bf16.mxu0 0
        %2384 = vmatpush2.bf16.msra.mxu0 0
        %2385 = vmatprep.mubr.bf16.mxu0 0
        %2386 = vmatmul.mubr.bf16.gmra.mxu0 %v2351
        %v2387 = vpop.f32.mrf.mxu0
        %v2388 = vadd.f32 0.0, %v2387
        %v2389 = vpop.f32.mrf.mxu0
        %v2390 = vpop.f32.mrf.mxu0
        %v2391 = vpop.f32.mrf.mxu0
        %2392 = vdwg.mxu0
        %v2395 = vunpack.c.l.b16 %v1808
        %v2396 = vunpack.c.l.b16 %v1809
        %v2397 = vpack.c.b16 %v2396, %v2395
        %v2400 = vsel %vm1814, %v2245, 0
        %2402 = vmatprep.subr.bf16.mxu0 0
        %2403 = vmatpush1.bf16.msra.mxu0 0
        %2404 = vmatprep.subr.bf16.mxu0 0
        %2405 = vmatpush1.bf16.msra.mxu0 0
        %2406 = vmatprep.subr.bf16.mxu0 0
        %2407 = vmatpush1.bf16.msra.mxu0 0
        %2408 = vmatprep.subr.bf16.mxu0 0
        %2409 = vmatpush1.bf16.msra.mxu0 0
        %2410 = vmatprep.subr.bf16.mxu0 0
        %2411 = vmatpush1.bf16.msra.mxu0 0
        %2412 = vmatprep.subr.bf16.mxu0 0
        %2413 = vmatpush1.bf16.msra.mxu0 0
        %2414 = vmatprep.subr.bf16.mxu0 0
        %2415 = vmatpush1.bf16.msra.mxu0 0
        %2416 = vmatprep.subr.bf16.mxu0 0
        %2417 = vmatpush1.bf16.msra.mxu0 %v2397
        %2418 = vmatprep.subr.bf16.mxu0 0
        %2419 = vmatpush2.bf16.msra.mxu0 0
        %2420 = vmatprep.subr.bf16.mxu0 0
        %2421 = vmatpush2.bf16.msra.mxu0 0
        %2422 = vmatprep.subr.bf16.mxu0 0
        %2423 = vmatpush2.bf16.msra.mxu0 0
        %2424 = vmatprep.subr.bf16.mxu0 0
        %2425 = vmatpush2.bf16.msra.mxu0 0
        %2426 = vmatprep.subr.bf16.mxu0 0
        %2427 = vmatpush2.bf16.msra.mxu0 0
        %2428 = vmatprep.subr.bf16.mxu0 0
        %2429 = vmatpush2.bf16.msra.mxu0 0
        %2430 = vmatprep.subr.bf16.mxu0 0
        %2431 = vmatpush2.bf16.msra.mxu0 0
        %2432 = vmatprep.subr.bf16.mxu0 0
        %2433 = vmatpush2.bf16.msra.mxu0 0
        %2434 = vmatprep.mubr.bf16.mxu0 0
        %2435 = vmatmul.mubr.bf16.gmra.mxu0 %v2400
        %v2436 = vpop.f32.mrf.mxu0
        %v2437 = vadd.f32 0.0, %v2436
        %v2438 = vpop.f32.mrf.mxu0
        %v2439 = vpop.f32.mrf.mxu0
        %v2440 = vpop.f32.mrf.mxu0
        %2441 = vdwg.mxu0
        %v2442 = vsel %vm1647, %v2290, 0.0
        %v2443 = vsel %vm1647, %v2339, 0.0
        %v2444 = vadd.f32 %v2442, %v2443
        %v2445 = vsel %vm1647, %v2388, 0.0
        %v2446 = vadd.f32 %v2444, %v2445
        %v2447 = vsel %vm1647, %v2437, 0.0
        %v2448 = vadd.f32 %v2446, %v2447
        %v2450 = vlaneseq
        %v2451 = vshrl.u32 %v2450, 7
        %v2452 = vsub.s32 0, %v2451
        %v2453 = vrot.slane %v1810, %v2452
        %v2455 = vadd.f32 %v2448, %v2453
        %v2456 = vadd.f32 %v1604, %v2455
        %v2457 = vld [vmem:[%s1580] sm:$0x1]
        %v2458 = vld [vmem:[%s1583] sm:$0x1]
        %v2459 = vsel %vm1647, %v2456, 0.0
        %2460 = vadd.xlane.f32.xlu0 %v2459
        %v2461 = vpop.xlane.xlu0 %2460
        %v2462 = vrcp.pop 64.0
        %v2463 = vmul.f32 %v2461, %v2462
        %v2464 = vsub.f32 %v2456, %v2463
        %v2465 = vmul.f32 %v2464, %v2464
        %v2466 = vsel %vm1647, %v2465, 0.0
        %2467 = vadd.xlane.f32.xlu0 %v2466
        %v2468 = vpop.xlane.xlu0 %2467
        %v2469 = vmul.f32 %v2468, %v2462
        %v2470 = vadd.f32 %v2469, 1e-05
        %v2471 = vrsqrt.pop %v2470
        %v2472 = vmul.f32 %v2464, %v2471
        %v2474 = vlaneseq
        %v2475 = vshrl.u32 %v2474, 7
        %v2476 = vsub.s32 0, %v2475
        %v2477 = vrot.slane %v2457, %v2476
        %v2479 = vmul.f32 %v2472, %v2477
        %v2481 = vlaneseq
        %v2482 = vshrl.u32 %v2481, 7
        %v2483 = vsub.s32 0, %v2482
        %v2484 = vrot.slane %v2458, %v2483
        %v2486 = vadd.f32 %v2479, %v2484
        %v2487 = vadd.f32 %v2486, %v1605
        %v2488 = vpack.c.bf16 %v2487, %v2487
        %v2489 = vld [vmem:[%s1306] sm:$0xf]
        %v2490 = vld [vmem:[%s1306 + $0x4] sm:$0xf]
        %v2491 = vld [vmem:[%s1306 + $0x8] sm:$0xf]
        %v2492 = vld [vmem:[%s1306 + $0xc] sm:$0xf]
        %v2493 = vld [vmem:[%s1306 + $0x10] sm:$0xf]
        %v2494 = vld [vmem:[%s1306 + $0x14] sm:$0xf]
        %v2495 = vld [vmem:[%s1306 + $0x18] sm:$0xf]
        %v2496 = vld [vmem:[%s1306 + $0x1c] sm:$0xf]
        %v2497 = vld [vmem:[%s1557] sm:$0x1]
        %v2499 = vlaneseq
        %v2500 = vshrl.u32 %v2499, 7
        %v2501 = vsub.s32 0, %v2500
        %v2502 = vrot.slane %v2497, %v2501
        %v2512 = vunpack.c.l.b16 %v2489
        %v2513 = vunpack.c.l.b16 %v2490
        %v2514 = vunpack.c.l.b16 %v2491
        %v2515 = vunpack.c.l.b16 %v2492
        %v2516 = vunpack.c.l.b16 %v2493
        %v2517 = vunpack.c.l.b16 %v2494
        %v2518 = vunpack.c.l.b16 %v2495
        %v2519 = vunpack.c.l.b16 %v2496
        %v2520 = vpack.c.b16 %v2513, %v2512
        %v2521 = vpack.c.b16 %v2515, %v2514
        %v2522 = vpack.c.b16 %v2517, %v2516
        %v2523 = vpack.c.b16 %v2519, %v2518
        %v2529 = vsel %vm1647, %v2488, 0
        %2531 = vmatprep.subr.bf16.mxu0 0
        %2532 = vmatpush1.bf16.msra.mxu0 0
        %2533 = vmatprep.subr.bf16.mxu0 0
        %2534 = vmatpush1.bf16.msra.mxu0 0
        %2535 = vmatprep.subr.bf16.mxu0 0
        %2536 = vmatpush1.bf16.msra.mxu0 0
        %2537 = vmatprep.subr.bf16.mxu0 0
        %2538 = vmatpush1.bf16.msra.mxu0 0
        %2539 = vmatprep.subr.bf16.mxu0 0
        %2540 = vmatpush1.bf16.msra.mxu0 %v2523
        %2541 = vmatprep.subr.bf16.mxu0 0
        %2542 = vmatpush1.bf16.msra.mxu0 %v2522
        %2543 = vmatprep.subr.bf16.mxu0 0
        %2544 = vmatpush1.bf16.msra.mxu0 %v2521
        %2545 = vmatprep.subr.bf16.mxu0 0
        %2546 = vmatpush1.bf16.msra.mxu0 %v2520
        %2547 = vmatprep.subr.bf16.mxu0 0
        %2548 = vmatpush2.bf16.msra.mxu0 0
        %2549 = vmatprep.subr.bf16.mxu0 0
        %2550 = vmatpush2.bf16.msra.mxu0 0
        %2551 = vmatprep.subr.bf16.mxu0 0
        %2552 = vmatpush2.bf16.msra.mxu0 0
        %2553 = vmatprep.subr.bf16.mxu0 0
        %2554 = vmatpush2.bf16.msra.mxu0 0
        %2555 = vmatprep.subr.bf16.mxu0 0
        %2556 = vmatpush2.bf16.msra.mxu0 0
        %2557 = vmatprep.subr.bf16.mxu0 0
        %2558 = vmatpush2.bf16.msra.mxu0 0
        %2559 = vmatprep.subr.bf16.mxu0 0
        %2560 = vmatpush2.bf16.msra.mxu0 0
        %2561 = vmatprep.subr.bf16.mxu0 0
        %2562 = vmatpush2.bf16.msra.mxu0 0
        %2563 = vmatprep.mubr.bf16.mxu0 0
        %2564 = vmatmul.mubr.bf16.gmra.mxu0 %v2529
        %v2565 = vpop.f32.mrf.mxu0
        %v2566 = vadd.f32 %v2502, %v2565
        %v2567 = vpop.f32.mrf.mxu0
        %v2568 = vpop.f32.mrf.mxu0
        %v2569 = vpop.f32.mrf.mxu0
        %2570 = vdwg.mxu0
        %v2571 = vld [vmem:[%s1288] sm:$0xf]
        %v2572 = vld [vmem:[%s1288 + $0x4] sm:$0xf]
        %v2573 = vld [vmem:[%s1315] sm:$0xf]
        %v2574 = vld [vmem:[%s1315 + $0x4] sm:$0xf]
        %v2575 = vld [vmem:[%s1315 + $0x8] sm:$0xf]
        %v2576 = vld [vmem:[%s1315 + $0xc] sm:$0xf]
        %v2577 = vld [vmem:[%s1315 + $0x10] sm:$0xf]
        %v2578 = vld [vmem:[%s1315 + $0x14] sm:$0xf]
        %v2579 = vld [vmem:[%s1315 + $0x18] sm:$0xf]
        %v2580 = vld [vmem:[%s1315 + $0x1c] sm:$0xf]
        %v2581 = vld [vmem:[%s1560] sm:$0x1]
        %v2583 = vlaneseq
        %v2584 = vshrl.u32 %v2583, 7
        %v2585 = vsub.s32 0, %v2584
        %v2586 = vrot.slane %v2581, %v2585
        %v2590 = vunpack.c.l.b16 %v2571
        %v2591 = vunpack.c.l.b16 %v2572
        %v2592 = vpack.c.b16 %v2591, %v2590
        %v2601 = vunpack.c.l.b16 %v2573
        %v2602 = vunpack.c.l.b16 %v2574
        %v2603 = vunpack.c.l.b16 %v2575
        %v2604 = vunpack.c.l.b16 %v2576
        %v2605 = vunpack.c.l.b16 %v2577
        %v2606 = vunpack.c.l.b16 %v2578
        %v2607 = vunpack.c.l.b16 %v2579
        %v2608 = vunpack.c.l.b16 %v2580
        %v2609 = vpack.c.b16 %v2602, %v2601
        %v2610 = vpack.c.b16 %v2604, %v2603
        %v2611 = vpack.c.b16 %v2606, %v2605
        %v2612 = vpack.c.b16 %v2608, %v2607
        %v2618 = vsel %vm1647, %v2592, 0
        %2620 = vmatprep.subr.bf16.mxu0 0
        %2621 = vmatpush1.bf16.msra.mxu0 0
        %2622 = vmatprep.subr.bf16.mxu0 0
        %2623 = vmatpush1.bf16.msra.mxu0 0
        %2624 = vmatprep.subr.bf16.mxu0 0
        %2625 = vmatpush1.bf16.msra.mxu0 0
        %2626 = vmatprep.subr.bf16.mxu0 0
        %2627 = vmatpush1.bf16.msra.mxu0 0
        %2628 = vmatprep.subr.bf16.mxu0 0
        %2629 = vmatpush1.bf16.msra.mxu0 %v2612
        %2630 = vmatprep.subr.bf16.mxu0 0
        %2631 = vmatpush1.bf16.msra.mxu0 %v2611
        %2632 = vmatprep.subr.bf16.mxu0 0
        %2633 = vmatpush1.bf16.msra.mxu0 %v2610
        %2634 = vmatprep.subr.bf16.mxu0 0
        %2635 = vmatpush1.bf16.msra.mxu0 %v2609
        %2636 = vmatprep.subr.bf16.mxu0 0
        %2637 = vmatpush2.bf16.msra.mxu0 0
        %2638 = vmatprep.subr.bf16.mxu0 0
        %2639 = vmatpush2.bf16.msra.mxu0 0
        %2640 = vmatprep.subr.bf16.mxu0 0
        %2641 = vmatpush2.bf16.msra.mxu0 0
        %2642 = vmatprep.subr.bf16.mxu0 0
        %2643 = vmatpush2.bf16.msra.mxu0 0
        %2644 = vmatprep.subr.bf16.mxu0 0
        %2645 = vmatpush2.bf16.msra.mxu0 0
        %2646 = vmatprep.subr.bf16.mxu0 0
        %2647 = vmatpush2.bf16.msra.mxu0 0
        %2648 = vmatprep.subr.bf16.mxu0 0
        %2649 = vmatpush2.bf16.msra.mxu0 0
        %2650 = vmatprep.subr.bf16.mxu0 0
        %2651 = vmatpush2.bf16.msra.mxu0 0
        %2652 = vmatprep.mubr.bf16.mxu0 0
        %2653 = vmatmul.mubr.bf16.gmra.mxu0 %v2618
        %v2654 = vpop.f32.mrf.mxu0
        %v2655 = vadd.f32 %v2586, %v2654
        %v2656 = vpop.f32.mrf.mxu0
        %v2657 = vpop.f32.mrf.mxu0
        %v2658 = vadd.f32 %v2586, %v2657
        %v2659 = vpop.f32.mrf.mxu0
        %2660 = vdwg.mxu0
        %v2661 = vld [vmem:[%s1297] sm:$0xf]
        %v2662 = vld [vmem:[%s1297 + $0x4] sm:$0xf]
        %v2663 = vld [vmem:[%s1324] sm:$0xf]
        %v2664 = vld [vmem:[%s1324 + $0x4] sm:$0xf]
        %v2665 = vld [vmem:[%s1324 + $0x8] sm:$0xf]
        %v2666 = vld [vmem:[%s1324 + $0xc] sm:$0xf]
        %v2667 = vld [vmem:[%s1324 + $0x10] sm:$0xf]
        %v2668 = vld [vmem:[%s1324 + $0x14] sm:$0xf]
        %v2669 = vld [vmem:[%s1324 + $0x18] sm:$0xf]
        %v2670 = vld [vmem:[%s1324 + $0x1c] sm:$0xf]
        %v2671 = vld [vmem:[%s1563] sm:$0x1]
        %v2673 = vlaneseq
        %v2674 = vshrl.u32 %v2673, 7
        %v2675 = vsub.s32 0, %v2674
        %v2676 = vrot.slane %v2671, %v2675
        %v2680 = vunpack.c.l.b16 %v2661
        %v2681 = vunpack.c.l.b16 %v2662
        %v2682 = vpack.c.b16 %v2681, %v2680
        %v2691 = vunpack.c.l.b16 %v2663
        %v2692 = vunpack.c.l.b16 %v2664
        %v2693 = vunpack.c.l.b16 %v2665
        %v2694 = vunpack.c.l.b16 %v2666
        %v2695 = vunpack.c.l.b16 %v2667
        %v2696 = vunpack.c.l.b16 %v2668
        %v2697 = vunpack.c.l.b16 %v2669
        %v2698 = vunpack.c.l.b16 %v2670
        %v2699 = vpack.c.b16 %v2692, %v2691
        %v2700 = vpack.c.b16 %v2694, %v2693
        %v2701 = vpack.c.b16 %v2696, %v2695
        %v2702 = vpack.c.b16 %v2698, %v2697
        %v2708 = vsel %vm1647, %v2682, 0
        %2710 = vmatprep.subr.bf16.mxu0 0
        %2711 = vmatpush1.bf16.msra.mxu0 0
        %2712 = vmatprep.subr.bf16.mxu0 0
        %2713 = vmatpush1.bf16.msra.mxu0 0
        %2714 = vmatprep.subr.bf16.mxu0 0
        %2715 = vmatpush1.bf16.msra.mxu0 0
        %2716 = vmatprep.subr.bf16.mxu0 0
        %2717 = vmatpush1.bf16.msra.mxu0 0
        %2718 = vmatprep.subr.bf16.mxu0 0
        %2719 = vmatpush1.bf16.msra.mxu0 %v2702
        %2720 = vmatprep.subr.bf16.mxu0 0
        %2721 = vmatpush1.bf16.msra.mxu0 %v2701
        %2722 = vmatprep.subr.bf16.mxu0 0
        %2723 = vmatpush1.bf16.msra.mxu0 %v2700
        %2724 = vmatprep.subr.bf16.mxu0 0
        %2725 = vmatpush1.bf16.msra.mxu0 %v2699
        %2726 = vmatprep.subr.bf16.mxu0 0
        %2727 = vmatpush2.bf16.msra.mxu0 0
        %2728 = vmatprep.subr.bf16.mxu0 0
        %2729 = vmatpush2.bf16.msra.mxu0 0
        %2730 = vmatprep.subr.bf16.mxu0 0
        %2731 = vmatpush2.bf16.msra.mxu0 0
        %2732 = vmatprep.subr.bf16.mxu0 0
        %2733 = vmatpush2.bf16.msra.mxu0 0
        %2734 = vmatprep.subr.bf16.mxu0 0
        %2735 = vmatpush2.bf16.msra.mxu0 0
        %2736 = vmatprep.subr.bf16.mxu0 0
        %2737 = vmatpush2.bf16.msra.mxu0 0
        %2738 = vmatprep.subr.bf16.mxu0 0
        %2739 = vmatpush2.bf16.msra.mxu0 0
        %2740 = vmatprep.subr.bf16.mxu0 0
        %2741 = vmatpush2.bf16.msra.mxu0 0
        %2742 = vmatprep.mubr.bf16.mxu0 0
        %2743 = vmatmul.mubr.bf16.gmra.mxu0 %v2708
        %v2744 = vpop.f32.mrf.mxu0
        %v2745 = vadd.f32 %v2676, %v2744
        %v2746 = vpop.f32.mrf.mxu0
        %v2747 = vpop.f32.mrf.mxu0
        %v2748 = vadd.f32 %v2676, %v2747
        %v2749 = vpop.f32.mrf.mxu0
        %2750 = vdwg.mxu0
        %2752 = vrot.lane.b32.xlu0 %v2566, 112
        %v2753 = vpop.permute.xlu0 %2752
        %2755 = vrot.lane.b32.xlu0 %v2566, 96
        %v2756 = vpop.permute.xlu0 %2755
        %2758 = vrot.lane.b32.xlu0 %v2566, 80
        %v2759 = vpop.permute.xlu0 %2758
        %v2761 = vpack.c.bf16 %v2566, %v2566
        %v2762 = vpack.c.bf16 %v2753, %v2753
        %v2763 = vpack.c.bf16 %v2756, %v2756
        %v2764 = vpack.c.bf16 %v2759, %v2759
        %2767 = vrot.lane.b32.xlu0 %v2655, 112
        %v2768 = vpop.permute.xlu0 %2767
        %2769 = vrot.lane.b32.xlu0 %v2658, 112
        %v2770 = vpop.permute.xlu0 %2769
        %2773 = vrot.lane.b32.xlu0 %v2655, 96
        %v2774 = vpop.permute.xlu0 %2773
        %2775 = vrot.lane.b32.xlu0 %v2658, 96
        %v2776 = vpop.permute.xlu0 %2775
        %2779 = vrot.lane.b32.xlu0 %v2655, 80
        %v2780 = vpop.permute.xlu0 %2779
        %2781 = vrot.lane.b32.xlu0 %v2658, 80
        %v2782 = vpop.permute.xlu0 %2781
        %v2785 = vpack.c.bf16 %v2658, %v2655
        %v2786 = vpack.c.bf16 %v2770, %v2768
        %v2787 = vpack.c.bf16 %v2776, %v2774
        %v2788 = vpack.c.bf16 %v2782, %v2780
        %2791 = vrot.lane.b32.xlu0 %v2745, 112
        %v2792 = vpop.permute.xlu0 %2791
        %2793 = vrot.lane.b32.xlu0 %v2748, 112
        %v2794 = vpop.permute.xlu0 %2793
        %2797 = vrot.lane.b32.xlu0 %v2745, 96
        %v2798 = vpop.permute.xlu0 %2797
        %2799 = vrot.lane.b32.xlu0 %v2748, 96
        %v2800 = vpop.permute.xlu0 %2799
        %2803 = vrot.lane.b32.xlu0 %v2745, 80
        %v2804 = vpop.permute.xlu0 %2803
        %2805 = vrot.lane.b32.xlu0 %v2748, 80
        %v2806 = vpop.permute.xlu0 %2805
        %v2809 = vpack.c.bf16 %v2748, %v2745
        %v2810 = vpack.c.bf16 %v2794, %v2792
        %v2811 = vpack.c.bf16 %v2800, %v2798
        %v2812 = vpack.c.bf16 %v2806, %v2804
        %v2813 = vld [vmem:[%s1333] sm:$0xf]
        %v2814 = vld [vmem:[%s1333 + $0x4] sm:$0xf]
        %v2815 = vld [vmem:[%s1333 + $0x8] sm:$0xf]
        %v2816 = vld [vmem:[%s1333 + $0xc] sm:$0xf]
        %v2817 = vld [vmem:[%s1333 + $0x10] sm:$0xf]
        %v2818 = vld [vmem:[%s1333 + $0x14] sm:$0xf]
        %v2819 = vld [vmem:[%s1333 + $0x18] sm:$0xf]
        %v2820 = vld [vmem:[%s1333 + $0x1c] sm:$0xf]
        %v2821 = vld [vmem:[%s1566] sm:$0x1]
        %v2823 = vsel %vm1814, %v2761, 0
        %v2826 = vsel %vm1814, %v2785, 0
        %2828 = vmatprep.subr.bf16.mxu0 0
        %2829 = vmatpush1.bf16.xpose.msra.mxu0 0
        %2830 = vmatprep.subr.bf16.mxu0 0
        %2831 = vmatpush1.bf16.xpose.msra.mxu0 0
        %2832 = vmatprep.subr.bf16.mxu0 0
        %2833 = vmatpush1.bf16.xpose.msra.mxu0 0
        %2834 = vmatprep.subr.bf16.mxu0 0
        %2835 = vmatpush1.bf16.xpose.msra.mxu0 0
        %2836 = vmatprep.subr.bf16.mxu0 0
        %2837 = vmatpush1.bf16.xpose.msra.mxu0 0
        %2838 = vmatprep.subr.bf16.mxu0 0
        %2839 = vmatpush1.bf16.xpose.msra.mxu0 0
        %2840 = vmatprep.subr.bf16.mxu0 0
        %2841 = vmatpush1.bf16.xpose.msra.mxu0 0
        %2842 = vmatprep.subr.bf16.mxu0 0
        %2843 = vmatpush1.bf16.xpose.msra.mxu0 %v2826
        %2844 = vmatprep.subr.bf16.mxu0 0
        %2845 = vmatpush2.bf16.xpose.msra.mxu0 0
        %2846 = vmatprep.subr.bf16.mxu0 0
        %2847 = vmatpush2.bf16.xpose.msra.mxu0 0
        %2848 = vmatprep.subr.bf16.mxu0 0
        %2849 = vmatpush2.bf16.xpose.msra.mxu0 0
        %2850 = vmatprep.subr.bf16.mxu0 0
        %2851 = vmatpush2.bf16.xpose.msra.mxu0 0
        %2852 = vmatprep.subr.bf16.mxu0 0
        %2853 = vmatpush2.bf16.xpose.msra.mxu0 0
        %2854 = vmatprep.subr.bf16.mxu0 0
        %2855 = vmatpush2.bf16.xpose.msra.mxu0 0
        %2856 = vmatprep.subr.bf16.mxu0 0
        %2857 = vmatpush2.bf16.xpose.msra.mxu0 0
        %2858 = vmatprep.subr.bf16.mxu0 0
        %2859 = vmatpush2.bf16.xpose.msra.mxu0 0
        %2860 = vmatprep.mubr.bf16.mxu0 0
        %2861 = vmatmul.mubr.bf16.gmra.mxu0 %v2823
        %v2862 = vpop.f32.mrf.mxu0
        %v2863 = vadd.f32 0.0, %v2862
        %v2864 = vpop.f32.mrf.mxu0
        %v2865 = vpop.f32.mrf.mxu0
        %v2866 = vpop.f32.mrf.mxu0
        %2867 = vdwg.mxu0
        %v2869 = vsel %vm1814, %v2762, 0
        %v2872 = vsel %vm1814, %v2786, 0
        %2874 = vmatprep.subr.bf16.mxu0 0
        %2875 = vmatpush1.bf16.xpose.msra.mxu0 0
        %2876 = vmatprep.subr.bf16.mxu0 0
        %2877 = vmatpush1.bf16.xpose.msra.mxu0 0
        %2878 = vmatprep.subr.bf16.mxu0 0
        %2879 = vmatpush1.bf16.xpose.msra.mxu0 0
        %2880 = vmatprep.subr.bf16.mxu0 0
        %2881 = vmatpush1.bf16.xpose.msra.mxu0 0
        %2882 = vmatprep.subr.bf16.mxu0 0
        %2883 = vmatpush1.bf16.xpose.msra.mxu0 0
        %2884 = vmatprep.subr.bf16.mxu0 0
        %2885 = vmatpush1.bf16.xpose.msra.mxu0 0
        %2886 = vmatprep.subr.bf16.mxu0 0
        %2887 = vmatpush1.bf16.xpose.msra.mxu0 0
        %2888 = vmatprep.subr.bf16.mxu0 0
        %2889 = vmatpush1.bf16.xpose.msra.mxu0 %v2872
        %2890 = vmatprep.subr.bf16.mxu0 0
        %2891 = vmatpush2.bf16.xpose.msra.mxu0 0
        %2892 = vmatprep.subr.bf16.mxu0 0
        %2893 = vmatpush2.bf16.xpose.msra.mxu0 0
        %2894 = vmatprep.subr.bf16.mxu0 0
        %2895 = vmatpush2.bf16.xpose.msra.mxu0 0
        %2896 = vmatprep.subr.bf16.mxu0 0
        %2897 = vmatpush2.bf16.xpose.msra.mxu0 0
        %2898 = vmatprep.subr.bf16.mxu0 0
        %2899 = vmatpush2.bf16.xpose.msra.mxu0 0
        %2900 = vmatprep.subr.bf16.mxu0 0
        %2901 = vmatpush2.bf16.xpose.msra.mxu0 0
        %2902 = vmatprep.subr.bf16.mxu0 0
        %2903 = vmatpush2.bf16.xpose.msra.mxu0 0
        %2904 = vmatprep.subr.bf16.mxu0 0
        %2905 = vmatpush2.bf16.xpose.msra.mxu0 0
        %2906 = vmatprep.mubr.bf16.mxu0 0
        %2907 = vmatmul.mubr.bf16.gmra.mxu0 %v2869
        %v2908 = vpop.f32.mrf.mxu0
        %v2909 = vadd.f32 0.0, %v2908
        %v2910 = vpop.f32.mrf.mxu0
        %v2911 = vpop.f32.mrf.mxu0
        %v2912 = vpop.f32.mrf.mxu0
        %2913 = vdwg.mxu0
        %v2915 = vsel %vm1814, %v2763, 0
        %v2918 = vsel %vm1814, %v2787, 0
        %2920 = vmatprep.subr.bf16.mxu0 0
        %2921 = vmatpush1.bf16.xpose.msra.mxu0 0
        %2922 = vmatprep.subr.bf16.mxu0 0
        %2923 = vmatpush1.bf16.xpose.msra.mxu0 0
        %2924 = vmatprep.subr.bf16.mxu0 0
        %2925 = vmatpush1.bf16.xpose.msra.mxu0 0
        %2926 = vmatprep.subr.bf16.mxu0 0
        %2927 = vmatpush1.bf16.xpose.msra.mxu0 0
        %2928 = vmatprep.subr.bf16.mxu0 0
        %2929 = vmatpush1.bf16.xpose.msra.mxu0 0
        %2930 = vmatprep.subr.bf16.mxu0 0
        %2931 = vmatpush1.bf16.xpose.msra.mxu0 0
        %2932 = vmatprep.subr.bf16.mxu0 0
        %2933 = vmatpush1.bf16.xpose.msra.mxu0 0
        %2934 = vmatprep.subr.bf16.mxu0 0
        %2935 = vmatpush1.bf16.xpose.msra.mxu0 %v2918
        %2936 = vmatprep.subr.bf16.mxu0 0
        %2937 = vmatpush2.bf16.xpose.msra.mxu0 0
        %2938 = vmatprep.subr.bf16.mxu0 0
        %2939 = vmatpush2.bf16.xpose.msra.mxu0 0
        %2940 = vmatprep.subr.bf16.mxu0 0
        %2941 = vmatpush2.bf16.xpose.msra.mxu0 0
        %2942 = vmatprep.subr.bf16.mxu0 0
        %2943 = vmatpush2.bf16.xpose.msra.mxu0 0
        %2944 = vmatprep.subr.bf16.mxu0 0
        %2945 = vmatpush2.bf16.xpose.msra.mxu0 0
        %2946 = vmatprep.subr.bf16.mxu0 0
        %2947 = vmatpush2.bf16.xpose.msra.mxu0 0
        %2948 = vmatprep.subr.bf16.mxu0 0
        %2949 = vmatpush2.bf16.xpose.msra.mxu0 0
        %2950 = vmatprep.subr.bf16.mxu0 0
        %2951 = vmatpush2.bf16.xpose.msra.mxu0 0
        %2952 = vmatprep.mubr.bf16.mxu0 0
        %2953 = vmatmul.mubr.bf16.gmra.mxu0 %v2915
        %v2954 = vpop.f32.mrf.mxu0
        %v2955 = vadd.f32 0.0, %v2954
        %v2956 = vpop.f32.mrf.mxu0
        %v2957 = vpop.f32.mrf.mxu0
        %v2958 = vpop.f32.mrf.mxu0
        %2959 = vdwg.mxu0
        %v2961 = vsel %vm1814, %v2764, 0
        %v2964 = vsel %vm1814, %v2788, 0
        %2966 = vmatprep.subr.bf16.mxu0 0
        %2967 = vmatpush1.bf16.xpose.msra.mxu0 0
        %2968 = vmatprep.subr.bf16.mxu0 0
        %2969 = vmatpush1.bf16.xpose.msra.mxu0 0
        %2970 = vmatprep.subr.bf16.mxu0 0
        %2971 = vmatpush1.bf16.xpose.msra.mxu0 0
        %2972 = vmatprep.subr.bf16.mxu0 0
        %2973 = vmatpush1.bf16.xpose.msra.mxu0 0
        %2974 = vmatprep.subr.bf16.mxu0 0
        %2975 = vmatpush1.bf16.xpose.msra.mxu0 0
        %2976 = vmatprep.subr.bf16.mxu0 0
        %2977 = vmatpush1.bf16.xpose.msra.mxu0 0
        %2978 = vmatprep.subr.bf16.mxu0 0
        %2979 = vmatpush1.bf16.xpose.msra.mxu0 0
        %2980 = vmatprep.subr.bf16.mxu0 0
        %2981 = vmatpush1.bf16.xpose.msra.mxu0 %v2964
        %2982 = vmatprep.subr.bf16.mxu0 0
        %2983 = vmatpush2.bf16.xpose.msra.mxu0 0
        %2984 = vmatprep.subr.bf16.mxu0 0
        %2985 = vmatpush2.bf16.xpose.msra.mxu0 0
        %2986 = vmatprep.subr.bf16.mxu0 0
        %2987 = vmatpush2.bf16.xpose.msra.mxu0 0
        %2988 = vmatprep.subr.bf16.mxu0 0
        %2989 = vmatpush2.bf16.xpose.msra.mxu0 0
        %2990 = vmatprep.subr.bf16.mxu0 0
        %2991 = vmatpush2.bf16.xpose.msra.mxu0 0
        %2992 = vmatprep.subr.bf16.mxu0 0
        %2993 = vmatpush2.bf16.xpose.msra.mxu0 0
        %2994 = vmatprep.subr.bf16.mxu0 0
        %2995 = vmatpush2.bf16.xpose.msra.mxu0 0
        %2996 = vmatprep.subr.bf16.mxu0 0
        %2997 = vmatpush2.bf16.xpose.msra.mxu0 0
        %2998 = vmatprep.mubr.bf16.mxu0 0
        %2999 = vmatmul.mubr.bf16.gmra.mxu0 %v2961
        %v3000 = vpop.f32.mrf.mxu0
        %v3001 = vadd.f32 0.0, %v3000
        %v3002 = vpop.f32.mrf.mxu0
        %v3003 = vpop.f32.mrf.mxu0
        %v3004 = vpop.f32.mrf.mxu0
        %3005 = vdwg.mxu0
        %v3006 = vsel %vm1814, %v2863, -inf
        %3007 = vmax.xlane.f32.xlu0 %v3006
        %v3008 = vpop.xlane.xlu0 %3007
        %v3009 = vsel %vm1814, %v2909, -inf
        %3010 = vmax.xlane.f32.xlu0 %v3009
        %v3011 = vpop.xlane.xlu0 %3010
        %v3012 = vsel %vm1814, %v2955, -inf
        %3013 = vmax.xlane.f32.xlu0 %v3012
        %v3014 = vpop.xlane.xlu0 %3013
        %v3015 = vsel %vm1814, %v3001, -inf
        %3016 = vmax.xlane.f32.xlu0 %v3015
        %v3017 = vpop.xlane.xlu0 %3016
        %v3018 = vsub.f32 %v2863, %v3008
        %v3019 = vsub.f32 %v2909, %v3011
        %v3020 = vsub.f32 %v2955, %v3014
        %v3021 = vsub.f32 %v3001, %v3017
        %v3022 = vmul.f32 %v3018, 1.442695
        %v3023 = vpow.pop %v3022
        %v3024 = vmul.f32 %v3019, 1.442695
        %v3025 = vpow.pop %v3024
        %v3026 = vmul.f32 %v3020, 1.442695
        %v3027 = vpow.pop %v3026
        %v3028 = vmul.f32 %v3021, 1.442695
        %v3029 = vpow.pop %v3028
        %v3030 = vsel %vm1814, %v3023, 0.0
        %3031 = vadd.xlane.f32.xlu0 %v3030
        %v3032 = vpop.xlane.xlu0 %3031
        %v3033 = vsel %vm1814, %v3025, 0.0
        %3034 = vadd.xlane.f32.xlu0 %v3033
        %v3035 = vpop.xlane.xlu0 %3034
        %v3036 = vsel %vm1814, %v3027, 0.0
        %3037 = vadd.xlane.f32.xlu0 %v3036
        %v3038 = vpop.xlane.xlu0 %3037
        %v3039 = vsel %vm1814, %v3029, 0.0
        %3040 = vadd.xlane.f32.xlu0 %v3039
        %v3041 = vpop.xlane.xlu0 %3040
        %v3042 = vrcp.pop %v3032
        %v3043 = vrcp.pop %v3035
        %v3044 = vrcp.pop %v3038
        %v3045 = vrcp.pop %v3041
        %v3046 = vmul.f32 %v3023, %v3042
        %v3047 = vmul.f32 %v3025, %v3043
        %v3048 = vmul.f32 %v3027, %v3044
        %v3049 = vmul.f32 %v3029, %v3045
        %v3050 = vpack.c.bf16 %v3046, %v3046
        %v3051 = vpack.c.bf16 %v3047, %v3047
        %v3052 = vpack.c.bf16 %v3048, %v3048
        %v3053 = vpack.c.bf16 %v3049, %v3049
        %v3055 = vsel %vm1814, %v3050, 0
        %3057 = vmatprep.subr.bf16.mxu0 0
        %3058 = vmatpush1.bf16.msra.mxu0 0
        %3059 = vmatprep.subr.bf16.mxu0 0
        %3060 = vmatpush1.bf16.msra.mxu0 0
        %3061 = vmatprep.subr.bf16.mxu0 0
        %3062 = vmatpush1.bf16.msra.mxu0 0
        %3063 = vmatprep.subr.bf16.mxu0 0
        %3064 = vmatpush1.bf16.msra.mxu0 0
        %3065 = vmatprep.subr.bf16.mxu0 0
        %3066 = vmatpush1.bf16.msra.mxu0 0
        %3067 = vmatprep.subr.bf16.mxu0 0
        %3068 = vmatpush1.bf16.msra.mxu0 0
        %3069 = vmatprep.subr.bf16.mxu0 0
        %3070 = vmatpush1.bf16.msra.mxu0 0
        %3071 = vmatprep.subr.bf16.mxu0 0
        %3072 = vmatpush1.bf16.msra.mxu0 %v2809
        %3073 = vmatprep.subr.bf16.mxu0 0
        %3074 = vmatpush2.bf16.msra.mxu0 0
        %3075 = vmatprep.subr.bf16.mxu0 0
        %3076 = vmatpush2.bf16.msra.mxu0 0
        %3077 = vmatprep.subr.bf16.mxu0 0
        %3078 = vmatpush2.bf16.msra.mxu0 0
        %3079 = vmatprep.subr.bf16.mxu0 0
        %3080 = vmatpush2.bf16.msra.mxu0 0
        %3081 = vmatprep.subr.bf16.mxu0 0
        %3082 = vmatpush2.bf16.msra.mxu0 0
        %3083 = vmatprep.subr.bf16.mxu0 0
        %3084 = vmatpush2.bf16.msra.mxu0 0
        %3085 = vmatprep.subr.bf16.mxu0 0
        %3086 = vmatpush2.bf16.msra.mxu0 0
        %3087 = vmatprep.subr.bf16.mxu0 0
        %3088 = vmatpush2.bf16.msra.mxu0 0
        %3089 = vmatprep.mubr.bf16.mxu0 0
        %3090 = vmatmul.mubr.bf16.gmra.mxu0 %v3055
        %v3091 = vpop.f32.mrf.mxu0
        %v3092 = vadd.f32 0.0, %v3091
        %v3093 = vpop.f32.mrf.mxu0
        %v3094 = vpop.f32.mrf.mxu0
        %v3095 = vpop.f32.mrf.mxu0
        %3096 = vdwg.mxu0
        %v3098 = vsel %vm1814, %v3051, 0
        %3100 = vmatprep.subr.bf16.mxu0 0
        %3101 = vmatpush1.bf16.msra.mxu0 0
        %3102 = vmatprep.subr.bf16.mxu0 0
        %3103 = vmatpush1.bf16.msra.mxu0 0
        %3104 = vmatprep.subr.bf16.mxu0 0
        %3105 = vmatpush1.bf16.msra.mxu0 0
        %3106 = vmatprep.subr.bf16.mxu0 0
        %3107 = vmatpush1.bf16.msra.mxu0 0
        %3108 = vmatprep.subr.bf16.mxu0 0
        %3109 = vmatpush1.bf16.msra.mxu0 0
        %3110 = vmatprep.subr.bf16.mxu0 0
        %3111 = vmatpush1.bf16.msra.mxu0 0
        %3112 = vmatprep.subr.bf16.mxu0 0
        %3113 = vmatpush1.bf16.msra.mxu0 0
        %3114 = vmatprep.subr.bf16.mxu0 0
        %3115 = vmatpush1.bf16.msra.mxu0 %v2810
        %3116 = vmatprep.subr.bf16.mxu0 0
        %3117 = vmatpush2.bf16.msra.mxu0 0
        %3118 = vmatprep.subr.bf16.mxu0 0
        %3119 = vmatpush2.bf16.msra.mxu0 0
        %3120 = vmatprep.subr.bf16.mxu0 0
        %3121 = vmatpush2.bf16.msra.mxu0 0
        %3122 = vmatprep.subr.bf16.mxu0 0
        %3123 = vmatpush2.bf16.msra.mxu0 0
        %3124 = vmatprep.subr.bf16.mxu0 0
        %3125 = vmatpush2.bf16.msra.mxu0 0
        %3126 = vmatprep.subr.bf16.mxu0 0
        %3127 = vmatpush2.bf16.msra.mxu0 0
        %3128 = vmatprep.subr.bf16.mxu0 0
        %3129 = vmatpush2.bf16.msra.mxu0 0
        %3130 = vmatprep.subr.bf16.mxu0 0
        %3131 = vmatpush2.bf16.msra.mxu0 0
        %3132 = vmatprep.mubr.bf16.mxu0 0
        %3133 = vmatmul.mubr.bf16.gmra.mxu0 %v3098
        %v3134 = vpop.f32.mrf.mxu0
        %v3135 = vadd.f32 0.0, %v3134
        %v3136 = vpop.f32.mrf.mxu0
        %v3137 = vpop.f32.mrf.mxu0
        %v3138 = vpop.f32.mrf.mxu0
        %3139 = vdwg.mxu0
        %v3141 = vsel %vm1814, %v3052, 0
        %3143 = vmatprep.subr.bf16.mxu0 0
        %3144 = vmatpush1.bf16.msra.mxu0 0
        %3145 = vmatprep.subr.bf16.mxu0 0
        %3146 = vmatpush1.bf16.msra.mxu0 0
        %3147 = vmatprep.subr.bf16.mxu0 0
        %3148 = vmatpush1.bf16.msra.mxu0 0
        %3149 = vmatprep.subr.bf16.mxu0 0
        %3150 = vmatpush1.bf16.msra.mxu0 0
        %3151 = vmatprep.subr.bf16.mxu0 0
        %3152 = vmatpush1.bf16.msra.mxu0 0
        %3153 = vmatprep.subr.bf16.mxu0 0
        %3154 = vmatpush1.bf16.msra.mxu0 0
        %3155 = vmatprep.subr.bf16.mxu0 0
        %3156 = vmatpush1.bf16.msra.mxu0 0
        %3157 = vmatprep.subr.bf16.mxu0 0
        %3158 = vmatpush1.bf16.msra.mxu0 %v2811
        %3159 = vmatprep.subr.bf16.mxu0 0
        %3160 = vmatpush2.bf16.msra.mxu0 0
        %3161 = vmatprep.subr.bf16.mxu0 0
        %3162 = vmatpush2.bf16.msra.mxu0 0
        %3163 = vmatprep.subr.bf16.mxu0 0
        %3164 = vmatpush2.bf16.msra.mxu0 0
        %3165 = vmatprep.subr.bf16.mxu0 0
        %3166 = vmatpush2.bf16.msra.mxu0 0
        %3167 = vmatprep.subr.bf16.mxu0 0
        %3168 = vmatpush2.bf16.msra.mxu0 0
        %3169 = vmatprep.subr.bf16.mxu0 0
        %3170 = vmatpush2.bf16.msra.mxu0 0
        %3171 = vmatprep.subr.bf16.mxu0 0
        %3172 = vmatpush2.bf16.msra.mxu0 0
        %3173 = vmatprep.subr.bf16.mxu0 0
        %3174 = vmatpush2.bf16.msra.mxu0 0
        %3175 = vmatprep.mubr.bf16.mxu0 0
        %3176 = vmatmul.mubr.bf16.gmra.mxu0 %v3141
        %v3177 = vpop.f32.mrf.mxu0
        %v3178 = vadd.f32 0.0, %v3177
        %v3179 = vpop.f32.mrf.mxu0
        %v3180 = vpop.f32.mrf.mxu0
        %v3181 = vpop.f32.mrf.mxu0
        %3182 = vdwg.mxu0
        %v3184 = vsel %vm1814, %v3053, 0
        %3186 = vmatprep.subr.bf16.mxu0 0
        %3187 = vmatpush1.bf16.msra.mxu0 0
        %3188 = vmatprep.subr.bf16.mxu0 0
        %3189 = vmatpush1.bf16.msra.mxu0 0
        %3190 = vmatprep.subr.bf16.mxu0 0
        %3191 = vmatpush1.bf16.msra.mxu0 0
        %3192 = vmatprep.subr.bf16.mxu0 0
        %3193 = vmatpush1.bf16.msra.mxu0 0
        %3194 = vmatprep.subr.bf16.mxu0 0
        %3195 = vmatpush1.bf16.msra.mxu0 0
        %3196 = vmatprep.subr.bf16.mxu0 0
        %3197 = vmatpush1.bf16.msra.mxu0 0
        %3198 = vmatprep.subr.bf16.mxu0 0
        %3199 = vmatpush1.bf16.msra.mxu0 0
        %3200 = vmatprep.subr.bf16.mxu0 0
        %3201 = vmatpush1.bf16.msra.mxu0 %v2812
        %3202 = vmatprep.subr.bf16.mxu0 0
        %3203 = vmatpush2.bf16.msra.mxu0 0
        %3204 = vmatprep.subr.bf16.mxu0 0
        %3205 = vmatpush2.bf16.msra.mxu0 0
        %3206 = vmatprep.subr.bf16.mxu0 0
        %3207 = vmatpush2.bf16.msra.mxu0 0
        %3208 = vmatprep.subr.bf16.mxu0 0
        %3209 = vmatpush2.bf16.msra.mxu0 0
        %3210 = vmatprep.subr.bf16.mxu0 0
        %3211 = vmatpush2.bf16.msra.mxu0 0
        %3212 = vmatprep.subr.bf16.mxu0 0
        %3213 = vmatpush2.bf16.msra.mxu0 0
        %3214 = vmatprep.subr.bf16.mxu0 0
        %3215 = vmatpush2.bf16.msra.mxu0 0
        %3216 = vmatprep.subr.bf16.mxu0 0
        %3217 = vmatpush2.bf16.msra.mxu0 0
        %3218 = vmatprep.mubr.bf16.mxu0 0
        %3219 = vmatmul.mubr.bf16.gmra.mxu0 %v3184
        %v3220 = vpop.f32.mrf.mxu0
        %v3221 = vadd.f32 0.0, %v3220
        %v3222 = vpop.f32.mrf.mxu0
        %v3223 = vpop.f32.mrf.mxu0
        %v3224 = vpop.f32.mrf.mxu0
        %3225 = vdwg.mxu0
        %v3226 = vpack.c.bf16 %v3092, %v3092
        %v3227 = vpack.c.bf16 %v3135, %v3135
        %v3228 = vpack.c.bf16 %v3178, %v3178
        %v3229 = vpack.c.bf16 %v3221, %v3221
        %v3232 = vunpack.c.l.b16 %v2813
        %v3233 = vunpack.c.l.b16 %v2814
        %v3234 = vpack.c.b16 %v3233, %v3232
        %v3237 = vsel %vm1814, %v3226, 0
        %3239 = vmatprep.subr.bf16.mxu0 0
        %3240 = vmatpush1.bf16.msra.mxu0 0
        %3241 = vmatprep.subr.bf16.mxu0 0
        %3242 = vmatpush1.bf16.msra.mxu0 0
        %3243 = vmatprep.subr.bf16.mxu0 0
        %3244 = vmatpush1.bf16.msra.mxu0 0
        %3245 = vmatprep.subr.bf16.mxu0 0
        %3246 = vmatpush1.bf16.msra.mxu0 0
        %3247 = vmatprep.subr.bf16.mxu0 0
        %3248 = vmatpush1.bf16.msra.mxu0 0
        %3249 = vmatprep.subr.bf16.mxu0 0
        %3250 = vmatpush1.bf16.msra.mxu0 0
        %3251 = vmatprep.subr.bf16.mxu0 0
        %3252 = vmatpush1.bf16.msra.mxu0 0
        %3253 = vmatprep.subr.bf16.mxu0 0
        %3254 = vmatpush1.bf16.msra.mxu0 %v3234
        %3255 = vmatprep.subr.bf16.mxu0 0
        %3256 = vmatpush2.bf16.msra.mxu0 0
        %3257 = vmatprep.subr.bf16.mxu0 0
        %3258 = vmatpush2.bf16.msra.mxu0 0
        %3259 = vmatprep.subr.bf16.mxu0 0
        %3260 = vmatpush2.bf16.msra.mxu0 0
        %3261 = vmatprep.subr.bf16.mxu0 0
        %3262 = vmatpush2.bf16.msra.mxu0 0
        %3263 = vmatprep.subr.bf16.mxu0 0
        %3264 = vmatpush2.bf16.msra.mxu0 0
        %3265 = vmatprep.subr.bf16.mxu0 0
        %3266 = vmatpush2.bf16.msra.mxu0 0
        %3267 = vmatprep.subr.bf16.mxu0 0
        %3268 = vmatpush2.bf16.msra.mxu0 0
        %3269 = vmatprep.subr.bf16.mxu0 0
        %3270 = vmatpush2.bf16.msra.mxu0 0
        %3271 = vmatprep.mubr.bf16.mxu0 0
        %3272 = vmatmul.mubr.bf16.gmra.mxu0 %v3237
        %v3273 = vpop.f32.mrf.mxu0
        %v3274 = vadd.f32 0.0, %v3273
        %v3275 = vpop.f32.mrf.mxu0
        %v3276 = vpop.f32.mrf.mxu0
        %v3277 = vpop.f32.mrf.mxu0
        %3278 = vdwg.mxu0
        %v3281 = vunpack.c.l.b16 %v2815
        %v3282 = vunpack.c.l.b16 %v2816
        %v3283 = vpack.c.b16 %v3282, %v3281
        %v3286 = vsel %vm1814, %v3227, 0
        %3288 = vmatprep.subr.bf16.mxu0 0
        %3289 = vmatpush1.bf16.msra.mxu0 0
        %3290 = vmatprep.subr.bf16.mxu0 0
        %3291 = vmatpush1.bf16.msra.mxu0 0
        %3292 = vmatprep.subr.bf16.mxu0 0
        %3293 = vmatpush1.bf16.msra.mxu0 0
        %3294 = vmatprep.subr.bf16.mxu0 0
        %3295 = vmatpush1.bf16.msra.mxu0 0
        %3296 = vmatprep.subr.bf16.mxu0 0
        %3297 = vmatpush1.bf16.msra.mxu0 0
        %3298 = vmatprep.subr.bf16.mxu0 0
        %3299 = vmatpush1.bf16.msra.mxu0 0
        %3300 = vmatprep.subr.bf16.mxu0 0
        %3301 = vmatpush1.bf16.msra.mxu0 0
        %3302 = vmatprep.subr.bf16.mxu0 0
        %3303 = vmatpush1.bf16.msra.mxu0 %v3283
        %3304 = vmatprep.subr.bf16.mxu0 0
        %3305 = vmatpush2.bf16.msra.mxu0 0
        %3306 = vmatprep.subr.bf16.mxu0 0
        %3307 = vmatpush2.bf16.msra.mxu0 0
        %3308 = vmatprep.subr.bf16.mxu0 0
        %3309 = vmatpush2.bf16.msra.mxu0 0
        %3310 = vmatprep.subr.bf16.mxu0 0
        %3311 = vmatpush2.bf16.msra.mxu0 0
        %3312 = vmatprep.subr.bf16.mxu0 0
        %3313 = vmatpush2.bf16.msra.mxu0 0
        %3314 = vmatprep.subr.bf16.mxu0 0
        %3315 = vmatpush2.bf16.msra.mxu0 0
        %3316 = vmatprep.subr.bf16.mxu0 0
        %3317 = vmatpush2.bf16.msra.mxu0 0
        %3318 = vmatprep.subr.bf16.mxu0 0
        %3319 = vmatpush2.bf16.msra.mxu0 0
        %3320 = vmatprep.mubr.bf16.mxu0 0
        %3321 = vmatmul.mubr.bf16.gmra.mxu0 %v3286
        %v3322 = vpop.f32.mrf.mxu0
        %v3323 = vadd.f32 0.0, %v3322
        %v3324 = vpop.f32.mrf.mxu0
        %v3325 = vpop.f32.mrf.mxu0
        %v3326 = vpop.f32.mrf.mxu0
        %3327 = vdwg.mxu0
        %v3330 = vunpack.c.l.b16 %v2817
        %v3331 = vunpack.c.l.b16 %v2818
        %v3332 = vpack.c.b16 %v3331, %v3330
        %v3335 = vsel %vm1814, %v3228, 0
        %3337 = vmatprep.subr.bf16.mxu0 0
        %3338 = vmatpush1.bf16.msra.mxu0 0
        %3339 = vmatprep.subr.bf16.mxu0 0
        %3340 = vmatpush1.bf16.msra.mxu0 0
        %3341 = vmatprep.subr.bf16.mxu0 0
        %3342 = vmatpush1.bf16.msra.mxu0 0
        %3343 = vmatprep.subr.bf16.mxu0 0
        %3344 = vmatpush1.bf16.msra.mxu0 0
        %3345 = vmatprep.subr.bf16.mxu0 0
        %3346 = vmatpush1.bf16.msra.mxu0 0
        %3347 = vmatprep.subr.bf16.mxu0 0
        %3348 = vmatpush1.bf16.msra.mxu0 0
        %3349 = vmatprep.subr.bf16.mxu0 0
        %3350 = vmatpush1.bf16.msra.mxu0 0
        %3351 = vmatprep.subr.bf16.mxu0 0
        %3352 = vmatpush1.bf16.msra.mxu0 %v3332
        %3353 = vmatprep.subr.bf16.mxu0 0
        %3354 = vmatpush2.bf16.msra.mxu0 0
        %3355 = vmatprep.subr.bf16.mxu0 0
        %3356 = vmatpush2.bf16.msra.mxu0 0
        %3357 = vmatprep.subr.bf16.mxu0 0
        %3358 = vmatpush2.bf16.msra.mxu0 0
        %3359 = vmatprep.subr.bf16.mxu0 0
        %3360 = vmatpush2.bf16.msra.mxu0 0
        %3361 = vmatprep.subr.bf16.mxu0 0
        %3362 = vmatpush2.bf16.msra.mxu0 0
        %3363 = vmatprep.subr.bf16.mxu0 0
        %3364 = vmatpush2.bf16.msra.mxu0 0
        %3365 = vmatprep.subr.bf16.mxu0 0
        %3366 = vmatpush2.bf16.msra.mxu0 0
        %3367 = vmatprep.subr.bf16.mxu0 0
        %3368 = vmatpush2.bf16.msra.mxu0 0
        %3369 = vmatprep.mubr.bf16.mxu0 0
        %3370 = vmatmul.mubr.bf16.gmra.mxu0 %v3335
        %v3371 = vpop.f32.mrf.mxu0
        %v3372 = vadd.f32 0.0, %v3371
        %v3373 = vpop.f32.mrf.mxu0
        %v3374 = vpop.f32.mrf.mxu0
        %v3375 = vpop.f32.mrf.mxu0
        %3376 = vdwg.mxu0
        %v3379 = vunpack.c.l.b16 %v2819
        %v3380 = vunpack.c.l.b16 %v2820
        %v3381 = vpack.c.b16 %v3380, %v3379
        %v3384 = vsel %vm1814, %v3229, 0
        %3386 = vmatprep.subr.bf16.mxu0 0
        %3387 = vmatpush1.bf16.msra.mxu0 0
        %3388 = vmatprep.subr.bf16.mxu0 0
        %3389 = vmatpush1.bf16.msra.mxu0 0
        %3390 = vmatprep.subr.bf16.mxu0 0
        %3391 = vmatpush1.bf16.msra.mxu0 0
        %3392 = vmatprep.subr.bf16.mxu0 0
        %3393 = vmatpush1.bf16.msra.mxu0 0
        %3394 = vmatprep.subr.bf16.mxu0 0
        %3395 = vmatpush1.bf16.msra.mxu0 0
        %3396 = vmatprep.subr.bf16.mxu0 0
        %3397 = vmatpush1.bf16.msra.mxu0 0
        %3398 = vmatprep.subr.bf16.mxu0 0
        %3399 = vmatpush1.bf16.msra.mxu0 0
        %3400 = vmatprep.subr.bf16.mxu0 0
        %3401 = vmatpush1.bf16.msra.mxu0 %v3381
        %3402 = vmatprep.subr.bf16.mxu0 0
        %3403 = vmatpush2.bf16.msra.mxu0 0
        %3404 = vmatprep.subr.bf16.mxu0 0
        %3405 = vmatpush2.bf16.msra.mxu0 0
        %3406 = vmatprep.subr.bf16.mxu0 0
        %3407 = vmatpush2.bf16.msra.mxu0 0
        %3408 = vmatprep.subr.bf16.mxu0 0
        %3409 = vmatpush2.bf16.msra.mxu0 0
        %3410 = vmatprep.subr.bf16.mxu0 0
        %3411 = vmatpush2.bf16.msra.mxu0 0
        %3412 = vmatprep.subr.bf16.mxu0 0
        %3413 = vmatpush2.bf16.msra.mxu0 0
        %3414 = vmatprep.subr.bf16.mxu0 0
        %3415 = vmatpush2.bf16.msra.mxu0 0
        %3416 = vmatprep.subr.bf16.mxu0 0
        %3417 = vmatpush2.bf16.msra.mxu0 0
        %3418 = vmatprep.mubr.bf16.mxu0 0
        %3419 = vmatmul.mubr.bf16.gmra.mxu0 %v3384
        %v3420 = vpop.f32.mrf.mxu0
        %v3421 = vadd.f32 0.0, %v3420
        %v3422 = vpop.f32.mrf.mxu0
        %v3423 = vpop.f32.mrf.mxu0
        %v3424 = vpop.f32.mrf.mxu0
        %3425 = vdwg.mxu0
        %v3426 = vsel %vm1647, %v3274, 0.0
        %v3427 = vsel %vm1647, %v3323, 0.0
        %v3428 = vadd.f32 %v3426, %v3427
        %v3429 = vsel %vm1647, %v3372, 0.0
        %v3430 = vadd.f32 %v3428, %v3429
        %v3431 = vsel %vm1647, %v3421, 0.0
        %v3432 = vadd.f32 %v3430, %v3431
        %v3434 = vlaneseq
        %v3435 = vshrl.u32 %v3434, 7
        %v3436 = vsub.s32 0, %v3435
        %v3437 = vrot.slane %v2821, %v3436
        %v3439 = vadd.f32 %v3432, %v3437
        %v3440 = vadd.f32 %v2486, %v3439
        %v3441 = vld [vmem:[%s1586] sm:$0x1]
        %v3442 = vld [vmem:[%s1589] sm:$0x1]
        %v3443 = vsel %vm1647, %v3440, 0.0
        %3444 = vadd.xlane.f32.xlu0 %v3443
        %v3445 = vpop.xlane.xlu0 %3444
        %v3446 = vmul.f32 %v3445, %v2462
        %v3447 = vsub.f32 %v3440, %v3446
        %v3448 = vmul.f32 %v3447, %v3447
        %v3449 = vsel %vm1647, %v3448, 0.0
        %3450 = vadd.xlane.f32.xlu0 %v3449
        %v3451 = vpop.xlane.xlu0 %3450
        %v3452 = vmul.f32 %v3451, %v2462
        %v3453 = vadd.f32 %v3452, 1e-05
        %v3454 = vrsqrt.pop %v3453
        %v3455 = vmul.f32 %v3447, %v3454
        %v3457 = vlaneseq
        %v3458 = vshrl.u32 %v3457, 7
        %v3459 = vsub.s32 0, %v3458
        %v3460 = vrot.slane %v3441, %v3459
        %v3462 = vmul.f32 %v3455, %v3460
        %v3464 = vlaneseq
        %v3465 = vshrl.u32 %v3464, 7
        %v3466 = vsub.s32 0, %v3465
        %v3467 = vrot.slane %v3442, %v3466
        %v3469 = vadd.f32 %v3462, %v3467
        %v3470 = vpack.c.bf16 %v3469, %v3469
        %v3471 = vld [vmem:[%s1342] sm:$0xf]
        %v3472 = vld [vmem:[%s1342 + $0x4] sm:$0xf]
        %v3473 = vld [vmem:[%s1342 + $0x8] sm:$0xf]
        %v3474 = vld [vmem:[%s1342 + $0xc] sm:$0xf]
        %v3475 = vld [vmem:[%s1342 + $0x10] sm:$0xf]
        %v3476 = vld [vmem:[%s1342 + $0x14] sm:$0xf]
        %v3477 = vld [vmem:[%s1342 + $0x18] sm:$0xf]
        %v3478 = vld [vmem:[%s1342 + $0x1c] sm:$0xf]
        %v3479 = vld [vmem:[%s1569] sm:$0x1]
        %v3481 = vlaneseq
        %v3482 = vshrl.u32 %v3481, 7
        %v3483 = vsub.s32 0, %v3482
        %v3484 = vrot.slane %v3479, %v3483
        %v3494 = vunpack.c.l.b16 %v3471
        %v3495 = vunpack.c.l.b16 %v3472
        %v3496 = vunpack.c.l.b16 %v3473
        %v3497 = vunpack.c.l.b16 %v3474
        %v3498 = vunpack.c.l.b16 %v3475
        %v3499 = vunpack.c.l.b16 %v3476
        %v3500 = vunpack.c.l.b16 %v3477
        %v3501 = vunpack.c.l.b16 %v3478
        %v3502 = vpack.c.b16 %v3495, %v3494
        %v3503 = vpack.c.b16 %v3497, %v3496
        %v3504 = vpack.c.b16 %v3499, %v3498
        %v3505 = vpack.c.b16 %v3501, %v3500
        %v3511 = vsel %vm1647, %v3470, 0
        %3513 = vmatprep.subr.bf16.mxu0 0
        %3514 = vmatpush1.bf16.msra.mxu0 0
        %3515 = vmatprep.subr.bf16.mxu0 0
        %3516 = vmatpush1.bf16.msra.mxu0 0
        %3517 = vmatprep.subr.bf16.mxu0 0
        %3518 = vmatpush1.bf16.msra.mxu0 0
        %3519 = vmatprep.subr.bf16.mxu0 0
        %3520 = vmatpush1.bf16.msra.mxu0 0
        %3521 = vmatprep.subr.bf16.mxu0 0
        %3522 = vmatpush1.bf16.msra.mxu0 %v3505
        %3523 = vmatprep.subr.bf16.mxu0 0
        %3524 = vmatpush1.bf16.msra.mxu0 %v3504
        %3525 = vmatprep.subr.bf16.mxu0 0
        %3526 = vmatpush1.bf16.msra.mxu0 %v3503
        %3527 = vmatprep.subr.bf16.mxu0 0
        %3528 = vmatpush1.bf16.msra.mxu0 %v3502
        %3529 = vmatprep.subr.bf16.mxu0 0
        %3530 = vmatpush2.bf16.msra.mxu0 0
        %3531 = vmatprep.subr.bf16.mxu0 0
        %3532 = vmatpush2.bf16.msra.mxu0 0
        %3533 = vmatprep.subr.bf16.mxu0 0
        %3534 = vmatpush2.bf16.msra.mxu0 0
        %3535 = vmatprep.subr.bf16.mxu0 0
        %3536 = vmatpush2.bf16.msra.mxu0 0
        %3537 = vmatprep.subr.bf16.mxu0 0
        %3538 = vmatpush2.bf16.msra.mxu0 0
        %3539 = vmatprep.subr.bf16.mxu0 0
        %3540 = vmatpush2.bf16.msra.mxu0 0
        %3541 = vmatprep.subr.bf16.mxu0 0
        %3542 = vmatpush2.bf16.msra.mxu0 0
        %3543 = vmatprep.subr.bf16.mxu0 0
        %3544 = vmatpush2.bf16.msra.mxu0 0
        %3545 = vmatprep.mubr.bf16.mxu0 0
        %3546 = vmatmul.mubr.bf16.gmra.mxu0 %v3511
        %v3547 = vpop.f32.mrf.mxu0
        %v3548 = vadd.f32 %v3484, %v3547
        %v3549 = vpop.f32.mrf.mxu0
        %v3550 = vpop.f32.mrf.mxu0
        %v3551 = vpop.f32.mrf.mxu0
        %3552 = vdwg.mxu0
        %v3553 = vmax.f32 %v3548, 0.0
        %v3554 = vpack.c.bf16 %v3553, %v3553
        %v3555 = vld [vmem:[%s1574] sm:$0xf]
        %v3556 = vld [vmem:[%s1574 + $0x4] sm:$0xf]
        %v3557 = vld [vmem:[%s1574 + $0x8] sm:$0xf]
        %v3558 = vld [vmem:[%s1574 + $0xc] sm:$0xf]
        %v3559 = vld [vmem:[%s1574 + $0x10] sm:$0xf]
        %v3560 = vld [vmem:[%s1574 + $0x14] sm:$0xf]
        %v3561 = vld [vmem:[%s1574 + $0x18] sm:$0xf]
        %v3562 = vld [vmem:[%s1574 + $0x1c] sm:$0xf]
        %v3563 = vld [vmem:[%s1574 + $0x20] sm:$0xf]
        %v3564 = vld [vmem:[%s1574 + $0x24] sm:$0xf]
        %v3565 = vld [vmem:[%s1574 + $0x28] sm:$0xf]
        %v3566 = vld [vmem:[%s1574 + $0x2c] sm:$0xf]
        %v3567 = vld [vmem:[%s1574 + $0x30] sm:$0xf]
        %v3568 = vld [vmem:[%s1574 + $0x34] sm:$0xf]
        %v3569 = vld [vmem:[%s1574 + $0x38] sm:$0xf]
        %v3570 = vld [vmem:[%s1574 + $0x3c] sm:$0xf]
        %v3571 = vld [vmem:[%s1577] sm:$0x1]
        %v3573 = vlaneseq
        %v3574 = vshrl.u32 %v3573, 7
        %v3575 = vsub.s32 0, %v3574
        %v3576 = vrot.slane %v3571, %v3575
        %v3594 = vunpack.c.l.b16 %v3555
        %v3595 = vunpack.c.l.b16 %v3556
        %v3596 = vunpack.c.l.b16 %v3557
        %v3597 = vunpack.c.l.b16 %v3558
        %v3598 = vunpack.c.l.b16 %v3559
        %v3599 = vunpack.c.l.b16 %v3560
        %v3600 = vunpack.c.l.b16 %v3561
        %v3601 = vunpack.c.l.b16 %v3562
        %v3602 = vunpack.c.l.b16 %v3563
        %v3603 = vunpack.c.l.b16 %v3564
        %v3604 = vunpack.c.l.b16 %v3565
        %v3605 = vunpack.c.l.b16 %v3566
        %v3606 = vunpack.c.l.b16 %v3567
        %v3607 = vunpack.c.l.b16 %v3568
        %v3608 = vunpack.c.l.b16 %v3569
        %v3609 = vunpack.c.l.b16 %v3570
        %v3610 = vpack.c.b16 %v3595, %v3594
        %v3611 = vpack.c.b16 %v3597, %v3596
        %v3612 = vpack.c.b16 %v3599, %v3598
        %v3613 = vpack.c.b16 %v3601, %v3600
        %v3614 = vpack.c.b16 %v3603, %v3602
        %v3615 = vpack.c.b16 %v3605, %v3604
        %v3616 = vpack.c.b16 %v3607, %v3606
        %v3617 = vpack.c.b16 %v3609, %v3608
        %3626 = vmatprep.subr.bf16.mxu0 0
        %3627 = vmatpush1.bf16.msra.mxu0 %v3617
        %3628 = vmatprep.subr.bf16.mxu0 0
        %3629 = vmatpush1.bf16.msra.mxu0 %v3616
        %3630 = vmatprep.subr.bf16.mxu0 0
        %3631 = vmatpush1.bf16.msra.mxu0 %v3615
        %3632 = vmatprep.subr.bf16.mxu0 0
        %3633 = vmatpush1.bf16.msra.mxu0 %v3614
        %3634 = vmatprep.subr.bf16.mxu0 0
        %3635 = vmatpush1.bf16.msra.mxu0 %v3613
        %3636 = vmatprep.subr.bf16.mxu0 0
        %3637 = vmatpush1.bf16.msra.mxu0 %v3612
        %3638 = vmatprep.subr.bf16.mxu0 0
        %3639 = vmatpush1.bf16.msra.mxu0 %v3611
        %3640 = vmatprep.subr.bf16.mxu0 0
        %3641 = vmatpush1.bf16.msra.mxu0 %v3610
        %3642 = vmatprep.subr.bf16.mxu0 0
        %3643 = vmatpush2.bf16.msra.mxu0 0
        %3644 = vmatprep.subr.bf16.mxu0 0
        %3645 = vmatpush2.bf16.msra.mxu0 0
        %3646 = vmatprep.subr.bf16.mxu0 0
        %3647 = vmatpush2.bf16.msra.mxu0 0
        %3648 = vmatprep.subr.bf16.mxu0 0
        %3649 = vmatpush2.bf16.msra.mxu0 0
        %3650 = vmatprep.subr.bf16.mxu0 0
        %3651 = vmatpush2.bf16.msra.mxu0 0
        %3652 = vmatprep.subr.bf16.mxu0 0
        %3653 = vmatpush2.bf16.msra.mxu0 0
        %3654 = vmatprep.subr.bf16.mxu0 0
        %3655 = vmatpush2.bf16.msra.mxu0 0
        %3656 = vmatprep.subr.bf16.mxu0 0
        %3657 = vmatpush2.bf16.msra.mxu0 0
        %3658 = vmatprep.mubr.bf16.mxu0 0
        %3659 = vmatmul.mubr.bf16.gmra.mxu0 %v3554
        %v3660 = vpop.f32.mrf.mxu0
        %v3661 = vadd.f32 %v3576, %v3660
        %v3662 = vpop.f32.mrf.mxu0
        %v3663 = vpop.f32.mrf.mxu0
        %v3664 = vpop.f32.mrf.mxu0
        %3665 = vdwg.mxu0
        %v3666 = vadd.f32 %v3469, %v3661
        %v3667 = vld [vmem:[%s1592] sm:$0x1]
        %v3668 = vld [vmem:[%s1595] sm:$0x1]
        %v3669 = vsel %vm1647, %v3666, 0.0
        %3670 = vadd.xlane.f32.xlu0 %v3669
        %v3671 = vpop.xlane.xlu0 %3670
        %v3672 = vmul.f32 %v3671, %v2462
        %v3673 = vsub.f32 %v3666, %v3672
        %v3674 = vmul.f32 %v3673, %v3673
        %v3675 = vsel %vm1647, %v3674, 0.0
        %3676 = vadd.xlane.f32.xlu0 %v3675
        %v3677 = vpop.xlane.xlu0 %3676
        %v3678 = vmul.f32 %v3677, %v2462
        %v3679 = vadd.f32 %v3678, 1e-05
        %v3680 = vrsqrt.pop %v3679
        %v3681 = vmul.f32 %v3673, %v3680
        %v3683 = vlaneseq
        %v3684 = vshrl.u32 %v3683, 7
        %v3685 = vsub.s32 0, %v3684
        %v3686 = vrot.slane %v3667, %v3685
        %v3688 = vmul.f32 %v3681, %v3686
        %v3690 = vlaneseq
        %v3691 = vshrl.u32 %v3690, 7
        %v3692 = vsub.s32 0, %v3691
        %v3693 = vrot.slane %v3668, %v3692
        %v3695 = vadd.f32 %v3688, %v3693
        %3696 = vst.msk [vmem:[#allocation2] sm:$0xff] %vm1647, %v3695
        %3697 = vst.msk [vmem:[%s1523] sm:$0xff] %vm1647, %v3695
        %v3698 = vld [vmem:[%s57] sm:$0x1]
        %v3699 = vld [vmem:[%s59] sm:$0x1]
        %v3700 = vsel %vm1647, %v3695, 0.0
        %3701 = vadd.xlane.f32.xlu0 %v3700
        %v3702 = vpop.xlane.xlu0 %3701
        %v3703 = vmul.f32 %v3702, %v2462
        %v3704 = vsub.f32 %v3695, %v3703
        %v3705 = vmul.f32 %v3704, %v3704
        %v3706 = vsel %vm1647, %v3705, 0.0
        %3707 = vadd.xlane.f32.xlu0 %v3706
        %v3708 = vpop.xlane.xlu0 %3707
        %v3709 = vmul.f32 %v3708, %v2462
        %v3710 = vadd.f32 %v3709, 1e-05
        %v3711 = vrsqrt.pop %v3710
        %v3712 = vmul.f32 %v3704, %v3711
        %v3714 = vlaneseq
        %v3715 = vshrl.u32 %v3714, 7
        %v3716 = vsub.s32 0, %v3715
        %v3717 = vrot.slane %v3698, %v3716
        %v3719 = vmul.f32 %v3712, %v3717
        %v3721 = vlaneseq
        %v3722 = vshrl.u32 %v3721, 7
        %v3723 = vsub.s32 0, %v3722
        %v3724 = vrot.slane %v3699, %v3723
        %v3726 = vadd.f32 %v3719, %v3724
        %3727 = vst.msk [vmem:[%s1530] sm:$0xff] %vm1647, %v3726
        %s3728 = sand.u32 %s888, 1
        %s3729 = scalar_lea.sflag [#allocation5], %s3728
        %s3730 = sand.u32 %s888, 1
        %s3731 = smul.addr %s3730, 8
        %s3732 = scalar_lea.vmem [#allocation18], %s3731
        %s3733 = sand.u32 %s916, 1
        %s3734 = scalar_lea.sflag [#allocation20], %s3733
        %s3735 = sand.u32 %s916, 1
        %s3736 = smul.addr %s3735, 8
        %s3737 = scalar_lea.vmem [#allocation19], %s3736
        // Predicated region
        $region181: #{tpu_custom_call.1} parent=139 // pred_check
          %p3738 = pneg %p898
        $region182: #{tpu_custom_call.1} parent=139 // pred_check_branch
          %3740 = sbr.rel (%p3738) target = $region184
        $region183: #{tpu_custom_call.1} parent=139 // pred_region
          %s3742 = ssub.s32 128, 128
          %3743 = vsyncadd %s3729, %s3742
          %s3744 = smul.addr %s101, 2
          %s3745 = sadd.s32 %s100, %s3744
          %s3746 = smul.addr %s3745, 128
          %s3747 = scalar_lea.hbm %s61, %s3746
          %s3749 = sshll.u32 %s3732, 4
          %s3750 = int_to_ptr.vmem [resolvable:$true] %s3749
          %3752 = dma.vmem_to_hbm [thread:$0]  %s3750, 128, %s3747, %s3729
        $region184: #{tpu_custom_call.1} parent=139 // pred_fallthru
          _
        // Predicated region
        $region185: #{tpu_custom_call.1} parent=139 // pred_check
          %p3753 = pneg %p926
        $region186: #{tpu_custom_call.1} parent=139 // pred_check_branch
          %3755 = sbr.rel (%p3753) target = $region188
        $region187: #{tpu_custom_call.1} parent=139 // pred_region
          %s3757 = ssub.s32 128, 128
          %3758 = vsyncadd %s3734, %s3757
          %s3759 = smul.addr %s101, 2
          %s3760 = sadd.s32 %s100, %s3759
          %s3761 = smul.addr %s3760, 128
          %s3762 = scalar_lea.hbm %s63, %s3761
          %s3764 = sshll.u32 %s3737, 4
          %s3765 = int_to_ptr.vmem [resolvable:$true] %s3764
          %3767 = dma.vmem_to_hbm [thread:$0]  %s3765, 128, %s3762, %s3734
        $region188: #{tpu_custom_call.1} parent=139 // pred_fallthru
          _
      $region140: #{tpu_custom_call.1} parent=5 // pred_fallthru
        _
      %p3768 = scmp.le.s32.totalorder 2, %s91
      // Predicated region
      $region189: #{tpu_custom_call.1} parent=5 // pred_check
        %p3769 = pneg %p3768
      $region190: #{tpu_custom_call.1} parent=5 // pred_check_branch
        %3771 = sbr.rel (%p3769) target = $region192
      $region191: #{tpu_custom_call.1} parent=5 // pred_region
        %s3772 = ssub.s32 %s91, 2
        // Predicated region
        $region193: #{tpu_custom_call.1} parent=191 // pred_check
          %p3773 = pneg %p904
        $region194: #{tpu_custom_call.1} parent=191 // pred_check_branch
          %3775 = sbr.rel (%p3773) target = $region196
        $region195: #{tpu_custom_call.1} parent=191 // pred_region
          %s3776 = sand.u32 %s889, 1
          %s3777 = scalar_lea.sflag [#allocation5], %s3776
          %s3778 = sand.u32 %s889, 1
          %s3779 = smul.addr %s3778, 8
          %s3780 = scalar_lea.vmem [#allocation18], %s3779
          %3781 = dma.done %s3777, 128
        $region196: #{tpu_custom_call.1} parent=191 // pred_fallthru
          _
        // Predicated region
        $region197: #{tpu_custom_call.1} parent=191 // pred_check
          %p3782 = pneg %p932
        $region198: #{tpu_custom_call.1} parent=191 // pred_check_branch
          %3784 = sbr.rel (%p3782) target = $region200
        $region199: #{tpu_custom_call.1} parent=191 // pred_region
          %s3785 = sand.u32 %s917, 1
          %s3786 = scalar_lea.sflag [#allocation20], %s3785
          %s3787 = sand.u32 %s917, 1
          %s3788 = smul.addr %s3787, 8
          %s3789 = scalar_lea.vmem [#allocation19], %s3788
          %3790 = dma.done %s3786, 128
        $region200: #{tpu_custom_call.1} parent=191 // pred_fallthru
          _
      $region192: #{tpu_custom_call.1} parent=5 // pred_fallthru
        _
    $region6: #{tpu_custom_call.1} parent=1 // loop_footer
      %s95 = sadd.s32 1, %s91
    $region7: #{tpu_custom_call.1} parent=1 // loop_footer_branch
      %90 = sbr.rel target = $region3
    $region8: #{tpu_custom_call.1} parent=1 // loop_exit
      _
    %3791 = vsyncpa [#allocation4], 1
    %s3792 = scalar_lea.sflag [#allocation4], 1
    %3793 = vsyncpa %s3792, 1
    %3794 = vsyncpa [#allocation7], 1
    %s3795 = scalar_lea.sflag [#allocation7], 1
    %3796 = vsyncpa %s3795, 1
    %3797 = vsyncpa [#allocation10], 1
    %s3798 = scalar_lea.sflag [#allocation10], 1
    %3799 = vsyncpa %s3798, 1
    %3800 = vsyncpa [#allocation13], 1
    %s3801 = scalar_lea.sflag [#allocation13], 1
    %3802 = vsyncpa %s3801, 1
    %3803 = vsyncpa [#allocation16], 1
    %s3804 = scalar_lea.sflag [#allocation16], 1
    %3805 = vsyncpa %s3804, 1
    %3806 = vsyncpa [#allocation5], 1
    %s3807 = scalar_lea.sflag [#allocation5], 1
    %3808 = vsyncpa %s3807, 1
    %3809 = vsyncpa [#allocation20], 1
    %s3810 = scalar_lea.sflag [#allocation20], 1
    %3811 = vsyncpa %s3810, 1

</llo_original>
